<compile_context>
chip_gen: v7x
topology: tpu7x:2x2x1
jax: 0.10.0
libtpu: 0.0.40
codegen_flags: <defaults>
</compile_context>

<pallas_src>
import functools

import jax
import jax.numpy as jnp
import numpy as np
from jax.experimental import pallas as pl

INPUT_SIZE = 5
HIDDEN = 10
NUM_LAYERS = 3


def _rnn_kernel(x_ref, w_ih0_t_ref, w_ih_hi_t_ref, w_hh_t_ref, b_ref,
                out_ref, hn_ref, *, seq_len, batch):
    """Whole 3-layer RNN, wavefront-scheduled, in one invocation.

    x_ref        : (T*B, 5)      layer-0 input (unpadded features)
    w_ih0_t_ref  : (5, H)        layer-0 W_ih^T
    w_ih_hi_t_ref: (L-1, H, H)   layers 1..L-1 W_ih^T
    w_hh_t_ref   : (L, H, H)     W_hh^T for all layers
    b_ref        : (L, 1, H)     combined bias (b_ih + b_hh)
    out_ref      : (T*B, H)      final-layer output (only layer L-1 writes it)
    hn_ref       : (L, B, H)     final hidden state per layer
    """
    T, B, H, L = seq_len, batch, HIDDEN, NUM_LAYERS

    # Hoisted layer-0 input projection + bias: one matmul for the whole
    # sequence, off the recurrent critical path.
    xw0 = jnp.dot(x_ref[...], w_ih0_t_ref[...],
                  preferred_element_type=jnp.float32) + b_ref[0]   # (T*B, H)

    # Hoist all weight / bias loads out of the wavefront loop (stay in vregs).
    w_hh_t = [w_hh_t_ref[l] for l in range(L)]              # each (H, H)
    w_ih_hi_t = [w_ih_hi_t_ref[i] for i in range(L - 1)]    # each (H, H)
    bias = [b_ref[l] for l in range(L)]                     # each (1, H)

    # h[l] = most recent hidden state of layer l, kept as a traced (B, H)
    # value (never bounced through VMEM).
    h = [None] * L

    # Wavefront schedule: step s computes every cell (l, t) with l + t == s.
    # All cells of one wavefront depend only on the previous wavefront, so
    # their matmuls are independent; dependent chain = T + L - 1 = 10 rounds.
    for s in range(T + L - 1):
        new_h = list(h)
        for l in range(L):
            t = s - l
            if t < 0 or t >= T:
                continue
            if l == 0:
                pre = xw0[t * B:(t + 1) * B, :]              # bias already folded
                if t > 0:                                    # t==0: h_prev == 0
                    pre = pre + jnp.dot(h[0], w_hh_t[0],
                                        preferred_element_type=jnp.float32)
            else:
                # Input half: previous layer's h at the same timestep
                # (produced in wavefront step s-1).
                pre = jnp.dot(h[l - 1], w_ih_hi_t[l - 1],
                              preferred_element_type=jnp.float32) + bias[l]
                if t > 0:                                    # t==0: h_prev == 0
                    pre = pre + jnp.dot(h[l], w_hh_t[l],
                                        preferred_element_type=jnp.float32)
            h_val = jnp.tanh(pre)
            new_h[l] = h_val
            if l == L - 1:
                # Only the final layer touches out_ref; the store is off the
                # recurrent critical path (nothing reads it back).
                out_ref[t * B:(t + 1) * B, :] = h_val
        h = new_h

    for l in range(L):
        hn_ref[l] = h[l]


def _rnn_forward_impl(x, w_ih0_t, w_ih_hi_t, w_hh_t_stack, b_stack):
    """x: (T, B, INPUT_SIZE) f32.  Returns (output (T,B,H), h_n (L,B,H))."""
    seq_len, batch, _ = x.shape

    # Leading-dim merge only (layout no-op): no pad, no extra HBM round-trip.
    x_flat = x.reshape(seq_len * batch, INPUT_SIZE)

    kernel = functools.partial(_rnn_kernel, seq_len=seq_len, batch=batch)

    out_flat, h_n = pl.pallas_call(
        kernel,
        out_shape=(
            jax.ShapeDtypeStruct((seq_len * batch, HIDDEN), jnp.float32),
            jax.ShapeDtypeStruct((NUM_LAYERS, batch, HIDDEN), jnp.float32),
        ),
        in_specs=[
            pl.BlockSpec((seq_len * batch, INPUT_SIZE), lambda: (0, 0)),
            pl.BlockSpec((INPUT_SIZE, HIDDEN), lambda: (0, 0)),
            pl.BlockSpec((NUM_LAYERS - 1, HIDDEN, HIDDEN), lambda: (0, 0, 0)),
            pl.BlockSpec((NUM_LAYERS, HIDDEN, HIDDEN), lambda: (0, 0, 0)),
            pl.BlockSpec((NUM_LAYERS, 1, HIDDEN), lambda: (0, 0, 0)),
        ],
        out_specs=(
            pl.BlockSpec((seq_len * batch, HIDDEN), lambda: (0, 0)),
            pl.BlockSpec((NUM_LAYERS, batch, HIDDEN), lambda: (0, 0, 0)),
        ),
    )(x_flat, w_ih0_t, w_ih_hi_t, w_hh_t_stack, b_stack)

    return out_flat.reshape(seq_len, batch, HIDDEN), h_n


rnn_forward = jax.jit(_rnn_forward_impl)


def _reference_rnn(x, w_ih_list, w_hh_list, b_ih_list, b_hh_list):
    """Pure-JAX reference matching torch.nn.RNN semantics."""
    seq_len, batch, _ = x.shape
    layer_in = x
    h_n = []
    for l in range(NUM_LAYERS):
        h = jnp.zeros((batch, HIDDEN), jnp.float32)
        outs = []
        for t in range(seq_len):
            h = jnp.tanh(layer_in[t] @ w_ih_list[l].T + b_ih_list[l]
                         + h @ w_hh_list[l].T + b_hh_list[l])
            outs.append(h)
        layer_in = jnp.stack(outs, axis=0)
        h_n.append(h)
    return layer_in, jnp.stack(h_n, axis=0)


if __name__ == "__main__":
    key = jax.random.PRNGKey(0)

    # Deterministic parameter init mimicking PyTorch: U(-1/sqrt(H), 1/sqrt(H)).
    k = 1.0 / np.sqrt(HIDDEN)
    keys = jax.random.split(key, 4 * NUM_LAYERS + 1)
    w_ih_list, w_hh_list, b_ih_list, b_hh_list = [], [], [], []
    ki = 0
    for l in range(NUM_LAYERS):
        in_sz = INPUT_SIZE if l == 0 else HIDDEN
        w_ih_list.append(jax.random.uniform(keys[ki], (HIDDEN, in_sz),
                                            jnp.float32, -k, k)); ki += 1
        w_hh_list.append(jax.random.uniform(keys[ki], (HIDDEN, HIDDEN),
                                            jnp.float32, -k, k)); ki += 1
        b_ih_list.append(jax.random.uniform(keys[ki], (HIDDEN,),
                                            jnp.float32, -k, k)); ki += 1
        b_hh_list.append(jax.random.uniform(keys[ki], (HIDDEN,),
                                            jnp.float32, -k, k)); ki += 1

    # Pre-transposed weight stacks for the kernel (no input padding needed).
    w_ih0_t = w_ih_list[0].T                                        # (5, H)
    w_ih_hi_t = jnp.stack([w.T for w in w_ih_list[1:]], axis=0)     # (L-1, H, H)
    w_hh_t_stack = jnp.stack([w.T for w in w_hh_list], axis=0)      # (L, H, H)
    b_stack = jnp.stack(
        [(b_ih_list[l] + b_hh_list[l])[None, :] for l in range(NUM_LAYERS)],
        axis=0)                                                     # (L, 1, H)

    # Example input: seq=8, batch=2, features=5, time-major (PyTorch default).
    seq_len, batch = 8, 2
    x = jax.random.normal(keys[ki], (seq_len, batch, INPUT_SIZE), jnp.float32)

    out, h_n = rnn_forward(x, w_ih0_t, w_ih_hi_t, w_hh_t_stack, b_stack)
    jax.block_until_ready((out, h_n))

    out_ref, hn_ref = _reference_rnn(x, w_ih_list, w_hh_list,
                                     b_ih_list, b_hh_list)
    np.testing.assert_allclose(np.asarray(out), np.asarray(out_ref),
                               rtol=1e-5, atol=1e-5)
    np.testing.assert_allclose(np.asarray(h_n), np.asarray(hn_ref),
                               rtol=1e-5, atol=1e-5)

    print("KERNEL_OK")
</pallas_src>

<mosaic_0001>
module attributes {stable_mosaic.version = 11 : i64} {
  func.func @_rnn_kernel(%arg0: memref<16x5xf32, #tpu.memory_space<vmem>>, %arg1: memref<5x10xf32, #tpu.memory_space<vmem>>, %arg2: memref<2x10x10xf32, #tpu.memory_space<vmem>>, %arg3: memref<3x10x10xf32, #tpu.memory_space<vmem>>, %arg4: memref<3x1x10xf32, #tpu.memory_space<vmem>>, %arg5: memref<16x10xf32, #tpu.memory_space<vmem>>, %arg6: memref<3x2x10xf32, #tpu.memory_space<vmem>>) attributes {dimension_semantics = [], scalar_prefetch = 0 : i64, scratch_operands = 0 : i64, tpu.core_type = #tpu.core_type<tc>} {
    %c0 = arith.constant 0 : index
    %c0_0 = arith.constant 0 : index
    %0 = vector.load %arg0[%c0, %c0_0] : memref<16x5xf32, #tpu.memory_space<vmem>>, vector<16x5xf32>
    %c0_1 = arith.constant 0 : index
    %c0_2 = arith.constant 0 : index
    %1 = vector.load %arg1[%c0_1, %c0_2] : memref<5x10xf32, #tpu.memory_space<vmem>>, vector<5x10xf32>
    %cst = arith.constant dense<0.000000e+00> : vector<16x10xf32>
    %2 = tpu.matmul %0, %1, %cst {dimension_numbers = #tpu.dot_dimension_numbers<[1], [0], [0], [1], [0, 0, 1, 1], [], []>} : vector<16x5xf32>, vector<5x10xf32>, vector<16x10xf32> -> vector<16x10xf32>
    %c0_3 = arith.constant 0 : index
    %c0_4 = arith.constant 0 : index
    %c0_5 = arith.constant 0 : index
    %3 = vector.load %arg4[%c0_3, %c0_4, %c0_5] : memref<3x1x10xf32, #tpu.memory_space<vmem>>, vector<1x1x10xf32>
    %4 = vector.shape_cast %3 : vector<1x1x10xf32> to vector<1x10xf32>
    %5 = vector.broadcast %4 : vector<1x10xf32> to vector<16x10xf32>
    %6 = arith.addf %2, %5 : vector<16x10xf32>
    %c0_6 = arith.constant 0 : index
    %c0_7 = arith.constant 0 : index
    %c0_8 = arith.constant 0 : index
    %7 = vector.load %arg3[%c0_6, %c0_7, %c0_8] : memref<3x10x10xf32, #tpu.memory_space<vmem>>, vector<1x10x10xf32>
    %8 = vector.shape_cast %7 : vector<1x10x10xf32> to vector<10x10xf32>
    %c1 = arith.constant 1 : index
    %c0_9 = arith.constant 0 : index
    %c0_10 = arith.constant 0 : index
    %9 = vector.load %arg3[%c1, %c0_9, %c0_10] : memref<3x10x10xf32, #tpu.memory_space<vmem>>, vector<1x10x10xf32>
    %10 = vector.shape_cast %9 : vector<1x10x10xf32> to vector<10x10xf32>
    %c2 = arith.constant 2 : index
    %c0_11 = arith.constant 0 : index
    %c0_12 = arith.constant 0 : index
    %11 = vector.load %arg3[%c2, %c0_11, %c0_12] : memref<3x10x10xf32, #tpu.memory_space<vmem>>, vector<1x10x10xf32>
    %12 = vector.shape_cast %11 : vector<1x10x10xf32> to vector<10x10xf32>
    %c0_13 = arith.constant 0 : index
    %c0_14 = arith.constant 0 : index
    %c0_15 = arith.constant 0 : index
    %13 = vector.load %arg2[%c0_13, %c0_14, %c0_15] : memref<2x10x10xf32, #tpu.memory_space<vmem>>, vector<1x10x10xf32>
    %14 = vector.shape_cast %13 : vector<1x10x10xf32> to vector<10x10xf32>
    %c1_16 = arith.constant 1 : index
    %c0_17 = arith.constant 0 : index
    %c0_18 = arith.constant 0 : index
    %15 = vector.load %arg2[%c1_16, %c0_17, %c0_18] : memref<2x10x10xf32, #tpu.memory_space<vmem>>, vector<1x10x10xf32>
    %16 = vector.shape_cast %15 : vector<1x10x10xf32> to vector<10x10xf32>
    %c1_19 = arith.constant 1 : index
    %c0_20 = arith.constant 0 : index
    %c0_21 = arith.constant 0 : index
    %17 = vector.load %arg4[%c1_19, %c0_20, %c0_21] : memref<3x1x10xf32, #tpu.memory_space<vmem>>, vector<1x1x10xf32>
    %18 = vector.shape_cast %17 : vector<1x1x10xf32> to vector<1x10xf32>
    %c2_22 = arith.constant 2 : index
    %c0_23 = arith.constant 0 : index
    %c0_24 = arith.constant 0 : index
    %19 = vector.load %arg4[%c2_22, %c0_23, %c0_24] : memref<3x1x10xf32, #tpu.memory_space<vmem>>, vector<1x1x10xf32>
    %20 = vector.shape_cast %19 : vector<1x1x10xf32> to vector<1x10xf32>
    %21 = vector.extract_strided_slice %6 {offsets = [0, 0], sizes = [2, 10], strides = [1, 1]} : vector<16x10xf32> to vector<2x10xf32>
    %22 = math.tanh %21 : vector<2x10xf32>
    %23 = vector.extract_strided_slice %6 {offsets = [2, 0], sizes = [2, 10], strides = [1, 1]} : vector<16x10xf32> to vector<2x10xf32>
    %cst_25 = arith.constant dense<0.000000e+00> : vector<2x10xf32>
    %24 = tpu.matmul %22, %8, %cst_25 {dimension_numbers = #tpu.dot_dimension_numbers<[1], [0], [0], [1], [0, 0, 1, 1], [], []>} : vector<2x10xf32>, vector<10x10xf32>, vector<2x10xf32> -> vector<2x10xf32>
    %25 = arith.addf %23, %24 : vector<2x10xf32>
    %26 = math.tanh %25 : vector<2x10xf32>
    %cst_26 = arith.constant dense<0.000000e+00> : vector<2x10xf32>
    %27 = tpu.matmul %22, %14, %cst_26 {dimension_numbers = #tpu.dot_dimension_numbers<[1], [0], [0], [1], [0, 0, 1, 1], [], []>} : vector<2x10xf32>, vector<10x10xf32>, vector<2x10xf32> -> vector<2x10xf32>
    %28 = vector.broadcast %18 : vector<1x10xf32> to vector<2x10xf32>
    %29 = arith.addf %27, %28 : vector<2x10xf32>
    %30 = math.tanh %29 : vector<2x10xf32>
    %31 = vector.extract_strided_slice %6 {offsets = [4, 0], sizes = [2, 10], strides = [1, 1]} : vector<16x10xf32> to vector<2x10xf32>
    %cst_27 = arith.constant dense<0.000000e+00> : vector<2x10xf32>
    %32 = tpu.matmul %26, %8, %cst_27 {dimension_numbers = #tpu.dot_dimension_numbers<[1], [0], [0], [1], [0, 0, 1, 1], [], []>} : vector<2x10xf32>, vector<10x10xf32>, vector<2x10xf32> -> vector<2x10xf32>
    %33 = arith.addf %31, %32 : vector<2x10xf32>
    %34 = math.tanh %33 : vector<2x10xf32>
    %cst_28 = arith.constant dense<0.000000e+00> : vector<2x10xf32>
    %35 = tpu.matmul %26, %14, %cst_28 {dimension_numbers = #tpu.dot_dimension_numbers<[1], [0], [0], [1], [0, 0, 1, 1], [], []>} : vector<2x10xf32>, vector<10x10xf32>, vector<2x10xf32> -> vector<2x10xf32>
    %36 = vector.broadcast %18 : vector<1x10xf32> to vector<2x10xf32>
    %37 = arith.addf %35, %36 : vector<2x10xf32>
    %cst_29 = arith.constant dense<0.000000e+00> : vector<2x10xf32>
    %38 = tpu.matmul %30, %10, %cst_29 {dimension_numbers = #tpu.dot_dimension_numbers<[1], [0], [0], [1], [0, 0, 1, 1], [], []>} : vector<2x10xf32>, vector<10x10xf32>, vector<2x10xf32> -> vector<2x10xf32>
    %39 = arith.addf %37, %38 : vector<2x10xf32>
    %40 = math.tanh %39 : vector<2x10xf32>
    %cst_30 = arith.constant dense<0.000000e+00> : vector<2x10xf32>
    %41 = tpu.matmul %30, %16, %cst_30 {dimension_numbers = #tpu.dot_dimension_numbers<[1], [0], [0], [1], [0, 0, 1, 1], [], []>} : vector<2x10xf32>, vector<10x10xf32>, vector<2x10xf32> -> vector<2x10xf32>
    %42 = vector.broadcast %20 : vector<1x10xf32> to vector<2x10xf32>
    %43 = arith.addf %41, %42 : vector<2x10xf32>
    %44 = math.tanh %43 : vector<2x10xf32>
    %c0_31 = arith.constant 0 : index
    %c0_32 = arith.constant 0 : index
    %45 = vector.load %arg5[%c0_31, %c0_32] : memref<16x10xf32, #tpu.memory_space<vmem>>, vector<2x10xf32>
    tpu.vector_store %arg5[%c0_31, %c0_32], %44 {strides = array<i32>} : memref<16x10xf32, #tpu.memory_space<vmem>>, vector<2x10xf32>,
    %46 = vector.extract_strided_slice %6 {offsets = [6, 0], sizes = [2, 10], strides = [1, 1]} : vector<16x10xf32> to vector<2x10xf32>
    %cst_33 = arith.constant dense<0.000000e+00> : vector<2x10xf32>
    %47 = tpu.matmul %34, %8, %cst_33 {dimension_numbers = #tpu.dot_dimension_numbers<[1], [0], [0], [1], [0, 0, 1, 1], [], []>} : vector<2x10xf32>, vector<10x10xf32>, vector<2x10xf32> -> vector<2x10xf32>
    %48 = arith.addf %46, %47 : vector<2x10xf32>
    %49 = math.tanh %48 : vector<2x10xf32>
    %cst_34 = arith.constant dense<0.000000e+00> : vector<2x10xf32>
    %50 = tpu.matmul %34, %14, %cst_34 {dimension_numbers = #tpu.dot_dimension_numbers<[1], [0], [0], [1], [0, 0, 1, 1], [], []>} : vector<2x10xf32>, vector<10x10xf32>, vector<2x10xf32> -> vector<2x10xf32>
    %51 = vector.broadcast %18 : vector<1x10xf32> to vector<2x10xf32>
    %52 = arith.addf %50, %51 : vector<2x10xf32>
    %cst_35 = arith.constant dense<0.000000e+00> : vector<2x10xf32>
    %53 = tpu.matmul %40, %10, %cst_35 {dimension_numbers = #tpu.dot_dimension_numbers<[1], [0], [0], [1], [0, 0, 1, 1], [], []>} : vector<2x10xf32>, vector<10x10xf32>, vector<2x10xf32> -> vector<2x10xf32>
    %54 = arith.addf %52, %53 : vector<2x10xf32>
    %55 = math.tanh %54 : vector<2x10xf32>
    %cst_36 = arith.constant dense<0.000000e+00> : vector<2x10xf32>
    %56 = tpu.matmul %40, %16, %cst_36 {dimension_numbers = #tpu.dot_dimension_numbers<[1], [0], [0], [1], [0, 0, 1, 1], [], []>} : vector<2x10xf32>, vector<10x10xf32>, vector<2x10xf32> -> vector<2x10xf32>
    %57 = vector.broadcast %20 : vector<1x10xf32> to vector<2x10xf32>
    %58 = arith.addf %56, %57 : vector<2x10xf32>
    %cst_37 = arith.constant dense<0.000000e+00> : vector<2x10xf32>
    %59 = tpu.matmul %44, %12, %cst_37 {dimension_numbers = #tpu.dot_dimension_numbers<[1], [0], [0], [1], [0, 0, 1, 1], [], []>} : vector<2x10xf32>, vector<10x10xf32>, vector<2x10xf32> -> vector<2x10xf32>
    %60 = arith.addf %58, %59 : vector<2x10xf32>
    %61 = math.tanh %60 : vector<2x10xf32>
    %c2_38 = arith.constant 2 : index
    %c0_39 = arith.constant 0 : index
    %62 = vector.load %arg5[%c2_38, %c0_39] : memref<16x10xf32, #tpu.memory_space<vmem>>, vector<2x10xf32>
    tpu.vector_store %arg5[%c2_38, %c0_39], %61 {strides = array<i32>} : memref<16x10xf32, #tpu.memory_space<vmem>>, vector<2x10xf32>,
    %63 = vector.extract_strided_slice %6 {offsets = [8, 0], sizes = [2, 10], strides = [1, 1]} : vector<16x10xf32> to vector<2x10xf32>
    %cst_40 = arith.constant dense<0.000000e+00> : vector<2x10xf32>
    %64 = tpu.matmul %49, %8, %cst_40 {dimension_numbers = #tpu.dot_dimension_numbers<[1], [0], [0], [1], [0, 0, 1, 1], [], []>} : vector<2x10xf32>, vector<10x10xf32>, vector<2x10xf32> -> vector<2x10xf32>
    %65 = arith.addf %63, %64 : vector<2x10xf32>
    %66 = math.tanh %65 : vector<2x10xf32>
    %cst_41 = arith.constant dense<0.000000e+00> : vector<2x10xf32>
    %67 = tpu.matmul %49, %14, %cst_41 {dimension_numbers = #tpu.dot_dimension_numbers<[1], [0], [0], [1], [0, 0, 1, 1], [], []>} : vector<2x10xf32>, vector<10x10xf32>, vector<2x10xf32> -> vector<2x10xf32>
    %68 = vector.broadcast %18 : vector<1x10xf32> to vector<2x10xf32>
    %69 = arith.addf %67, %68 : vector<2x10xf32>
    %cst_42 = arith.constant dense<0.000000e+00> : vector<2x10xf32>
    %70 = tpu.matmul %55, %10, %cst_42 {dimension_numbers = #tpu.dot_dimension_numbers<[1], [0], [0], [1], [0, 0, 1, 1], [], []>} : vector<2x10xf32>, vector<10x10xf32>, vector<2x10xf32> -> vector<2x10xf32>
    %71 = arith.addf %69, %70 : vector<2x10xf32>
    %72 = math.tanh %71 : vector<2x10xf32>
    %cst_43 = arith.constant dense<0.000000e+00> : vector<2x10xf32>
    %73 = tpu.matmul %55, %16, %cst_43 {dimension_numbers = #tpu.dot_dimension_numbers<[1], [0], [0], [1], [0, 0, 1, 1], [], []>} : vector<2x10xf32>, vector<10x10xf32>, vector<2x10xf32> -> vector<2x10xf32>
    %74 = vector.broadcast %20 : vector<1x10xf32> to vector<2x10xf32>
    %75 = arith.addf %73, %74 : vector<2x10xf32>
    %cst_44 = arith.constant dense<0.000000e+00> : vector<2x10xf32>
    %76 = tpu.matmul %61, %12, %cst_44 {dimension_numbers = #tpu.dot_dimension_numbers<[1], [0], [0], [1], [0, 0, 1, 1], [], []>} : vector<2x10xf32>, vector<10x10xf32>, vector<2x10xf32> -> vector<2x10xf32>
    %77 = arith.addf %75, %76 : vector<2x10xf32>
    %78 = math.tanh %77 : vector<2x10xf32>
    %c4 = arith.constant 4 : index
    %c0_45 = arith.constant 0 : index
    %79 = vector.load %arg5[%c4, %c0_45] : memref<16x10xf32, #tpu.memory_space<vmem>>, vector<2x10xf32>
    tpu.vector_store %arg5[%c4, %c0_45], %78 {strides = array<i32>} : memref<16x10xf32, #tpu.memory_space<vmem>>, vector<2x10xf32>,
    %80 = vector.extract_strided_slice %6 {offsets = [10, 0], sizes = [2, 10], strides = [1, 1]} : vector<16x10xf32> to vector<2x10xf32>
    %cst_46 = arith.constant dense<0.000000e+00> : vector<2x10xf32>
    %81 = tpu.matmul %66, %8, %cst_46 {dimension_numbers = #tpu.dot_dimension_numbers<[1], [0], [0], [1], [0, 0, 1, 1], [], []>} : vector<2x10xf32>, vector<10x10xf32>, vector<2x10xf32> -> vector<2x10xf32>
    %82 = arith.addf %80, %81 : vector<2x10xf32>
    %83 = math.tanh %82 : vector<2x10xf32>
    %cst_47 = arith.constant dense<0.000000e+00> : vector<2x10xf32>
    %84 = tpu.matmul %66, %14, %cst_47 {dimension_numbers = #tpu.dot_dimension_numbers<[1], [0], [0], [1], [0, 0, 1, 1], [], []>} : vector<2x10xf32>, vector<10x10xf32>, vector<2x10xf32> -> vector<2x10xf32>
    %85 = vector.broadcast %18 : vector<1x10xf32> to vector<2x10xf32>
    %86 = arith.addf %84, %85 : vector<2x10xf32>
    %cst_48 = arith.constant dense<0.000000e+00> : vector<2x10xf32>
    %87 = tpu.matmul %72, %10, %cst_48 {dimension_numbers = #tpu.dot_dimension_numbers<[1], [0], [0], [1], [0, 0, 1, 1], [], []>} : vector<2x10xf32>, vector<10x10xf32>, vector<2x10xf32> -> vector<2x10xf32>
    %88 = arith.addf %86, %87 : vector<2x10xf32>
    %89 = math.tanh %88 : vector<2x10xf32>
    %cst_49 = arith.constant dense<0.000000e+00> : vector<2x10xf32>
    %90 = tpu.matmul %72, %16, %cst_49 {dimension_numbers = #tpu.dot_dimension_numbers<[1], [0], [0], [1], [0, 0, 1, 1], [], []>} : vector<2x10xf32>, vector<10x10xf32>, vector<2x10xf32> -> vector<2x10xf32>
    %91 = vector.broadcast %20 : vector<1x10xf32> to vector<2x10xf32>
    %92 = arith.addf %90, %91 : vector<2x10xf32>
    %cst_50 = arith.constant dense<0.000000e+00> : vector<2x10xf32>
    %93 = tpu.matmul %78, %12, %cst_50 {dimension_numbers = #tpu.dot_dimension_numbers<[1], [0], [0], [1], [0, 0, 1, 1], [], []>} : vector<2x10xf32>, vector<10x10xf32>, vector<2x10xf32> -> vector<2x10xf32>
    %94 = arith.addf %92, %93 : vector<2x10xf32>
    %95 = math.tanh %94 : vector<2x10xf32>
    %c6 = arith.constant 6 : index
    %c0_51 = arith.constant 0 : index
    %96 = vector.load %arg5[%c6, %c0_51] : memref<16x10xf32, #tpu.memory_space<vmem>>, vector<2x10xf32>
    tpu.vector_store %arg5[%c6, %c0_51], %95 {strides = array<i32>} : memref<16x10xf32, #tpu.memory_space<vmem>>, vector<2x10xf32>,
    %97 = vector.extract_strided_slice %6 {offsets = [12, 0], sizes = [2, 10], strides = [1, 1]} : vector<16x10xf32> to vector<2x10xf32>
    %cst_52 = arith.constant dense<0.000000e+00> : vector<2x10xf32>
    %98 = tpu.matmul %83, %8, %cst_52 {dimension_numbers = #tpu.dot_dimension_numbers<[1], [0], [0], [1], [0, 0, 1, 1], [], []>} : vector<2x10xf32>, vector<10x10xf32>, vector<2x10xf32> -> vector<2x10xf32>
    %99 = arith.addf %97, %98 : vector<2x10xf32>
    %100 = math.tanh %99 : vector<2x10xf32>
    %cst_53 = arith.constant dense<0.000000e+00> : vector<2x10xf32>
    %101 = tpu.matmul %83, %14, %cst_53 {dimension_numbers = #tpu.dot_dimension_numbers<[1], [0], [0], [1], [0, 0, 1, 1], [], []>} : vector<2x10xf32>, vector<10x10xf32>, vector<2x10xf32> -> vector<2x10xf32>
    %102 = vector.broadcast %18 : vector<1x10xf32> to vector<2x10xf32>
    %103 = arith.addf %101, %102 : vector<2x10xf32>
    %cst_54 = arith.constant dense<0.000000e+00> : vector<2x10xf32>
    %104 = tpu.matmul %89, %10, %cst_54 {dimension_numbers = #tpu.dot_dimension_numbers<[1], [0], [0], [1], [0, 0, 1, 1], [], []>} : vector<2x10xf32>, vector<10x10xf32>, vector<2x10xf32> -> vector<2x10xf32>
    %105 = arith.addf %103, %104 : vector<2x10xf32>
    %106 = math.tanh %105 : vector<2x10xf32>
    %cst_55 = arith.constant dense<0.000000e+00> : vector<2x10xf32>
    %107 = tpu.matmul %89, %16, %cst_55 {dimension_numbers = #tpu.dot_dimension_numbers<[1], [0], [0], [1], [0, 0, 1, 1], [], []>} : vector<2x10xf32>, vector<10x10xf32>, vector<2x10xf32> -> vector<2x10xf32>
    %108 = vector.broadcast %20 : vector<1x10xf32> to vector<2x10xf32>
    %109 = arith.addf %107, %108 : vector<2x10xf32>
    %cst_56 = arith.constant dense<0.000000e+00> : vector<2x10xf32>
    %110 = tpu.matmul %95, %12, %cst_56 {dimension_numbers = #tpu.dot_dimension_numbers<[1], [0], [0], [1], [0, 0, 1, 1], [], []>} : vector<2x10xf32>, vector<10x10xf32>, vector<2x10xf32> -> vector<2x10xf32>
    %111 = arith.addf %109, %110 : vector<2x10xf32>
    %112 = math.tanh %111 : vector<2x10xf32>
    %c8 = arith.constant 8 : index
    %c0_57 = arith.constant 0 : index
    %113 = vector.load %arg5[%c8, %c0_57] : memref<16x10xf32, #tpu.memory_space<vmem>>, vector<2x10xf32>
    tpu.vector_store %arg5[%c8, %c0_57], %112 {strides = array<i32>} : memref<16x10xf32, #tpu.memory_space<vmem>>, vector<2x10xf32>,
    %114 = vector.extract_strided_slice %6 {offsets = [14, 0], sizes = [2, 10], strides = [1, 1]} : vector<16x10xf32> to vector<2x10xf32>
    %cst_58 = arith.constant dense<0.000000e+00> : vector<2x10xf32>
    %115 = tpu.matmul %100, %8, %cst_58 {dimension_numbers = #tpu.dot_dimension_numbers<[1], [0], [0], [1], [0, 0, 1, 1], [], []>} : vector<2x10xf32>, vector<10x10xf32>, vector<2x10xf32> -> vector<2x10xf32>
    %116 = arith.addf %114, %115 : vector<2x10xf32>
    %117 = math.tanh %116 : vector<2x10xf32>
    %cst_59 = arith.constant dense<0.000000e+00> : vector<2x10xf32>
    %118 = tpu.matmul %100, %14, %cst_59 {dimension_numbers = #tpu.dot_dimension_numbers<[1], [0], [0], [1], [0, 0, 1, 1], [], []>} : vector<2x10xf32>, vector<10x10xf32>, vector<2x10xf32> -> vector<2x10xf32>
    %119 = vector.broadcast %18 : vector<1x10xf32> to vector<2x10xf32>
    %120 = arith.addf %118, %119 : vector<2x10xf32>
    %cst_60 = arith.constant dense<0.000000e+00> : vector<2x10xf32>
    %121 = tpu.matmul %106, %10, %cst_60 {dimension_numbers = #tpu.dot_dimension_numbers<[1], [0], [0], [1], [0, 0, 1, 1], [], []>} : vector<2x10xf32>, vector<10x10xf32>, vector<2x10xf32> -> vector<2x10xf32>
    %122 = arith.addf %120, %121 : vector<2x10xf32>
    %123 = math.tanh %122 : vector<2x10xf32>
    %cst_61 = arith.constant dense<0.000000e+00> : vector<2x10xf32>
    %124 = tpu.matmul %106, %16, %cst_61 {dimension_numbers = #tpu.dot_dimension_numbers<[1], [0], [0], [1], [0, 0, 1, 1], [], []>} : vector<2x10xf32>, vector<10x10xf32>, vector<2x10xf32> -> vector<2x10xf32>
    %125 = vector.broadcast %20 : vector<1x10xf32> to vector<2x10xf32>
    %126 = arith.addf %124, %125 : vector<2x10xf32>
    %cst_62 = arith.constant dense<0.000000e+00> : vector<2x10xf32>
    %127 = tpu.matmul %112, %12, %cst_62 {dimension_numbers = #tpu.dot_dimension_numbers<[1], [0], [0], [1], [0, 0, 1, 1], [], []>} : vector<2x10xf32>, vector<10x10xf32>, vector<2x10xf32> -> vector<2x10xf32>
    %128 = arith.addf %126, %127 : vector<2x10xf32>
    %129 = math.tanh %128 : vector<2x10xf32>
    %c10 = arith.constant 10 : index
    %c0_63 = arith.constant 0 : index
    %130 = vector.load %arg5[%c10, %c0_63] : memref<16x10xf32, #tpu.memory_space<vmem>>, vector<2x10xf32>
    tpu.vector_store %arg5[%c10, %c0_63], %129 {strides = array<i32>} : memref<16x10xf32, #tpu.memory_space<vmem>>, vector<2x10xf32>,
    %cst_64 = arith.constant dense<0.000000e+00> : vector<2x10xf32>
    %131 = tpu.matmul %117, %14, %cst_64 {dimension_numbers = #tpu.dot_dimension_numbers<[1], [0], [0], [1], [0, 0, 1, 1], [], []>} : vector<2x10xf32>, vector<10x10xf32>, vector<2x10xf32> -> vector<2x10xf32>
    %132 = vector.broadcast %18 : vector<1x10xf32> to vector<2x10xf32>
    %133 = arith.addf %131, %132 : vector<2x10xf32>
    %cst_65 = arith.constant dense<0.000000e+00> : vector<2x10xf32>
    %134 = tpu.matmul %123, %10, %cst_65 {dimension_numbers = #tpu.dot_dimension_numbers<[1], [0], [0], [1], [0, 0, 1, 1], [], []>} : vector<2x10xf32>, vector<10x10xf32>, vector<2x10xf32> -> vector<2x10xf32>
    %135 = arith.addf %133, %134 : vector<2x10xf32>
    %136 = math.tanh %135 : vector<2x10xf32>
    %cst_66 = arith.constant dense<0.000000e+00> : vector<2x10xf32>
    %137 = tpu.matmul %123, %16, %cst_66 {dimension_numbers = #tpu.dot_dimension_numbers<[1], [0], [0], [1], [0, 0, 1, 1], [], []>} : vector<2x10xf32>, vector<10x10xf32>, vector<2x10xf32> -> vector<2x10xf32>
    %138 = vector.broadcast %20 : vector<1x10xf32> to vector<2x10xf32>
    %139 = arith.addf %137, %138 : vector<2x10xf32>
    %cst_67 = arith.constant dense<0.000000e+00> : vector<2x10xf32>
    %140 = tpu.matmul %129, %12, %cst_67 {dimension_numbers = #tpu.dot_dimension_numbers<[1], [0], [0], [1], [0, 0, 1, 1], [], []>} : vector<2x10xf32>, vector<10x10xf32>, vector<2x10xf32> -> vector<2x10xf32>
    %141 = arith.addf %139, %140 : vector<2x10xf32>
    %142 = math.tanh %141 : vector<2x10xf32>
    %c12 = arith.constant 12 : index
    %c0_68 = arith.constant 0 : index
    %143 = vector.load %arg5[%c12, %c0_68] : memref<16x10xf32, #tpu.memory_space<vmem>>, vector<2x10xf32>
    tpu.vector_store %arg5[%c12, %c0_68], %142 {strides = array<i32>} : memref<16x10xf32, #tpu.memory_space<vmem>>, vector<2x10xf32>,
    %cst_69 = arith.constant dense<0.000000e+00> : vector<2x10xf32>
    %144 = tpu.matmul %136, %16, %cst_69 {dimension_numbers = #tpu.dot_dimension_numbers<[1], [0], [0], [1], [0, 0, 1, 1], [], []>} : vector<2x10xf32>, vector<10x10xf32>, vector<2x10xf32> -> vector<2x10xf32>
    %145 = vector.broadcast %20 : vector<1x10xf32> to vector<2x10xf32>
    %146 = arith.addf %144, %145 : vector<2x10xf32>
    %cst_70 = arith.constant dense<0.000000e+00> : vector<2x10xf32>
    %147 = tpu.matmul %142, %12, %cst_70 {dimension_numbers = #tpu.dot_dimension_numbers<[1], [0], [0], [1], [0, 0, 1, 1], [], []>} : vector<2x10xf32>, vector<10x10xf32>, vector<2x10xf32> -> vector<2x10xf32>
    %148 = arith.addf %146, %147 : vector<2x10xf32>
    %149 = math.tanh %148 : vector<2x10xf32>
    %c14 = arith.constant 14 : index
    %c0_71 = arith.constant 0 : index
    %150 = vector.load %arg5[%c14, %c0_71] : memref<16x10xf32, #tpu.memory_space<vmem>>, vector<2x10xf32>
    tpu.vector_store %arg5[%c14, %c0_71], %149 {strides = array<i32>} : memref<16x10xf32, #tpu.memory_space<vmem>>, vector<2x10xf32>,
    %c0_72 = arith.constant 0 : index
    %c0_73 = arith.constant 0 : index
    %c0_74 = arith.constant 0 : index
    %151 = vector.load %arg6[%c0_72, %c0_73, %c0_74] : memref<3x2x10xf32, #tpu.memory_space<vmem>>, vector<1x2x10xf32>
    %152 = vector.shape_cast %151 : vector<1x2x10xf32> to vector<2x10xf32>
    %153 = vector.shape_cast %117 : vector<2x10xf32> to vector<1x2x10xf32>
    tpu.vector_store %arg6[%c0_72, %c0_73, %c0_74], %153 {strides = array<i32>} : memref<3x2x10xf32, #tpu.memory_space<vmem>>, vector<1x2x10xf32>,
    %c1_75 = arith.constant 1 : index
    %c0_76 = arith.constant 0 : index
    %c0_77 = arith.constant 0 : index
    %154 = vector.load %arg6[%c1_75, %c0_76, %c0_77] : memref<3x2x10xf32, #tpu.memory_space<vmem>>, vector<1x2x10xf32>
    %155 = vector.shape_cast %154 : vector<1x2x10xf32> to vector<2x10xf32>
    %156 = vector.shape_cast %136 : vector<2x10xf32> to vector<1x2x10xf32>
    tpu.vector_store %arg6[%c1_75, %c0_76, %c0_77], %156 {strides = array<i32>} : memref<3x2x10xf32, #tpu.memory_space<vmem>>, vector<1x2x10xf32>,
    %c2_78 = arith.constant 2 : index
    %c0_79 = arith.constant 0 : index
    %c0_80 = arith.constant 0 : index
    %157 = vector.load %arg6[%c2_78, %c0_79, %c0_80] : memref<3x2x10xf32, #tpu.memory_space<vmem>>, vector<1x2x10xf32>
    %158 = vector.shape_cast %157 : vector<1x2x10xf32> to vector<2x10xf32>
    %159 = vector.shape_cast %149 : vector<2x10xf32> to vector<1x2x10xf32>
    tpu.vector_store %arg6[%c2_78, %c0_79, %c0_80], %159 {strides = array<i32>} : memref<3x2x10xf32, #tpu.memory_space<vmem>>, vector<1x2x10xf32>,
    return
  }
}

</mosaic_0001>

<llo_original>
// kernel: _rnn_forward_impl.1
$region0: #{_rnn_forward_impl.1}
  #allocation0 [shape = 'u32[]', space=smem, size = 0x4, offset = 0x4, fixed_abs, tag = 'smem constant byte address 0x4 - core index']
  #allocation1 [shape = 'u32[144,128]{1,0:T(1,128)}', space=vmem, size = 0x12000, scoped, tag = 'internal scratch']
  %s0 = inlined_call_operand.vmem [shape: f32[16,5], index: 0, kind: input, shape index: {}]
  %s1 = inlined_call_operand.vmem [shape: f32[5,10], index: 1, kind: input, shape index: {}]
  %s2 = inlined_call_operand.vmem [shape: f32[2,10,10], index: 2, kind: input, shape index: {}]
  %s3 = inlined_call_operand.vmem [shape: f32[3,10,10], index: 3, kind: input, shape index: {}]
  %s4 = inlined_call_operand.vmem [shape: f32[3,1,10], index: 4, kind: input, shape index: {}]
  %s5 = inlined_call_operand.hbm [shape: f32[16,10], index: 5, kind: output, shape index: {0}]
  %s6 = inlined_call_operand.hbm [shape: f32[3,2,10], index: 6, kind: output, shape index: {1}]
  %7 = xla_tuple %s5, %s6
  %s8 = sld [smem:[#allocation0]]
  $region38: #{_rnn_forward_impl.1} parent=0
    _
  %s10 = ssub.s32 1, %s8
  %s11 = scalar_select 0, %s10, %s8
  $region1: #{_rnn_forward_impl.1} parent=0
    #allocation2 [shape = 'u8[8192]{0}', space=vmem, size = 0x2000, scoped, tag = 'output window, operand 0, single buffered']
    #allocation3 [shape = 's32[1]{0}', space=sflag, size = 0x4, scoped, tag = 'scoped memory for _rnn_forward_impl.1']
    #allocation4 [shape = 'u8[3072]{0}', space=vmem, size = 0xc00, scoped, tag = 'output window, operand 1, single buffered']
    #allocation5 [shape = 's32[1]{0}', space=sflag, size = 0x4, scoped, tag = 'scoped memory for _rnn_forward_impl.1']
    %12 = vsyncpa [#allocation3], 0
    %13 = vsyncpa [#allocation5], 0
    // Predicated region
    $region2: #{_rnn_forward_impl.1} parent=1 // pred_check
      _
    $region3: #{_rnn_forward_impl.1} parent=1 // pred_check_branch
      %15 = sbr.rel (0) target = $region5
    $region4: #{_rnn_forward_impl.1} parent=1 // pred_region
      _
    $region5: #{_rnn_forward_impl.1} parent=1 // pred_fallthru
      _
    // Predicated region
    $region6: #{_rnn_forward_impl.1} parent=1 // pred_check
      _
    $region7: #{_rnn_forward_impl.1} parent=1 // pred_check_branch
      %17 = sbr.rel (0) target = $region9
    $region8: #{_rnn_forward_impl.1} parent=1 // pred_region
      _
    $region9: #{_rnn_forward_impl.1} parent=1 // pred_fallthru
      _
    // Predicated region
    $region10: #{_rnn_forward_impl.1} parent=1 // pred_check
      _
    $region11: #{_rnn_forward_impl.1} parent=1 // pred_check_branch
      %19 = sbr.rel (0) target = $region13
    $region12: #{_rnn_forward_impl.1} parent=1 // pred_region
      _
    $region13: #{_rnn_forward_impl.1} parent=1 // pred_fallthru
      _
    // Predicated region
    $region14: #{_rnn_forward_impl.1} parent=1 // pred_check
      _
    $region15: #{_rnn_forward_impl.1} parent=1 // pred_check_branch
      %21 = sbr.rel (0) target = $region17
    $region16: #{_rnn_forward_impl.1} parent=1 // pred_region
      _
    $region17: #{_rnn_forward_impl.1} parent=1 // pred_fallthru
      _
    // Predicated region
    $region18: #{_rnn_forward_impl.1} parent=1 // pred_check
      _
    $region19: #{_rnn_forward_impl.1} parent=1 // pred_check_branch
      %23 = sbr.rel (0) target = $region21
    $region20: #{_rnn_forward_impl.1} parent=1 // pred_region
      _
    $region21: #{_rnn_forward_impl.1} parent=1 // pred_fallthru
      _
    %v24 = vld [vmem:[%s0] sm:$0xff]
    %v25 = vld [vmem:[%s0 + $0x8] sm:$0xff]
    %v26 = vld [vmem:[%s1] sm:$0x1f]
    %v27 = vld [vmem:[%s4] sm:$0x1]
    %v29 = vlaneseq
    %v30 = vshrl.u32 %v29, 7
    %v31 = vsub.s32 0, %v30
    %v32 = vrot.slane %v27, %v31
    %vm34 = vcmask 39936
    %v36 = vsel %vm34, %v24, 0
    %v39 = vsel %vm34, %v25, 0
    %vm41 = vcmask 1044480
    %v43 = vsel %vm41, %v26, 0
    %45 = vmatprep.subr.mxu0 0.0
    %46 = vmatpush1.msra.mxu0 %v43
    %47 = vmatprep.subr.mxu0 0.0
    %48 = vmatpush1.msra.mxu0 0.0
    %49 = vmatprep.subr.mxu0 0.0
    %50 = vmatpush1.msra.mxu0 0.0
    %51 = vmatprep.subr.mxu0 0.0
    %52 = vmatpush1.msra.mxu0 0.0
    %53 = vmatprep.subr.mxu0 0.0
    %54 = vmatpush1.msra.mxu0 0.0
    %55 = vmatprep.subr.mxu0 0.0
    %56 = vmatpush1.msra.mxu0 0.0
    %57 = vmatprep.subr.mxu0 0.0
    %58 = vmatpush1.msra.mxu0 0.0
    %59 = vmatprep.subr.mxu0 0.0
    %60 = vmatpush1.msra.mxu0 0.0
    %61 = vmatprep.subr.mxu0 0.0
    %62 = vmatpush1.msra.mxu0 0.0
    %63 = vmatprep.subr.mxu0 0.0
    %64 = vmatpush1.msra.mxu0 0.0
    %65 = vmatprep.subr.mxu0 0.0
    %66 = vmatpush1.msra.mxu0 0.0
    %67 = vmatprep.subr.mxu0 0.0
    %68 = vmatpush1.msra.mxu0 0.0
    %69 = vmatprep.subr.mxu0 0.0
    %70 = vmatpush1.msra.mxu0 0.0
    %71 = vmatprep.subr.mxu0 0.0
    %72 = vmatpush1.msra.mxu0 0.0
    %73 = vmatprep.subr.mxu0 0.0
    %74 = vmatpush1.msra.mxu0 0.0
    %75 = vmatprep.subr.mxu0 0.0
    %76 = vmatpush1.msra.mxu0 0.0
    %77 = vmatprep.subr.mxu0 0.0
    %78 = vmatpush1.msra.mxu0 0.0
    %79 = vmatprep.subr.mxu0 0.0
    %80 = vmatpush1.msra.mxu0 0.0
    %81 = vmatprep.subr.mxu0 0.0
    %82 = vmatpush1.msra.mxu0 0.0
    %83 = vmatprep.subr.mxu0 0.0
    %84 = vmatpush1.msra.mxu0 0.0
    %85 = vmatprep.subr.mxu0 0.0
    %86 = vmatpush1.msra.mxu0 0.0
    %87 = vmatprep.subr.mxu0 0.0
    %88 = vmatpush1.msra.mxu0 0.0
    %89 = vmatprep.subr.mxu0 0.0
    %90 = vmatpush1.msra.mxu0 0.0
    %91 = vmatprep.subr.mxu0 0.0
    %92 = vmatpush1.msra.mxu0 0.0
    %93 = vmatprep.subr.mxu0 0.0
    %94 = vmatpush1.msra.mxu0 0.0
    %95 = vmatprep.subr.mxu0 0.0
    %96 = vmatpush1.msra.mxu0 0.0
    %97 = vmatprep.subr.mxu0 0.0
    %98 = vmatpush1.msra.mxu0 0.0
    %99 = vmatprep.subr.mxu0 0.0
    %100 = vmatpush1.msra.mxu0 0.0
    %101 = vmatprep.subr.mxu0 0.0
    %102 = vmatpush1.msra.mxu0 0.0
    %103 = vmatprep.subr.mxu0 0.0
    %104 = vmatpush1.msra.mxu0 0.0
    %105 = vmatprep.subr.mxu0 0.0
    %106 = vmatpush1.msra.mxu0 0.0
    %107 = vmatprep.subr.mxu0 0.0
    %108 = vmatpush1.msra.mxu0 0.0
    %109 = vmatprep.mubr.f32.mxu0 0.0
    %110 = vmatmul.mubr.f32.gmra.mrb[0].mxu0 %v36
    %v111 = vpop.f32.mrb[0].mxu0
    %v112 = vadd.f32 %v32, %v111
    %v113 = vpop.f32.mrb[0].mxu0
    %114 = vmatprep.mubr.f32.mxu0 0.0
    %115 = vmatmul.mubr.f32.gmra.mrb[0].mxu0 %v39
    %v116 = vpop.f32.mrb[0].mxu0
    %v117 = vadd.f32 %v32, %v116
    %v118 = vpop.f32.mrb[0].mxu0
    %119 = vdwg.mxu0
    %v120 = vld [vmem:[%s3] sm:$0xff]
    %v121 = vld [vmem:[%s3 + $0x8] sm:$0x3]
    %s122 = scalar_lea.vmem %s3, 16
    %v123 = vld [vmem:[%s122] sm:$0xff]
    %v124 = vld [vmem:[%s122 + $0x8] sm:$0x3]
    %s125 = scalar_lea.vmem %s3, 32
    %v126 = vld [vmem:[%s125] sm:$0xff]
    %v127 = vld [vmem:[%s125 + $0x8] sm:$0x3]
    %v128 = vld [vmem:[%s2] sm:$0xff]
    %v129 = vld [vmem:[%s2 + $0x8] sm:$0x3]
    %s130 = scalar_lea.vmem %s2, 16
    %v131 = vld [vmem:[%s130] sm:$0xff]
    %v132 = vld [vmem:[%s130 + $0x8] sm:$0x3]
    %s133 = scalar_lea.vmem %s4, 1
    %v134 = vld [vmem:[%s133] sm:$0x1]
    %s135 = scalar_lea.vmem %s4, 2
    %v136 = vld [vmem:[%s135] sm:$0x1]
    %v137 = vtanh.pop %v112
    %vm138 = vcmask 80896
    %v140 = vsel %vm138, %v137, 0
    %vm142 = vcmask 1041408
    %v144 = vsel %vm142, %v121, 0
    %146 = vmatprep.subr.mxu0 0.0
    %147 = vmatpush1.msra.mxu0 %v120
    %148 = vmatprep.subr.mxu0 0.0
    %149 = vmatpush1.msra.mxu0 %v144
    %150 = vmatprep.subr.mxu0 0.0
    %151 = vmatpush1.msra.mxu0 0.0
    %152 = vmatprep.subr.mxu0 0.0
    %153 = vmatpush1.msra.mxu0 0.0
    %154 = vmatprep.subr.mxu0 0.0
    %155 = vmatpush1.msra.mxu0 0.0
    %156 = vmatprep.subr.mxu0 0.0
    %157 = vmatpush1.msra.mxu0 0.0
    %158 = vmatprep.subr.mxu0 0.0
    %159 = vmatpush1.msra.mxu0 0.0
    %160 = vmatprep.subr.mxu0 0.0
    %161 = vmatpush1.msra.mxu0 0.0
    %162 = vmatprep.subr.mxu0 0.0
    %163 = vmatpush1.msra.mxu0 0.0
    %164 = vmatprep.subr.mxu0 0.0
    %165 = vmatpush1.msra.mxu0 0.0
    %166 = vmatprep.subr.mxu0 0.0
    %167 = vmatpush1.msra.mxu0 0.0
    %168 = vmatprep.subr.mxu0 0.0
    %169 = vmatpush1.msra.mxu0 0.0
    %170 = vmatprep.subr.mxu0 0.0
    %171 = vmatpush1.msra.mxu0 0.0
    %172 = vmatprep.subr.mxu0 0.0
    %173 = vmatpush1.msra.mxu0 0.0
    %174 = vmatprep.subr.mxu0 0.0
    %175 = vmatpush1.msra.mxu0 0.0
    %176 = vmatprep.subr.mxu0 0.0
    %177 = vmatpush1.msra.mxu0 0.0
    %178 = vmatprep.subr.mxu0 0.0
    %179 = vmatpush1.msra.mxu0 0.0
    %180 = vmatprep.subr.mxu0 0.0
    %181 = vmatpush1.msra.mxu0 0.0
    %182 = vmatprep.subr.mxu0 0.0
    %183 = vmatpush1.msra.mxu0 0.0
    %184 = vmatprep.subr.mxu0 0.0
    %185 = vmatpush1.msra.mxu0 0.0
    %186 = vmatprep.subr.mxu0 0.0
    %187 = vmatpush1.msra.mxu0 0.0
    %188 = vmatprep.subr.mxu0 0.0
    %189 = vmatpush1.msra.mxu0 0.0
    %190 = vmatprep.subr.mxu0 0.0
    %191 = vmatpush1.msra.mxu0 0.0
    %192 = vmatprep.subr.mxu0 0.0
    %193 = vmatpush1.msra.mxu0 0.0
    %194 = vmatprep.subr.mxu0 0.0
    %195 = vmatpush1.msra.mxu0 0.0
    %196 = vmatprep.subr.mxu0 0.0
    %197 = vmatpush1.msra.mxu0 0.0
    %198 = vmatprep.subr.mxu0 0.0
    %199 = vmatpush1.msra.mxu0 0.0
    %200 = vmatprep.subr.mxu0 0.0
    %201 = vmatpush1.msra.mxu0 0.0
    %202 = vmatprep.subr.mxu0 0.0
    %203 = vmatpush1.msra.mxu0 0.0
    %204 = vmatprep.subr.mxu0 0.0
    %205 = vmatpush1.msra.mxu0 0.0
    %206 = vmatprep.subr.mxu0 0.0
    %207 = vmatpush1.msra.mxu0 0.0
    %208 = vmatprep.subr.mxu0 0.0
    %209 = vmatpush1.msra.mxu0 0.0
    %210 = vmatprep.mubr.f32.mxu0 0.0
    %211 = vmatmul.mubr.f32.gmra.mrb[0].mxu0 %v140
    %v212 = vpop.f32.mrb[0].mxu0
    %v213 = vadd.f32 0.0, %v212
    %v214 = vpop.f32.mrb[0].mxu0
    %215 = vdwg.mxu0
    %v217 = vrot.slane %v213, 6
    %v219 = vadd.f32 %v112, %v217
    %v220 = vtanh.pop %v219
    %v222 = vlaneseq
    %v223 = vshrl.u32 %v222, 7
    %v224 = vsub.s32 0, %v223
    %v225 = vrot.slane %v134, %v224
    %v228 = vsel %vm142, %v129, 0
    %230 = vmatprep.subr.mxu0 0.0
    %231 = vmatpush1.msra.mxu0 %v128
    %232 = vmatprep.subr.mxu0 0.0
    %233 = vmatpush1.msra.mxu0 %v228
    %234 = vmatprep.subr.mxu0 0.0
    %235 = vmatpush1.msra.mxu0 0.0
    %236 = vmatprep.subr.mxu0 0.0
    %237 = vmatpush1.msra.mxu0 0.0
    %238 = vmatprep.subr.mxu0 0.0
    %239 = vmatpush1.msra.mxu0 0.0
    %240 = vmatprep.subr.mxu0 0.0
    %241 = vmatpush1.msra.mxu0 0.0
    %242 = vmatprep.subr.mxu0 0.0
    %243 = vmatpush1.msra.mxu0 0.0
    %244 = vmatprep.subr.mxu0 0.0
    %245 = vmatpush1.msra.mxu0 0.0
    %246 = vmatprep.subr.mxu0 0.0
    %247 = vmatpush1.msra.mxu0 0.0
    %248 = vmatprep.subr.mxu0 0.0
    %249 = vmatpush1.msra.mxu0 0.0
    %250 = vmatprep.subr.mxu0 0.0
    %251 = vmatpush1.msra.mxu0 0.0
    %252 = vmatprep.subr.mxu0 0.0
    %253 = vmatpush1.msra.mxu0 0.0
    %254 = vmatprep.subr.mxu0 0.0
    %255 = vmatpush1.msra.mxu0 0.0
    %256 = vmatprep.subr.mxu0 0.0
    %257 = vmatpush1.msra.mxu0 0.0
    %258 = vmatprep.subr.mxu0 0.0
    %259 = vmatpush1.msra.mxu0 0.0
    %260 = vmatprep.subr.mxu0 0.0
    %261 = vmatpush1.msra.mxu0 0.0
    %262 = vmatprep.subr.mxu0 0.0
    %263 = vmatpush1.msra.mxu0 0.0
    %264 = vmatprep.subr.mxu0 0.0
    %265 = vmatpush1.msra.mxu0 0.0
    %266 = vmatprep.subr.mxu0 0.0
    %267 = vmatpush1.msra.mxu0 0.0
    %268 = vmatprep.subr.mxu0 0.0
    %269 = vmatpush1.msra.mxu0 0.0
    %270 = vmatprep.subr.mxu0 0.0
    %271 = vmatpush1.msra.mxu0 0.0
    %272 = vmatprep.subr.mxu0 0.0
    %273 = vmatpush1.msra.mxu0 0.0
    %274 = vmatprep.subr.mxu0 0.0
    %275 = vmatpush1.msra.mxu0 0.0
    %276 = vmatprep.subr.mxu0 0.0
    %277 = vmatpush1.msra.mxu0 0.0
    %278 = vmatprep.subr.mxu0 0.0
    %279 = vmatpush1.msra.mxu0 0.0
    %280 = vmatprep.subr.mxu0 0.0
    %281 = vmatpush1.msra.mxu0 0.0
    %282 = vmatprep.subr.mxu0 0.0
    %283 = vmatpush1.msra.mxu0 0.0
    %284 = vmatprep.subr.mxu0 0.0
    %285 = vmatpush1.msra.mxu0 0.0
    %286 = vmatprep.subr.mxu0 0.0
    %287 = vmatpush1.msra.mxu0 0.0
    %288 = vmatprep.subr.mxu0 0.0
    %289 = vmatpush1.msra.mxu0 0.0
    %290 = vmatprep.subr.mxu0 0.0
    %291 = vmatpush1.msra.mxu0 0.0
    %292 = vmatprep.subr.mxu0 0.0
    %293 = vmatpush1.msra.mxu0 0.0
    %294 = vmatprep.mubr.f32.mxu0 0.0
    %295 = vmatmul.mubr.f32.gmra.mrb[0].mxu0 %v140
    %v296 = vpop.f32.mrb[0].mxu0
    %v297 = vadd.f32 %v225, %v296
    %v298 = vpop.f32.mrb[0].mxu0
    %299 = vdwg.mxu0
    %v300 = vtanh.pop %v297
    %v302 = vrot.slane %v220, 2
    %v303 = vsel %vm138, %v302, 0
    %305 = vmatprep.subr.mxu0 0.0
    %306 = vmatpush1.msra.mxu0 %v120
    %307 = vmatprep.subr.mxu0 0.0
    %308 = vmatpush1.msra.mxu0 %v144
    %309 = vmatprep.subr.mxu0 0.0
    %310 = vmatpush1.msra.mxu0 0.0
    %311 = vmatprep.subr.mxu0 0.0
    %312 = vmatpush1.msra.mxu0 0.0
    %313 = vmatprep.subr.mxu0 0.0
    %314 = vmatpush1.msra.mxu0 0.0
    %315 = vmatprep.subr.mxu0 0.0
    %316 = vmatpush1.msra.mxu0 0.0
    %317 = vmatprep.subr.mxu0 0.0
    %318 = vmatpush1.msra.mxu0 0.0
    %319 = vmatprep.subr.mxu0 0.0
    %320 = vmatpush1.msra.mxu0 0.0
    %321 = vmatprep.subr.mxu0 0.0
    %322 = vmatpush1.msra.mxu0 0.0
    %323 = vmatprep.subr.mxu0 0.0
    %324 = vmatpush1.msra.mxu0 0.0
    %325 = vmatprep.subr.mxu0 0.0
    %326 = vmatpush1.msra.mxu0 0.0
    %327 = vmatprep.subr.mxu0 0.0
    %328 = vmatpush1.msra.mxu0 0.0
    %329 = vmatprep.subr.mxu0 0.0
    %330 = vmatpush1.msra.mxu0 0.0
    %331 = vmatprep.subr.mxu0 0.0
    %332 = vmatpush1.msra.mxu0 0.0
    %333 = vmatprep.subr.mxu0 0.0
    %334 = vmatpush1.msra.mxu0 0.0
    %335 = vmatprep.subr.mxu0 0.0
    %336 = vmatpush1.msra.mxu0 0.0
    %337 = vmatprep.subr.mxu0 0.0
    %338 = vmatpush1.msra.mxu0 0.0
    %339 = vmatprep.subr.mxu0 0.0
    %340 = vmatpush1.msra.mxu0 0.0
    %341 = vmatprep.subr.mxu0 0.0
    %342 = vmatpush1.msra.mxu0 0.0
    %343 = vmatprep.subr.mxu0 0.0
    %344 = vmatpush1.msra.mxu0 0.0
    %345 = vmatprep.subr.mxu0 0.0
    %346 = vmatpush1.msra.mxu0 0.0
    %347 = vmatprep.subr.mxu0 0.0
    %348 = vmatpush1.msra.mxu0 0.0
    %349 = vmatprep.subr.mxu0 0.0
    %350 = vmatpush1.msra.mxu0 0.0
    %351 = vmatprep.subr.mxu0 0.0
    %352 = vmatpush1.msra.mxu0 0.0
    %353 = vmatprep.subr.mxu0 0.0
    %354 = vmatpush1.msra.mxu0 0.0
    %355 = vmatprep.subr.mxu0 0.0
    %356 = vmatpush1.msra.mxu0 0.0
    %357 = vmatprep.subr.mxu0 0.0
    %358 = vmatpush1.msra.mxu0 0.0
    %359 = vmatprep.subr.mxu0 0.0
    %360 = vmatpush1.msra.mxu0 0.0
    %361 = vmatprep.subr.mxu0 0.0
    %362 = vmatpush1.msra.mxu0 0.0
    %363 = vmatprep.subr.mxu0 0.0
    %364 = vmatpush1.msra.mxu0 0.0
    %365 = vmatprep.subr.mxu0 0.0
    %366 = vmatpush1.msra.mxu0 0.0
    %367 = vmatprep.subr.mxu0 0.0
    %368 = vmatpush1.msra.mxu0 0.0
    %369 = vmatprep.mubr.f32.mxu0 0.0
    %370 = vmatmul.mubr.f32.gmra.mrb[0].mxu0 %v303
    %v371 = vpop.f32.mrb[0].mxu0
    %v372 = vadd.f32 0.0, %v371
    %v373 = vpop.f32.mrb[0].mxu0
    %374 = vdwg.mxu0
    %v376 = vrot.slane %v372, 4
    %v378 = vadd.f32 %v112, %v376
    %v379 = vtanh.pop %v378
    %380 = vmatprep.subr.mxu0 0.0
    %381 = vmatpush1.msra.mxu0 %v128
    %382 = vmatprep.subr.mxu0 0.0
    %383 = vmatpush1.msra.mxu0 %v228
    %384 = vmatprep.subr.mxu0 0.0
    %385 = vmatpush1.msra.mxu0 0.0
    %386 = vmatprep.subr.mxu0 0.0
    %387 = vmatpush1.msra.mxu0 0.0
    %388 = vmatprep.subr.mxu0 0.0
    %389 = vmatpush1.msra.mxu0 0.0
    %390 = vmatprep.subr.mxu0 0.0
    %391 = vmatpush1.msra.mxu0 0.0
    %392 = vmatprep.subr.mxu0 0.0
    %393 = vmatpush1.msra.mxu0 0.0
    %394 = vmatprep.subr.mxu0 0.0
    %395 = vmatpush1.msra.mxu0 0.0
    %396 = vmatprep.subr.mxu0 0.0
    %397 = vmatpush1.msra.mxu0 0.0
    %398 = vmatprep.subr.mxu0 0.0
    %399 = vmatpush1.msra.mxu0 0.0
    %400 = vmatprep.subr.mxu0 0.0
    %401 = vmatpush1.msra.mxu0 0.0
    %402 = vmatprep.subr.mxu0 0.0
    %403 = vmatpush1.msra.mxu0 0.0
    %404 = vmatprep.subr.mxu0 0.0
    %405 = vmatpush1.msra.mxu0 0.0
    %406 = vmatprep.subr.mxu0 0.0
    %407 = vmatpush1.msra.mxu0 0.0
    %408 = vmatprep.subr.mxu0 0.0
    %409 = vmatpush1.msra.mxu0 0.0
    %410 = vmatprep.subr.mxu0 0.0
    %411 = vmatpush1.msra.mxu0 0.0
    %412 = vmatprep.subr.mxu0 0.0
    %413 = vmatpush1.msra.mxu0 0.0
    %414 = vmatprep.subr.mxu0 0.0
    %415 = vmatpush1.msra.mxu0 0.0
    %416 = vmatprep.subr.mxu0 0.0
    %417 = vmatpush1.msra.mxu0 0.0
    %418 = vmatprep.subr.mxu0 0.0
    %419 = vmatpush1.msra.mxu0 0.0
    %420 = vmatprep.subr.mxu0 0.0
    %421 = vmatpush1.msra.mxu0 0.0
    %422 = vmatprep.subr.mxu0 0.0
    %423 = vmatpush1.msra.mxu0 0.0
    %424 = vmatprep.subr.mxu0 0.0
    %425 = vmatpush1.msra.mxu0 0.0
    %426 = vmatprep.subr.mxu0 0.0
    %427 = vmatpush1.msra.mxu0 0.0
    %428 = vmatprep.subr.mxu0 0.0
    %429 = vmatpush1.msra.mxu0 0.0
    %430 = vmatprep.subr.mxu0 0.0
    %431 = vmatpush1.msra.mxu0 0.0
    %432 = vmatprep.subr.mxu0 0.0
    %433 = vmatpush1.msra.mxu0 0.0
    %434 = vmatprep.subr.mxu0 0.0
    %435 = vmatpush1.msra.mxu0 0.0
    %436 = vmatprep.subr.mxu0 0.0
    %437 = vmatpush1.msra.mxu0 0.0
    %438 = vmatprep.subr.mxu0 0.0
    %439 = vmatpush1.msra.mxu0 0.0
    %440 = vmatprep.subr.mxu0 0.0
    %441 = vmatpush1.msra.mxu0 0.0
    %442 = vmatprep.subr.mxu0 0.0
    %443 = vmatpush1.msra.mxu0 0.0
    %444 = vmatprep.mubr.f32.mxu0 0.0
    %445 = vmatmul.mubr.f32.gmra.mrb[0].mxu0 %v303
    %v446 = vpop.f32.mrb[0].mxu0
    %v447 = vadd.f32 %v225, %v446
    %v448 = vpop.f32.mrb[0].mxu0
    %449 = vdwg.mxu0
    %v451 = vsel %vm138, %v300, 0
    %v454 = vsel %vm142, %v124, 0
    %456 = vmatprep.subr.mxu0 0.0
    %457 = vmatpush1.msra.mxu0 %v123
    %458 = vmatprep.subr.mxu0 0.0
    %459 = vmatpush1.msra.mxu0 %v454
    %460 = vmatprep.subr.mxu0 0.0
    %461 = vmatpush1.msra.mxu0 0.0
    %462 = vmatprep.subr.mxu0 0.0
    %463 = vmatpush1.msra.mxu0 0.0
    %464 = vmatprep.subr.mxu0 0.0
    %465 = vmatpush1.msra.mxu0 0.0
    %466 = vmatprep.subr.mxu0 0.0
    %467 = vmatpush1.msra.mxu0 0.0
    %468 = vmatprep.subr.mxu0 0.0
    %469 = vmatpush1.msra.mxu0 0.0
    %470 = vmatprep.subr.mxu0 0.0
    %471 = vmatpush1.msra.mxu0 0.0
    %472 = vmatprep.subr.mxu0 0.0
    %473 = vmatpush1.msra.mxu0 0.0
    %474 = vmatprep.subr.mxu0 0.0
    %475 = vmatpush1.msra.mxu0 0.0
    %476 = vmatprep.subr.mxu0 0.0
    %477 = vmatpush1.msra.mxu0 0.0
    %478 = vmatprep.subr.mxu0 0.0
    %479 = vmatpush1.msra.mxu0 0.0
    %480 = vmatprep.subr.mxu0 0.0
    %481 = vmatpush1.msra.mxu0 0.0
    %482 = vmatprep.subr.mxu0 0.0
    %483 = vmatpush1.msra.mxu0 0.0
    %484 = vmatprep.subr.mxu0 0.0
    %485 = vmatpush1.msra.mxu0 0.0
    %486 = vmatprep.subr.mxu0 0.0
    %487 = vmatpush1.msra.mxu0 0.0
    %488 = vmatprep.subr.mxu0 0.0
    %489 = vmatpush1.msra.mxu0 0.0
    %490 = vmatprep.subr.mxu0 0.0
    %491 = vmatpush1.msra.mxu0 0.0
    %492 = vmatprep.subr.mxu0 0.0
    %493 = vmatpush1.msra.mxu0 0.0
    %494 = vmatprep.subr.mxu0 0.0
    %495 = vmatpush1.msra.mxu0 0.0
    %496 = vmatprep.subr.mxu0 0.0
    %497 = vmatpush1.msra.mxu0 0.0
    %498 = vmatprep.subr.mxu0 0.0
    %499 = vmatpush1.msra.mxu0 0.0
    %500 = vmatprep.subr.mxu0 0.0
    %501 = vmatpush1.msra.mxu0 0.0
    %502 = vmatprep.subr.mxu0 0.0
    %503 = vmatpush1.msra.mxu0 0.0
    %504 = vmatprep.subr.mxu0 0.0
    %505 = vmatpush1.msra.mxu0 0.0
    %506 = vmatprep.subr.mxu0 0.0
    %507 = vmatpush1.msra.mxu0 0.0
    %508 = vmatprep.subr.mxu0 0.0
    %509 = vmatpush1.msra.mxu0 0.0
    %510 = vmatprep.subr.mxu0 0.0
    %511 = vmatpush1.msra.mxu0 0.0
    %512 = vmatprep.subr.mxu0 0.0
    %513 = vmatpush1.msra.mxu0 0.0
    %514 = vmatprep.subr.mxu0 0.0
    %515 = vmatpush1.msra.mxu0 0.0
    %516 = vmatprep.subr.mxu0 0.0
    %517 = vmatpush1.msra.mxu0 0.0
    %518 = vmatprep.subr.mxu0 0.0
    %519 = vmatpush1.msra.mxu0 0.0
    %520 = vmatprep.mubr.f32.mxu0 0.0
    %521 = vmatmul.mubr.f32.gmra.mrb[0].mxu0 %v451
    %v522 = vpop.f32.mrb[0].mxu0
    %v523 = vadd.f32 0.0, %v522
    %v524 = vpop.f32.mrb[0].mxu0
    %525 = vdwg.mxu0
    %v526 = vadd.f32 %v447, %v523
    %v527 = vtanh.pop %v526
    %v529 = vlaneseq
    %v530 = vshrl.u32 %v529, 7
    %v531 = vsub.s32 0, %v530
    %v532 = vrot.slane %v136, %v531
    %v535 = vsel %vm142, %v132, 0
    %537 = vmatprep.subr.mxu0 0.0
    %538 = vmatpush1.msra.mxu0 %v131
    %539 = vmatprep.subr.mxu0 0.0
    %540 = vmatpush1.msra.mxu0 %v535
    %541 = vmatprep.subr.mxu0 0.0
    %542 = vmatpush1.msra.mxu0 0.0
    %543 = vmatprep.subr.mxu0 0.0
    %544 = vmatpush1.msra.mxu0 0.0
    %545 = vmatprep.subr.mxu0 0.0
    %546 = vmatpush1.msra.mxu0 0.0
    %547 = vmatprep.subr.mxu0 0.0
    %548 = vmatpush1.msra.mxu0 0.0
    %549 = vmatprep.subr.mxu0 0.0
    %550 = vmatpush1.msra.mxu0 0.0
    %551 = vmatprep.subr.mxu0 0.0
    %552 = vmatpush1.msra.mxu0 0.0
    %553 = vmatprep.subr.mxu0 0.0
    %554 = vmatpush1.msra.mxu0 0.0
    %555 = vmatprep.subr.mxu0 0.0
    %556 = vmatpush1.msra.mxu0 0.0
    %557 = vmatprep.subr.mxu0 0.0
    %558 = vmatpush1.msra.mxu0 0.0
    %559 = vmatprep.subr.mxu0 0.0
    %560 = vmatpush1.msra.mxu0 0.0
    %561 = vmatprep.subr.mxu0 0.0
    %562 = vmatpush1.msra.mxu0 0.0
    %563 = vmatprep.subr.mxu0 0.0
    %564 = vmatpush1.msra.mxu0 0.0
    %565 = vmatprep.subr.mxu0 0.0
    %566 = vmatpush1.msra.mxu0 0.0
    %567 = vmatprep.subr.mxu0 0.0
    %568 = vmatpush1.msra.mxu0 0.0
    %569 = vmatprep.subr.mxu0 0.0
    %570 = vmatpush1.msra.mxu0 0.0
    %571 = vmatprep.subr.mxu0 0.0
    %572 = vmatpush1.msra.mxu0 0.0
    %573 = vmatprep.subr.mxu0 0.0
    %574 = vmatpush1.msra.mxu0 0.0
    %575 = vmatprep.subr.mxu0 0.0
    %576 = vmatpush1.msra.mxu0 0.0
    %577 = vmatprep.subr.mxu0 0.0
    %578 = vmatpush1.msra.mxu0 0.0
    %579 = vmatprep.subr.mxu0 0.0
    %580 = vmatpush1.msra.mxu0 0.0
    %581 = vmatprep.subr.mxu0 0.0
    %582 = vmatpush1.msra.mxu0 0.0
    %583 = vmatprep.subr.mxu0 0.0
    %584 = vmatpush1.msra.mxu0 0.0
    %585 = vmatprep.subr.mxu0 0.0
    %586 = vmatpush1.msra.mxu0 0.0
    %587 = vmatprep.subr.mxu0 0.0
    %588 = vmatpush1.msra.mxu0 0.0
    %589 = vmatprep.subr.mxu0 0.0
    %590 = vmatpush1.msra.mxu0 0.0
    %591 = vmatprep.subr.mxu0 0.0
    %592 = vmatpush1.msra.mxu0 0.0
    %593 = vmatprep.subr.mxu0 0.0
    %594 = vmatpush1.msra.mxu0 0.0
    %595 = vmatprep.subr.mxu0 0.0
    %596 = vmatpush1.msra.mxu0 0.0
    %597 = vmatprep.subr.mxu0 0.0
    %598 = vmatpush1.msra.mxu0 0.0
    %599 = vmatprep.subr.mxu0 0.0
    %600 = vmatpush1.msra.mxu0 0.0
    %601 = vmatprep.mubr.f32.mxu0 0.0
    %602 = vmatmul.mubr.f32.gmra.mrb[0].mxu0 %v451
    %v603 = vpop.f32.mrb[0].mxu0
    %v604 = vadd.f32 %v532, %v603
    %v605 = vpop.f32.mrb[0].mxu0
    %606 = vdwg.mxu0
    %v607 = vtanh.pop %v604
    %vm608 = vcmask 74752
    %609 = vst.msk [vmem:[#allocation2] sm:$0x3] %vm608, %v607
    %v611 = vrot.slane %v379, 4
    %v612 = vsel %vm138, %v611, 0
    %614 = vmatprep.subr.mxu0 0.0
    %615 = vmatpush1.msra.mxu0 %v120
    %616 = vmatprep.subr.mxu0 0.0
    %617 = vmatpush1.msra.mxu0 %v144
    %618 = vmatprep.subr.mxu0 0.0
    %619 = vmatpush1.msra.mxu0 0.0
    %620 = vmatprep.subr.mxu0 0.0
    %621 = vmatpush1.msra.mxu0 0.0
    %622 = vmatprep.subr.mxu0 0.0
    %623 = vmatpush1.msra.mxu0 0.0
    %624 = vmatprep.subr.mxu0 0.0
    %625 = vmatpush1.msra.mxu0 0.0
    %626 = vmatprep.subr.mxu0 0.0
    %627 = vmatpush1.msra.mxu0 0.0
    %628 = vmatprep.subr.mxu0 0.0
    %629 = vmatpush1.msra.mxu0 0.0
    %630 = vmatprep.subr.mxu0 0.0
    %631 = vmatpush1.msra.mxu0 0.0
    %632 = vmatprep.subr.mxu0 0.0
    %633 = vmatpush1.msra.mxu0 0.0
    %634 = vmatprep.subr.mxu0 0.0
    %635 = vmatpush1.msra.mxu0 0.0
    %636 = vmatprep.subr.mxu0 0.0
    %637 = vmatpush1.msra.mxu0 0.0
    %638 = vmatprep.subr.mxu0 0.0
    %639 = vmatpush1.msra.mxu0 0.0
    %640 = vmatprep.subr.mxu0 0.0
    %641 = vmatpush1.msra.mxu0 0.0
    %642 = vmatprep.subr.mxu0 0.0
    %643 = vmatpush1.msra.mxu0 0.0
    %644 = vmatprep.subr.mxu0 0.0
    %645 = vmatpush1.msra.mxu0 0.0
    %646 = vmatprep.subr.mxu0 0.0
    %647 = vmatpush1.msra.mxu0 0.0
    %648 = vmatprep.subr.mxu0 0.0
    %649 = vmatpush1.msra.mxu0 0.0
    %650 = vmatprep.subr.mxu0 0.0
    %651 = vmatpush1.msra.mxu0 0.0
    %652 = vmatprep.subr.mxu0 0.0
    %653 = vmatpush1.msra.mxu0 0.0
    %654 = vmatprep.subr.mxu0 0.0
    %655 = vmatpush1.msra.mxu0 0.0
    %656 = vmatprep.subr.mxu0 0.0
    %657 = vmatpush1.msra.mxu0 0.0
    %658 = vmatprep.subr.mxu0 0.0
    %659 = vmatpush1.msra.mxu0 0.0
    %660 = vmatprep.subr.mxu0 0.0
    %661 = vmatpush1.msra.mxu0 0.0
    %662 = vmatprep.subr.mxu0 0.0
    %663 = vmatpush1.msra.mxu0 0.0
    %664 = vmatprep.subr.mxu0 0.0
    %665 = vmatpush1.msra.mxu0 0.0
    %666 = vmatprep.subr.mxu0 0.0
    %667 = vmatpush1.msra.mxu0 0.0
    %668 = vmatprep.subr.mxu0 0.0
    %669 = vmatpush1.msra.mxu0 0.0
    %670 = vmatprep.subr.mxu0 0.0
    %671 = vmatpush1.msra.mxu0 0.0
    %672 = vmatprep.subr.mxu0 0.0
    %673 = vmatpush1.msra.mxu0 0.0
    %674 = vmatprep.subr.mxu0 0.0
    %675 = vmatpush1.msra.mxu0 0.0
    %676 = vmatprep.subr.mxu0 0.0
    %677 = vmatpush1.msra.mxu0 0.0
    %678 = vmatprep.mubr.f32.mxu0 0.0
    %679 = vmatmul.mubr.f32.gmra.mrb[0].mxu0 %v612
    %v680 = vpop.f32.mrb[0].mxu0
    %v681 = vadd.f32 0.0, %v680
    %v682 = vpop.f32.mrb[0].mxu0
    %683 = vdwg.mxu0
    %v685 = vrot.slane %v681, 2
    %v687 = vadd.f32 %v112, %v685
    %v688 = vtanh.pop %v687
    %689 = vmatprep.subr.mxu0 0.0
    %690 = vmatpush1.msra.mxu0 %v128
    %691 = vmatprep.subr.mxu0 0.0
    %692 = vmatpush1.msra.mxu0 %v228
    %693 = vmatprep.subr.mxu0 0.0
    %694 = vmatpush1.msra.mxu0 0.0
    %695 = vmatprep.subr.mxu0 0.0
    %696 = vmatpush1.msra.mxu0 0.0
    %697 = vmatprep.subr.mxu0 0.0
    %698 = vmatpush1.msra.mxu0 0.0
    %699 = vmatprep.subr.mxu0 0.0
    %700 = vmatpush1.msra.mxu0 0.0
    %701 = vmatprep.subr.mxu0 0.0
    %702 = vmatpush1.msra.mxu0 0.0
    %703 = vmatprep.subr.mxu0 0.0
    %704 = vmatpush1.msra.mxu0 0.0
    %705 = vmatprep.subr.mxu0 0.0
    %706 = vmatpush1.msra.mxu0 0.0
    %707 = vmatprep.subr.mxu0 0.0
    %708 = vmatpush1.msra.mxu0 0.0
    %709 = vmatprep.subr.mxu0 0.0
    %710 = vmatpush1.msra.mxu0 0.0
    %711 = vmatprep.subr.mxu0 0.0
    %712 = vmatpush1.msra.mxu0 0.0
    %713 = vmatprep.subr.mxu0 0.0
    %714 = vmatpush1.msra.mxu0 0.0
    %715 = vmatprep.subr.mxu0 0.0
    %716 = vmatpush1.msra.mxu0 0.0
    %717 = vmatprep.subr.mxu0 0.0
    %718 = vmatpush1.msra.mxu0 0.0
    %719 = vmatprep.subr.mxu0 0.0
    %720 = vmatpush1.msra.mxu0 0.0
    %721 = vmatprep.subr.mxu0 0.0
    %722 = vmatpush1.msra.mxu0 0.0
    %723 = vmatprep.subr.mxu0 0.0
    %724 = vmatpush1.msra.mxu0 0.0
    %725 = vmatprep.subr.mxu0 0.0
    %726 = vmatpush1.msra.mxu0 0.0
    %727 = vmatprep.subr.mxu0 0.0
    %728 = vmatpush1.msra.mxu0 0.0
    %729 = vmatprep.subr.mxu0 0.0
    %730 = vmatpush1.msra.mxu0 0.0
    %731 = vmatprep.subr.mxu0 0.0
    %732 = vmatpush1.msra.mxu0 0.0
    %733 = vmatprep.subr.mxu0 0.0
    %734 = vmatpush1.msra.mxu0 0.0
    %735 = vmatprep.subr.mxu0 0.0
    %736 = vmatpush1.msra.mxu0 0.0
    %737 = vmatprep.subr.mxu0 0.0
    %738 = vmatpush1.msra.mxu0 0.0
    %739 = vmatprep.subr.mxu0 0.0
    %740 = vmatpush1.msra.mxu0 0.0
    %741 = vmatprep.subr.mxu0 0.0
    %742 = vmatpush1.msra.mxu0 0.0
    %743 = vmatprep.subr.mxu0 0.0
    %744 = vmatpush1.msra.mxu0 0.0
    %745 = vmatprep.subr.mxu0 0.0
    %746 = vmatpush1.msra.mxu0 0.0
    %747 = vmatprep.subr.mxu0 0.0
    %748 = vmatpush1.msra.mxu0 0.0
    %749 = vmatprep.subr.mxu0 0.0
    %750 = vmatpush1.msra.mxu0 0.0
    %751 = vmatprep.subr.mxu0 0.0
    %752 = vmatpush1.msra.mxu0 0.0
    %753 = vmatprep.mubr.f32.mxu0 0.0
    %754 = vmatmul.mubr.f32.gmra.mrb[0].mxu0 %v612
    %v755 = vpop.f32.mrb[0].mxu0
    %v756 = vadd.f32 %v225, %v755
    %v757 = vpop.f32.mrb[0].mxu0
    %758 = vdwg.mxu0
    %v760 = vsel %vm138, %v527, 0
    %762 = vmatprep.subr.mxu0 0.0
    %763 = vmatpush1.msra.mxu0 %v123
    %764 = vmatprep.subr.mxu0 0.0
    %765 = vmatpush1.msra.mxu0 %v454
    %766 = vmatprep.subr.mxu0 0.0
    %767 = vmatpush1.msra.mxu0 0.0
    %768 = vmatprep.subr.mxu0 0.0
    %769 = vmatpush1.msra.mxu0 0.0
    %770 = vmatprep.subr.mxu0 0.0
    %771 = vmatpush1.msra.mxu0 0.0
    %772 = vmatprep.subr.mxu0 0.0
    %773 = vmatpush1.msra.mxu0 0.0
    %774 = vmatprep.subr.mxu0 0.0
    %775 = vmatpush1.msra.mxu0 0.0
    %776 = vmatprep.subr.mxu0 0.0
    %777 = vmatpush1.msra.mxu0 0.0
    %778 = vmatprep.subr.mxu0 0.0
    %779 = vmatpush1.msra.mxu0 0.0
    %780 = vmatprep.subr.mxu0 0.0
    %781 = vmatpush1.msra.mxu0 0.0
    %782 = vmatprep.subr.mxu0 0.0
    %783 = vmatpush1.msra.mxu0 0.0
    %784 = vmatprep.subr.mxu0 0.0
    %785 = vmatpush1.msra.mxu0 0.0
    %786 = vmatprep.subr.mxu0 0.0
    %787 = vmatpush1.msra.mxu0 0.0
    %788 = vmatprep.subr.mxu0 0.0
    %789 = vmatpush1.msra.mxu0 0.0
    %790 = vmatprep.subr.mxu0 0.0
    %791 = vmatpush1.msra.mxu0 0.0
    %792 = vmatprep.subr.mxu0 0.0
    %793 = vmatpush1.msra.mxu0 0.0
    %794 = vmatprep.subr.mxu0 0.0
    %795 = vmatpush1.msra.mxu0 0.0
    %796 = vmatprep.subr.mxu0 0.0
    %797 = vmatpush1.msra.mxu0 0.0
    %798 = vmatprep.subr.mxu0 0.0
    %799 = vmatpush1.msra.mxu0 0.0
    %800 = vmatprep.subr.mxu0 0.0
    %801 = vmatpush1.msra.mxu0 0.0
    %802 = vmatprep.subr.mxu0 0.0
    %803 = vmatpush1.msra.mxu0 0.0
    %804 = vmatprep.subr.mxu0 0.0
    %805 = vmatpush1.msra.mxu0 0.0
    %806 = vmatprep.subr.mxu0 0.0
    %807 = vmatpush1.msra.mxu0 0.0
    %808 = vmatprep.subr.mxu0 0.0
    %809 = vmatpush1.msra.mxu0 0.0
    %810 = vmatprep.subr.mxu0 0.0
    %811 = vmatpush1.msra.mxu0 0.0
    %812 = vmatprep.subr.mxu0 0.0
    %813 = vmatpush1.msra.mxu0 0.0
    %814 = vmatprep.subr.mxu0 0.0
    %815 = vmatpush1.msra.mxu0 0.0
    %816 = vmatprep.subr.mxu0 0.0
    %817 = vmatpush1.msra.mxu0 0.0
    %818 = vmatprep.subr.mxu0 0.0
    %819 = vmatpush1.msra.mxu0 0.0
    %820 = vmatprep.subr.mxu0 0.0
    %821 = vmatpush1.msra.mxu0 0.0
    %822 = vmatprep.subr.mxu0 0.0
    %823 = vmatpush1.msra.mxu0 0.0
    %824 = vmatprep.subr.mxu0 0.0
    %825 = vmatpush1.msra.mxu0 0.0
    %826 = vmatprep.mubr.f32.mxu0 0.0
    %827 = vmatmul.mubr.f32.gmra.mrb[0].mxu0 %v760
    %v828 = vpop.f32.mrb[0].mxu0
    %v829 = vadd.f32 0.0, %v828
    %v830 = vpop.f32.mrb[0].mxu0
    %831 = vdwg.mxu0
    %v832 = vadd.f32 %v756, %v829
    %v833 = vtanh.pop %v832
    %834 = vmatprep.subr.mxu0 0.0
    %835 = vmatpush1.msra.mxu0 %v131
    %836 = vmatprep.subr.mxu0 0.0
    %837 = vmatpush1.msra.mxu0 %v535
    %838 = vmatprep.subr.mxu0 0.0
    %839 = vmatpush1.msra.mxu0 0.0
    %840 = vmatprep.subr.mxu0 0.0
    %841 = vmatpush1.msra.mxu0 0.0
    %842 = vmatprep.subr.mxu0 0.0
    %843 = vmatpush1.msra.mxu0 0.0
    %844 = vmatprep.subr.mxu0 0.0
    %845 = vmatpush1.msra.mxu0 0.0
    %846 = vmatprep.subr.mxu0 0.0
    %847 = vmatpush1.msra.mxu0 0.0
    %848 = vmatprep.subr.mxu0 0.0
    %849 = vmatpush1.msra.mxu0 0.0
    %850 = vmatprep.subr.mxu0 0.0
    %851 = vmatpush1.msra.mxu0 0.0
    %852 = vmatprep.subr.mxu0 0.0
    %853 = vmatpush1.msra.mxu0 0.0
    %854 = vmatprep.subr.mxu0 0.0
    %855 = vmatpush1.msra.mxu0 0.0
    %856 = vmatprep.subr.mxu0 0.0
    %857 = vmatpush1.msra.mxu0 0.0
    %858 = vmatprep.subr.mxu0 0.0
    %859 = vmatpush1.msra.mxu0 0.0
    %860 = vmatprep.subr.mxu0 0.0
    %861 = vmatpush1.msra.mxu0 0.0
    %862 = vmatprep.subr.mxu0 0.0
    %863 = vmatpush1.msra.mxu0 0.0
    %864 = vmatprep.subr.mxu0 0.0
    %865 = vmatpush1.msra.mxu0 0.0
    %866 = vmatprep.subr.mxu0 0.0
    %867 = vmatpush1.msra.mxu0 0.0
    %868 = vmatprep.subr.mxu0 0.0
    %869 = vmatpush1.msra.mxu0 0.0
    %870 = vmatprep.subr.mxu0 0.0
    %871 = vmatpush1.msra.mxu0 0.0
    %872 = vmatprep.subr.mxu0 0.0
    %873 = vmatpush1.msra.mxu0 0.0
    %874 = vmatprep.subr.mxu0 0.0
    %875 = vmatpush1.msra.mxu0 0.0
    %876 = vmatprep.subr.mxu0 0.0
    %877 = vmatpush1.msra.mxu0 0.0
    %878 = vmatprep.subr.mxu0 0.0
    %879 = vmatpush1.msra.mxu0 0.0
    %880 = vmatprep.subr.mxu0 0.0
    %881 = vmatpush1.msra.mxu0 0.0
    %882 = vmatprep.subr.mxu0 0.0
    %883 = vmatpush1.msra.mxu0 0.0
    %884 = vmatprep.subr.mxu0 0.0
    %885 = vmatpush1.msra.mxu0 0.0
    %886 = vmatprep.subr.mxu0 0.0
    %887 = vmatpush1.msra.mxu0 0.0
    %888 = vmatprep.subr.mxu0 0.0
    %889 = vmatpush1.msra.mxu0 0.0
    %890 = vmatprep.subr.mxu0 0.0
    %891 = vmatpush1.msra.mxu0 0.0
    %892 = vmatprep.subr.mxu0 0.0
    %893 = vmatpush1.msra.mxu0 0.0
    %894 = vmatprep.subr.mxu0 0.0
    %895 = vmatpush1.msra.mxu0 0.0
    %896 = vmatprep.subr.mxu0 0.0
    %897 = vmatpush1.msra.mxu0 0.0
    %898 = vmatprep.mubr.f32.mxu0 0.0
    %899 = vmatmul.mubr.f32.gmra.mrb[0].mxu0 %v760
    %v900 = vpop.f32.mrb[0].mxu0
    %v901 = vadd.f32 %v532, %v900
    %v902 = vpop.f32.mrb[0].mxu0
    %903 = vdwg.mxu0
    %v905 = vsel %vm138, %v607, 0
    %v908 = vsel %vm142, %v127, 0
    %910 = vmatprep.subr.mxu0 0.0
    %911 = vmatpush1.msra.mxu0 %v126
    %912 = vmatprep.subr.mxu0 0.0
    %913 = vmatpush1.msra.mxu0 %v908
    %914 = vmatprep.subr.mxu0 0.0
    %915 = vmatpush1.msra.mxu0 0.0
    %916 = vmatprep.subr.mxu0 0.0
    %917 = vmatpush1.msra.mxu0 0.0
    %918 = vmatprep.subr.mxu0 0.0
    %919 = vmatpush1.msra.mxu0 0.0
    %920 = vmatprep.subr.mxu0 0.0
    %921 = vmatpush1.msra.mxu0 0.0
    %922 = vmatprep.subr.mxu0 0.0
    %923 = vmatpush1.msra.mxu0 0.0
    %924 = vmatprep.subr.mxu0 0.0
    %925 = vmatpush1.msra.mxu0 0.0
    %926 = vmatprep.subr.mxu0 0.0
    %927 = vmatpush1.msra.mxu0 0.0
    %928 = vmatprep.subr.mxu0 0.0
    %929 = vmatpush1.msra.mxu0 0.0
    %930 = vmatprep.subr.mxu0 0.0
    %931 = vmatpush1.msra.mxu0 0.0
    %932 = vmatprep.subr.mxu0 0.0
    %933 = vmatpush1.msra.mxu0 0.0
    %934 = vmatprep.subr.mxu0 0.0
    %935 = vmatpush1.msra.mxu0 0.0
    %936 = vmatprep.subr.mxu0 0.0
    %937 = vmatpush1.msra.mxu0 0.0
    %938 = vmatprep.subr.mxu0 0.0
    %939 = vmatpush1.msra.mxu0 0.0
    %940 = vmatprep.subr.mxu0 0.0
    %941 = vmatpush1.msra.mxu0 0.0
    %942 = vmatprep.subr.mxu0 0.0
    %943 = vmatpush1.msra.mxu0 0.0
    %944 = vmatprep.subr.mxu0 0.0
    %945 = vmatpush1.msra.mxu0 0.0
    %946 = vmatprep.subr.mxu0 0.0
    %947 = vmatpush1.msra.mxu0 0.0
    %948 = vmatprep.subr.mxu0 0.0
    %949 = vmatpush1.msra.mxu0 0.0
    %950 = vmatprep.subr.mxu0 0.0
    %951 = vmatpush1.msra.mxu0 0.0
    %952 = vmatprep.subr.mxu0 0.0
    %953 = vmatpush1.msra.mxu0 0.0
    %954 = vmatprep.subr.mxu0 0.0
    %955 = vmatpush1.msra.mxu0 0.0
    %956 = vmatprep.subr.mxu0 0.0
    %957 = vmatpush1.msra.mxu0 0.0
    %958 = vmatprep.subr.mxu0 0.0
    %959 = vmatpush1.msra.mxu0 0.0
    %960 = vmatprep.subr.mxu0 0.0
    %961 = vmatpush1.msra.mxu0 0.0
    %962 = vmatprep.subr.mxu0 0.0
    %963 = vmatpush1.msra.mxu0 0.0
    %964 = vmatprep.subr.mxu0 0.0
    %965 = vmatpush1.msra.mxu0 0.0
    %966 = vmatprep.subr.mxu0 0.0
    %967 = vmatpush1.msra.mxu0 0.0
    %968 = vmatprep.subr.mxu0 0.0
    %969 = vmatpush1.msra.mxu0 0.0
    %970 = vmatprep.subr.mxu0 0.0
    %971 = vmatpush1.msra.mxu0 0.0
    %972 = vmatprep.subr.mxu0 0.0
    %973 = vmatpush1.msra.mxu0 0.0
    %974 = vmatprep.mubr.f32.mxu0 0.0
    %975 = vmatmul.mubr.f32.gmra.mrb[0].mxu0 %v905
    %v976 = vpop.f32.mrb[0].mxu0
    %v977 = vadd.f32 0.0, %v976
    %v978 = vpop.f32.mrb[0].mxu0
    %979 = vdwg.mxu0
    %v980 = vadd.f32 %v901, %v977
    %v981 = vtanh.pop %v980
    %982 = vst.msk [vmem:[#allocation2 + $0x2] sm:$0x3] %vm608, %v981
    %v984 = vrot.slane %v688, 6
    %v985 = vsel %vm138, %v984, 0
    %987 = vmatprep.subr.mxu0 0.0
    %988 = vmatpush1.msra.mxu0 %v120
    %989 = vmatprep.subr.mxu0 0.0
    %990 = vmatpush1.msra.mxu0 %v144
    %991 = vmatprep.subr.mxu0 0.0
    %992 = vmatpush1.msra.mxu0 0.0
    %993 = vmatprep.subr.mxu0 0.0
    %994 = vmatpush1.msra.mxu0 0.0
    %995 = vmatprep.subr.mxu0 0.0
    %996 = vmatpush1.msra.mxu0 0.0
    %997 = vmatprep.subr.mxu0 0.0
    %998 = vmatpush1.msra.mxu0 0.0
    %999 = vmatprep.subr.mxu0 0.0
    %1000 = vmatpush1.msra.mxu0 0.0
    %1001 = vmatprep.subr.mxu0 0.0
    %1002 = vmatpush1.msra.mxu0 0.0
    %1003 = vmatprep.subr.mxu0 0.0
    %1004 = vmatpush1.msra.mxu0 0.0
    %1005 = vmatprep.subr.mxu0 0.0
    %1006 = vmatpush1.msra.mxu0 0.0
    %1007 = vmatprep.subr.mxu0 0.0
    %1008 = vmatpush1.msra.mxu0 0.0
    %1009 = vmatprep.subr.mxu0 0.0
    %1010 = vmatpush1.msra.mxu0 0.0
    %1011 = vmatprep.subr.mxu0 0.0
    %1012 = vmatpush1.msra.mxu0 0.0
    %1013 = vmatprep.subr.mxu0 0.0
    %1014 = vmatpush1.msra.mxu0 0.0
    %1015 = vmatprep.subr.mxu0 0.0
    %1016 = vmatpush1.msra.mxu0 0.0
    %1017 = vmatprep.subr.mxu0 0.0
    %1018 = vmatpush1.msra.mxu0 0.0
    %1019 = vmatprep.subr.mxu0 0.0
    %1020 = vmatpush1.msra.mxu0 0.0
    %1021 = vmatprep.subr.mxu0 0.0
    %1022 = vmatpush1.msra.mxu0 0.0
    %1023 = vmatprep.subr.mxu0 0.0
    %1024 = vmatpush1.msra.mxu0 0.0
    %1025 = vmatprep.subr.mxu0 0.0
    %1026 = vmatpush1.msra.mxu0 0.0
    %1027 = vmatprep.subr.mxu0 0.0
    %1028 = vmatpush1.msra.mxu0 0.0
    %1029 = vmatprep.subr.mxu0 0.0
    %1030 = vmatpush1.msra.mxu0 0.0
    %1031 = vmatprep.subr.mxu0 0.0
    %1032 = vmatpush1.msra.mxu0 0.0
    %1033 = vmatprep.subr.mxu0 0.0
    %1034 = vmatpush1.msra.mxu0 0.0
    %1035 = vmatprep.subr.mxu0 0.0
    %1036 = vmatpush1.msra.mxu0 0.0
    %1037 = vmatprep.subr.mxu0 0.0
    %1038 = vmatpush1.msra.mxu0 0.0
    %1039 = vmatprep.subr.mxu0 0.0
    %1040 = vmatpush1.msra.mxu0 0.0
    %1041 = vmatprep.subr.mxu0 0.0
    %1042 = vmatpush1.msra.mxu0 0.0
    %1043 = vmatprep.subr.mxu0 0.0
    %1044 = vmatpush1.msra.mxu0 0.0
    %1045 = vmatprep.subr.mxu0 0.0
    %1046 = vmatpush1.msra.mxu0 0.0
    %1047 = vmatprep.subr.mxu0 0.0
    %1048 = vmatpush1.msra.mxu0 0.0
    %1049 = vmatprep.subr.mxu0 0.0
    %1050 = vmatpush1.msra.mxu0 0.0
    %1051 = vmatprep.mubr.f32.mxu0 0.0
    %1052 = vmatmul.mubr.f32.gmra.mrb[0].mxu0 %v985
    %v1053 = vpop.f32.mrb[0].mxu0
    %v1054 = vadd.f32 0.0, %v1053
    %v1055 = vpop.f32.mrb[0].mxu0
    %1056 = vdwg.mxu0
    %v1057 = vadd.f32 %v117, %v1054
    %v1058 = vtanh.pop %v1057
    %1059 = vmatprep.subr.mxu0 0.0
    %1060 = vmatpush1.msra.mxu0 %v128
    %1061 = vmatprep.subr.mxu0 0.0
    %1062 = vmatpush1.msra.mxu0 %v228
    %1063 = vmatprep.subr.mxu0 0.0
    %1064 = vmatpush1.msra.mxu0 0.0
    %1065 = vmatprep.subr.mxu0 0.0
    %1066 = vmatpush1.msra.mxu0 0.0
    %1067 = vmatprep.subr.mxu0 0.0
    %1068 = vmatpush1.msra.mxu0 0.0
    %1069 = vmatprep.subr.mxu0 0.0
    %1070 = vmatpush1.msra.mxu0 0.0
    %1071 = vmatprep.subr.mxu0 0.0
    %1072 = vmatpush1.msra.mxu0 0.0
    %1073 = vmatprep.subr.mxu0 0.0
    %1074 = vmatpush1.msra.mxu0 0.0
    %1075 = vmatprep.subr.mxu0 0.0
    %1076 = vmatpush1.msra.mxu0 0.0
    %1077 = vmatprep.subr.mxu0 0.0
    %1078 = vmatpush1.msra.mxu0 0.0
    %1079 = vmatprep.subr.mxu0 0.0
    %1080 = vmatpush1.msra.mxu0 0.0
    %1081 = vmatprep.subr.mxu0 0.0
    %1082 = vmatpush1.msra.mxu0 0.0
    %1083 = vmatprep.subr.mxu0 0.0
    %1084 = vmatpush1.msra.mxu0 0.0
    %1085 = vmatprep.subr.mxu0 0.0
    %1086 = vmatpush1.msra.mxu0 0.0
    %1087 = vmatprep.subr.mxu0 0.0
    %1088 = vmatpush1.msra.mxu0 0.0
    %1089 = vmatprep.subr.mxu0 0.0
    %1090 = vmatpush1.msra.mxu0 0.0
    %1091 = vmatprep.subr.mxu0 0.0
    %1092 = vmatpush1.msra.mxu0 0.0
    %1093 = vmatprep.subr.mxu0 0.0
    %1094 = vmatpush1.msra.mxu0 0.0
    %1095 = vmatprep.subr.mxu0 0.0
    %1096 = vmatpush1.msra.mxu0 0.0
    %1097 = vmatprep.subr.mxu0 0.0
    %1098 = vmatpush1.msra.mxu0 0.0
    %1099 = vmatprep.subr.mxu0 0.0
    %1100 = vmatpush1.msra.mxu0 0.0
    %1101 = vmatprep.subr.mxu0 0.0
    %1102 = vmatpush1.msra.mxu0 0.0
    %1103 = vmatprep.subr.mxu0 0.0
    %1104 = vmatpush1.msra.mxu0 0.0
    %1105 = vmatprep.subr.mxu0 0.0
    %1106 = vmatpush1.msra.mxu0 0.0
    %1107 = vmatprep.subr.mxu0 0.0
    %1108 = vmatpush1.msra.mxu0 0.0
    %1109 = vmatprep.subr.mxu0 0.0
    %1110 = vmatpush1.msra.mxu0 0.0
    %1111 = vmatprep.subr.mxu0 0.0
    %1112 = vmatpush1.msra.mxu0 0.0
    %1113 = vmatprep.subr.mxu0 0.0
    %1114 = vmatpush1.msra.mxu0 0.0
    %1115 = vmatprep.subr.mxu0 0.0
    %1116 = vmatpush1.msra.mxu0 0.0
    %1117 = vmatprep.subr.mxu0 0.0
    %1118 = vmatpush1.msra.mxu0 0.0
    %1119 = vmatprep.subr.mxu0 0.0
    %1120 = vmatpush1.msra.mxu0 0.0
    %1121 = vmatprep.subr.mxu0 0.0
    %1122 = vmatpush1.msra.mxu0 0.0
    %1123 = vmatprep.mubr.f32.mxu0 0.0
    %1124 = vmatmul.mubr.f32.gmra.mrb[0].mxu0 %v985
    %v1125 = vpop.f32.mrb[0].mxu0
    %v1126 = vadd.f32 %v225, %v1125
    %v1127 = vpop.f32.mrb[0].mxu0
    %1128 = vdwg.mxu0
    %v1130 = vsel %vm138, %v833, 0
    %1132 = vmatprep.subr.mxu0 0.0
    %1133 = vmatpush1.msra.mxu0 %v123
    %1134 = vmatprep.subr.mxu0 0.0
    %1135 = vmatpush1.msra.mxu0 %v454
    %1136 = vmatprep.subr.mxu0 0.0
    %1137 = vmatpush1.msra.mxu0 0.0
    %1138 = vmatprep.subr.mxu0 0.0
    %1139 = vmatpush1.msra.mxu0 0.0
    %1140 = vmatprep.subr.mxu0 0.0
    %1141 = vmatpush1.msra.mxu0 0.0
    %1142 = vmatprep.subr.mxu0 0.0
    %1143 = vmatpush1.msra.mxu0 0.0
    %1144 = vmatprep.subr.mxu0 0.0
    %1145 = vmatpush1.msra.mxu0 0.0
    %1146 = vmatprep.subr.mxu0 0.0
    %1147 = vmatpush1.msra.mxu0 0.0
    %1148 = vmatprep.subr.mxu0 0.0
    %1149 = vmatpush1.msra.mxu0 0.0
    %1150 = vmatprep.subr.mxu0 0.0
    %1151 = vmatpush1.msra.mxu0 0.0
    %1152 = vmatprep.subr.mxu0 0.0
    %1153 = vmatpush1.msra.mxu0 0.0
    %1154 = vmatprep.subr.mxu0 0.0
    %1155 = vmatpush1.msra.mxu0 0.0
    %1156 = vmatprep.subr.mxu0 0.0
    %1157 = vmatpush1.msra.mxu0 0.0
    %1158 = vmatprep.subr.mxu0 0.0
    %1159 = vmatpush1.msra.mxu0 0.0
    %1160 = vmatprep.subr.mxu0 0.0
    %1161 = vmatpush1.msra.mxu0 0.0
    %1162 = vmatprep.subr.mxu0 0.0
    %1163 = vmatpush1.msra.mxu0 0.0
    %1164 = vmatprep.subr.mxu0 0.0
    %1165 = vmatpush1.msra.mxu0 0.0
    %1166 = vmatprep.subr.mxu0 0.0
    %1167 = vmatpush1.msra.mxu0 0.0
    %1168 = vmatprep.subr.mxu0 0.0
    %1169 = vmatpush1.msra.mxu0 0.0
    %1170 = vmatprep.subr.mxu0 0.0
    %1171 = vmatpush1.msra.mxu0 0.0
    %1172 = vmatprep.subr.mxu0 0.0
    %1173 = vmatpush1.msra.mxu0 0.0
    %1174 = vmatprep.subr.mxu0 0.0
    %1175 = vmatpush1.msra.mxu0 0.0
    %1176 = vmatprep.subr.mxu0 0.0
    %1177 = vmatpush1.msra.mxu0 0.0
    %1178 = vmatprep.subr.mxu0 0.0
    %1179 = vmatpush1.msra.mxu0 0.0
    %1180 = vmatprep.subr.mxu0 0.0
    %1181 = vmatpush1.msra.mxu0 0.0
    %1182 = vmatprep.subr.mxu0 0.0
    %1183 = vmatpush1.msra.mxu0 0.0
    %1184 = vmatprep.subr.mxu0 0.0
    %1185 = vmatpush1.msra.mxu0 0.0
    %1186 = vmatprep.subr.mxu0 0.0
    %1187 = vmatpush1.msra.mxu0 0.0
    %1188 = vmatprep.subr.mxu0 0.0
    %1189 = vmatpush1.msra.mxu0 0.0
    %1190 = vmatprep.subr.mxu0 0.0
    %1191 = vmatpush1.msra.mxu0 0.0
    %1192 = vmatprep.subr.mxu0 0.0
    %1193 = vmatpush1.msra.mxu0 0.0
    %1194 = vmatprep.subr.mxu0 0.0
    %1195 = vmatpush1.msra.mxu0 0.0
    %1196 = vmatprep.mubr.f32.mxu0 0.0
    %1197 = vmatmul.mubr.f32.gmra.mrb[0].mxu0 %v1130
    %v1198 = vpop.f32.mrb[0].mxu0
    %v1199 = vadd.f32 0.0, %v1198
    %v1200 = vpop.f32.mrb[0].mxu0
    %1201 = vdwg.mxu0
    %v1202 = vadd.f32 %v1126, %v1199
    %v1203 = vtanh.pop %v1202
    %1204 = vmatprep.subr.mxu0 0.0
    %1205 = vmatpush1.msra.mxu0 %v131
    %1206 = vmatprep.subr.mxu0 0.0
    %1207 = vmatpush1.msra.mxu0 %v535
    %1208 = vmatprep.subr.mxu0 0.0
    %1209 = vmatpush1.msra.mxu0 0.0
    %1210 = vmatprep.subr.mxu0 0.0
    %1211 = vmatpush1.msra.mxu0 0.0
    %1212 = vmatprep.subr.mxu0 0.0
    %1213 = vmatpush1.msra.mxu0 0.0
    %1214 = vmatprep.subr.mxu0 0.0
    %1215 = vmatpush1.msra.mxu0 0.0
    %1216 = vmatprep.subr.mxu0 0.0
    %1217 = vmatpush1.msra.mxu0 0.0
    %1218 = vmatprep.subr.mxu0 0.0
    %1219 = vmatpush1.msra.mxu0 0.0
    %1220 = vmatprep.subr.mxu0 0.0
    %1221 = vmatpush1.msra.mxu0 0.0
    %1222 = vmatprep.subr.mxu0 0.0
    %1223 = vmatpush1.msra.mxu0 0.0
    %1224 = vmatprep.subr.mxu0 0.0
    %1225 = vmatpush1.msra.mxu0 0.0
    %1226 = vmatprep.subr.mxu0 0.0
    %1227 = vmatpush1.msra.mxu0 0.0
    %1228 = vmatprep.subr.mxu0 0.0
    %1229 = vmatpush1.msra.mxu0 0.0
    %1230 = vmatprep.subr.mxu0 0.0
    %1231 = vmatpush1.msra.mxu0 0.0
    %1232 = vmatprep.subr.mxu0 0.0
    %1233 = vmatpush1.msra.mxu0 0.0
    %1234 = vmatprep.subr.mxu0 0.0
    %1235 = vmatpush1.msra.mxu0 0.0
    %1236 = vmatprep.subr.mxu0 0.0
    %1237 = vmatpush1.msra.mxu0 0.0
    %1238 = vmatprep.subr.mxu0 0.0
    %1239 = vmatpush1.msra.mxu0 0.0
    %1240 = vmatprep.subr.mxu0 0.0
    %1241 = vmatpush1.msra.mxu0 0.0
    %1242 = vmatprep.subr.mxu0 0.0
    %1243 = vmatpush1.msra.mxu0 0.0
    %1244 = vmatprep.subr.mxu0 0.0
    %1245 = vmatpush1.msra.mxu0 0.0
    %1246 = vmatprep.subr.mxu0 0.0
    %1247 = vmatpush1.msra.mxu0 0.0
    %1248 = vmatprep.subr.mxu0 0.0
    %1249 = vmatpush1.msra.mxu0 0.0
    %1250 = vmatprep.subr.mxu0 0.0
    %1251 = vmatpush1.msra.mxu0 0.0
    %1252 = vmatprep.subr.mxu0 0.0
    %1253 = vmatpush1.msra.mxu0 0.0
    %1254 = vmatprep.subr.mxu0 0.0
    %1255 = vmatpush1.msra.mxu0 0.0
    %1256 = vmatprep.subr.mxu0 0.0
    %1257 = vmatpush1.msra.mxu0 0.0
    %1258 = vmatprep.subr.mxu0 0.0
    %1259 = vmatpush1.msra.mxu0 0.0
    %1260 = vmatprep.subr.mxu0 0.0
    %1261 = vmatpush1.msra.mxu0 0.0
    %1262 = vmatprep.subr.mxu0 0.0
    %1263 = vmatpush1.msra.mxu0 0.0
    %1264 = vmatprep.subr.mxu0 0.0
    %1265 = vmatpush1.msra.mxu0 0.0
    %1266 = vmatprep.subr.mxu0 0.0
    %1267 = vmatpush1.msra.mxu0 0.0
    %1268 = vmatprep.mubr.f32.mxu0 0.0
    %1269 = vmatmul.mubr.f32.gmra.mrb[0].mxu0 %v1130
    %v1270 = vpop.f32.mrb[0].mxu0
    %v1271 = vadd.f32 %v532, %v1270
    %v1272 = vpop.f32.mrb[0].mxu0
    %1273 = vdwg.mxu0
    %v1275 = vsel %vm138, %v981, 0
    %1277 = vmatprep.subr.mxu0 0.0
    %1278 = vmatpush1.msra.mxu0 %v126
    %1279 = vmatprep.subr.mxu0 0.0
    %1280 = vmatpush1.msra.mxu0 %v908
    %1281 = vmatprep.subr.mxu0 0.0
    %1282 = vmatpush1.msra.mxu0 0.0
    %1283 = vmatprep.subr.mxu0 0.0
    %1284 = vmatpush1.msra.mxu0 0.0
    %1285 = vmatprep.subr.mxu0 0.0
    %1286 = vmatpush1.msra.mxu0 0.0
    %1287 = vmatprep.subr.mxu0 0.0
    %1288 = vmatpush1.msra.mxu0 0.0
    %1289 = vmatprep.subr.mxu0 0.0
    %1290 = vmatpush1.msra.mxu0 0.0
    %1291 = vmatprep.subr.mxu0 0.0
    %1292 = vmatpush1.msra.mxu0 0.0
    %1293 = vmatprep.subr.mxu0 0.0
    %1294 = vmatpush1.msra.mxu0 0.0
    %1295 = vmatprep.subr.mxu0 0.0
    %1296 = vmatpush1.msra.mxu0 0.0
    %1297 = vmatprep.subr.mxu0 0.0
    %1298 = vmatpush1.msra.mxu0 0.0
    %1299 = vmatprep.subr.mxu0 0.0
    %1300 = vmatpush1.msra.mxu0 0.0
    %1301 = vmatprep.subr.mxu0 0.0
    %1302 = vmatpush1.msra.mxu0 0.0
    %1303 = vmatprep.subr.mxu0 0.0
    %1304 = vmatpush1.msra.mxu0 0.0
    %1305 = vmatprep.subr.mxu0 0.0
    %1306 = vmatpush1.msra.mxu0 0.0
    %1307 = vmatprep.subr.mxu0 0.0
    %1308 = vmatpush1.msra.mxu0 0.0
    %1309 = vmatprep.subr.mxu0 0.0
    %1310 = vmatpush1.msra.mxu0 0.0
    %1311 = vmatprep.subr.mxu0 0.0
    %1312 = vmatpush1.msra.mxu0 0.0
    %1313 = vmatprep.subr.mxu0 0.0
    %1314 = vmatpush1.msra.mxu0 0.0
    %1315 = vmatprep.subr.mxu0 0.0
    %1316 = vmatpush1.msra.mxu0 0.0
    %1317 = vmatprep.subr.mxu0 0.0
    %1318 = vmatpush1.msra.mxu0 0.0
    %1319 = vmatprep.subr.mxu0 0.0
    %1320 = vmatpush1.msra.mxu0 0.0
    %1321 = vmatprep.subr.mxu0 0.0
    %1322 = vmatpush1.msra.mxu0 0.0
    %1323 = vmatprep.subr.mxu0 0.0
    %1324 = vmatpush1.msra.mxu0 0.0
    %1325 = vmatprep.subr.mxu0 0.0
    %1326 = vmatpush1.msra.mxu0 0.0
    %1327 = vmatprep.subr.mxu0 0.0
    %1328 = vmatpush1.msra.mxu0 0.0
    %1329 = vmatprep.subr.mxu0 0.0
    %1330 = vmatpush1.msra.mxu0 0.0
    %1331 = vmatprep.subr.mxu0 0.0
    %1332 = vmatpush1.msra.mxu0 0.0
    %1333 = vmatprep.subr.mxu0 0.0
    %1334 = vmatpush1.msra.mxu0 0.0
    %1335 = vmatprep.subr.mxu0 0.0
    %1336 = vmatpush1.msra.mxu0 0.0
    %1337 = vmatprep.subr.mxu0 0.0
    %1338 = vmatpush1.msra.mxu0 0.0
    %1339 = vmatprep.subr.mxu0 0.0
    %1340 = vmatpush1.msra.mxu0 0.0
    %1341 = vmatprep.mubr.f32.mxu0 0.0
    %1342 = vmatmul.mubr.f32.gmra.mrb[0].mxu0 %v1275
    %v1343 = vpop.f32.mrb[0].mxu0
    %v1344 = vadd.f32 0.0, %v1343
    %v1345 = vpop.f32.mrb[0].mxu0
    %1346 = vdwg.mxu0
    %v1347 = vadd.f32 %v1271, %v1344
    %v1348 = vtanh.pop %v1347
    %1349 = vst.msk [vmem:[#allocation2 + $0x4] sm:$0x3] %vm608, %v1348
    %v1351 = vsel %vm138, %v1058, 0
    %1353 = vmatprep.subr.mxu0 0.0
    %1354 = vmatpush1.msra.mxu0 %v120
    %1355 = vmatprep.subr.mxu0 0.0
    %1356 = vmatpush1.msra.mxu0 %v144
    %1357 = vmatprep.subr.mxu0 0.0
    %1358 = vmatpush1.msra.mxu0 0.0
    %1359 = vmatprep.subr.mxu0 0.0
    %1360 = vmatpush1.msra.mxu0 0.0
    %1361 = vmatprep.subr.mxu0 0.0
    %1362 = vmatpush1.msra.mxu0 0.0
    %1363 = vmatprep.subr.mxu0 0.0
    %1364 = vmatpush1.msra.mxu0 0.0
    %1365 = vmatprep.subr.mxu0 0.0
    %1366 = vmatpush1.msra.mxu0 0.0
    %1367 = vmatprep.subr.mxu0 0.0
    %1368 = vmatpush1.msra.mxu0 0.0
    %1369 = vmatprep.subr.mxu0 0.0
    %1370 = vmatpush1.msra.mxu0 0.0
    %1371 = vmatprep.subr.mxu0 0.0
    %1372 = vmatpush1.msra.mxu0 0.0
    %1373 = vmatprep.subr.mxu0 0.0
    %1374 = vmatpush1.msra.mxu0 0.0
    %1375 = vmatprep.subr.mxu0 0.0
    %1376 = vmatpush1.msra.mxu0 0.0
    %1377 = vmatprep.subr.mxu0 0.0
    %1378 = vmatpush1.msra.mxu0 0.0
    %1379 = vmatprep.subr.mxu0 0.0
    %1380 = vmatpush1.msra.mxu0 0.0
    %1381 = vmatprep.subr.mxu0 0.0
    %1382 = vmatpush1.msra.mxu0 0.0
    %1383 = vmatprep.subr.mxu0 0.0
    %1384 = vmatpush1.msra.mxu0 0.0
    %1385 = vmatprep.subr.mxu0 0.0
    %1386 = vmatpush1.msra.mxu0 0.0
    %1387 = vmatprep.subr.mxu0 0.0
    %1388 = vmatpush1.msra.mxu0 0.0
    %1389 = vmatprep.subr.mxu0 0.0
    %1390 = vmatpush1.msra.mxu0 0.0
    %1391 = vmatprep.subr.mxu0 0.0
    %1392 = vmatpush1.msra.mxu0 0.0
    %1393 = vmatprep.subr.mxu0 0.0
    %1394 = vmatpush1.msra.mxu0 0.0
    %1395 = vmatprep.subr.mxu0 0.0
    %1396 = vmatpush1.msra.mxu0 0.0
    %1397 = vmatprep.subr.mxu0 0.0
    %1398 = vmatpush1.msra.mxu0 0.0
    %1399 = vmatprep.subr.mxu0 0.0
    %1400 = vmatpush1.msra.mxu0 0.0
    %1401 = vmatprep.subr.mxu0 0.0
    %1402 = vmatpush1.msra.mxu0 0.0
    %1403 = vmatprep.subr.mxu0 0.0
    %1404 = vmatpush1.msra.mxu0 0.0
    %1405 = vmatprep.subr.mxu0 0.0
    %1406 = vmatpush1.msra.mxu0 0.0
    %1407 = vmatprep.subr.mxu0 0.0
    %1408 = vmatpush1.msra.mxu0 0.0
    %1409 = vmatprep.subr.mxu0 0.0
    %1410 = vmatpush1.msra.mxu0 0.0
    %1411 = vmatprep.subr.mxu0 0.0
    %1412 = vmatpush1.msra.mxu0 0.0
    %1413 = vmatprep.subr.mxu0 0.0
    %1414 = vmatpush1.msra.mxu0 0.0
    %1415 = vmatprep.subr.mxu0 0.0
    %1416 = vmatpush1.msra.mxu0 0.0
    %1417 = vmatprep.mubr.f32.mxu0 0.0
    %1418 = vmatmul.mubr.f32.gmra.mrb[0].mxu0 %v1351
    %v1419 = vpop.f32.mrb[0].mxu0
    %v1420 = vadd.f32 0.0, %v1419
    %v1421 = vpop.f32.mrb[0].mxu0
    %1422 = vdwg.mxu0
    %v1424 = vrot.slane %v1420, 6
    %v1426 = vadd.f32 %v117, %v1424
    %v1427 = vtanh.pop %v1426
    %1428 = vmatprep.subr.mxu0 0.0
    %1429 = vmatpush1.msra.mxu0 %v128
    %1430 = vmatprep.subr.mxu0 0.0
    %1431 = vmatpush1.msra.mxu0 %v228
    %1432 = vmatprep.subr.mxu0 0.0
    %1433 = vmatpush1.msra.mxu0 0.0
    %1434 = vmatprep.subr.mxu0 0.0
    %1435 = vmatpush1.msra.mxu0 0.0
    %1436 = vmatprep.subr.mxu0 0.0
    %1437 = vmatpush1.msra.mxu0 0.0
    %1438 = vmatprep.subr.mxu0 0.0
    %1439 = vmatpush1.msra.mxu0 0.0
    %1440 = vmatprep.subr.mxu0 0.0
    %1441 = vmatpush1.msra.mxu0 0.0
    %1442 = vmatprep.subr.mxu0 0.0
    %1443 = vmatpush1.msra.mxu0 0.0
    %1444 = vmatprep.subr.mxu0 0.0
    %1445 = vmatpush1.msra.mxu0 0.0
    %1446 = vmatprep.subr.mxu0 0.0
    %1447 = vmatpush1.msra.mxu0 0.0
    %1448 = vmatprep.subr.mxu0 0.0
    %1449 = vmatpush1.msra.mxu0 0.0
    %1450 = vmatprep.subr.mxu0 0.0
    %1451 = vmatpush1.msra.mxu0 0.0
    %1452 = vmatprep.subr.mxu0 0.0
    %1453 = vmatpush1.msra.mxu0 0.0
    %1454 = vmatprep.subr.mxu0 0.0
    %1455 = vmatpush1.msra.mxu0 0.0
    %1456 = vmatprep.subr.mxu0 0.0
    %1457 = vmatpush1.msra.mxu0 0.0
    %1458 = vmatprep.subr.mxu0 0.0
    %1459 = vmatpush1.msra.mxu0 0.0
    %1460 = vmatprep.subr.mxu0 0.0
    %1461 = vmatpush1.msra.mxu0 0.0
    %1462 = vmatprep.subr.mxu0 0.0
    %1463 = vmatpush1.msra.mxu0 0.0
    %1464 = vmatprep.subr.mxu0 0.0
    %1465 = vmatpush1.msra.mxu0 0.0
    %1466 = vmatprep.subr.mxu0 0.0
    %1467 = vmatpush1.msra.mxu0 0.0
    %1468 = vmatprep.subr.mxu0 0.0
    %1469 = vmatpush1.msra.mxu0 0.0
    %1470 = vmatprep.subr.mxu0 0.0
    %1471 = vmatpush1.msra.mxu0 0.0
    %1472 = vmatprep.subr.mxu0 0.0
    %1473 = vmatpush1.msra.mxu0 0.0
    %1474 = vmatprep.subr.mxu0 0.0
    %1475 = vmatpush1.msra.mxu0 0.0
    %1476 = vmatprep.subr.mxu0 0.0
    %1477 = vmatpush1.msra.mxu0 0.0
    %1478 = vmatprep.subr.mxu0 0.0
    %1479 = vmatpush1.msra.mxu0 0.0
    %1480 = vmatprep.subr.mxu0 0.0
    %1481 = vmatpush1.msra.mxu0 0.0
    %1482 = vmatprep.subr.mxu0 0.0
    %1483 = vmatpush1.msra.mxu0 0.0
    %1484 = vmatprep.subr.mxu0 0.0
    %1485 = vmatpush1.msra.mxu0 0.0
    %1486 = vmatprep.subr.mxu0 0.0
    %1487 = vmatpush1.msra.mxu0 0.0
    %1488 = vmatprep.subr.mxu0 0.0
    %1489 = vmatpush1.msra.mxu0 0.0
    %1490 = vmatprep.subr.mxu0 0.0
    %1491 = vmatpush1.msra.mxu0 0.0
    %1492 = vmatprep.mubr.f32.mxu0 0.0
    %1493 = vmatmul.mubr.f32.gmra.mrb[0].mxu0 %v1351
    %v1494 = vpop.f32.mrb[0].mxu0
    %v1495 = vadd.f32 %v225, %v1494
    %v1496 = vpop.f32.mrb[0].mxu0
    %1497 = vdwg.mxu0
    %v1499 = vsel %vm138, %v1203, 0
    %1501 = vmatprep.subr.mxu0 0.0
    %1502 = vmatpush1.msra.mxu0 %v123
    %1503 = vmatprep.subr.mxu0 0.0
    %1504 = vmatpush1.msra.mxu0 %v454
    %1505 = vmatprep.subr.mxu0 0.0
    %1506 = vmatpush1.msra.mxu0 0.0
    %1507 = vmatprep.subr.mxu0 0.0
    %1508 = vmatpush1.msra.mxu0 0.0
    %1509 = vmatprep.subr.mxu0 0.0
    %1510 = vmatpush1.msra.mxu0 0.0
    %1511 = vmatprep.subr.mxu0 0.0
    %1512 = vmatpush1.msra.mxu0 0.0
    %1513 = vmatprep.subr.mxu0 0.0
    %1514 = vmatpush1.msra.mxu0 0.0
    %1515 = vmatprep.subr.mxu0 0.0
    %1516 = vmatpush1.msra.mxu0 0.0
    %1517 = vmatprep.subr.mxu0 0.0
    %1518 = vmatpush1.msra.mxu0 0.0
    %1519 = vmatprep.subr.mxu0 0.0
    %1520 = vmatpush1.msra.mxu0 0.0
    %1521 = vmatprep.subr.mxu0 0.0
    %1522 = vmatpush1.msra.mxu0 0.0
    %1523 = vmatprep.subr.mxu0 0.0
    %1524 = vmatpush1.msra.mxu0 0.0
    %1525 = vmatprep.subr.mxu0 0.0
    %1526 = vmatpush1.msra.mxu0 0.0
    %1527 = vmatprep.subr.mxu0 0.0
    %1528 = vmatpush1.msra.mxu0 0.0
    %1529 = vmatprep.subr.mxu0 0.0
    %1530 = vmatpush1.msra.mxu0 0.0
    %1531 = vmatprep.subr.mxu0 0.0
    %1532 = vmatpush1.msra.mxu0 0.0
    %1533 = vmatprep.subr.mxu0 0.0
    %1534 = vmatpush1.msra.mxu0 0.0
    %1535 = vmatprep.subr.mxu0 0.0
    %1536 = vmatpush1.msra.mxu0 0.0
    %1537 = vmatprep.subr.mxu0 0.0
    %1538 = vmatpush1.msra.mxu0 0.0
    %1539 = vmatprep.subr.mxu0 0.0
    %1540 = vmatpush1.msra.mxu0 0.0
    %1541 = vmatprep.subr.mxu0 0.0
    %1542 = vmatpush1.msra.mxu0 0.0
    %1543 = vmatprep.subr.mxu0 0.0
    %1544 = vmatpush1.msra.mxu0 0.0
    %1545 = vmatprep.subr.mxu0 0.0
    %1546 = vmatpush1.msra.mxu0 0.0
    %1547 = vmatprep.subr.mxu0 0.0
    %1548 = vmatpush1.msra.mxu0 0.0
    %1549 = vmatprep.subr.mxu0 0.0
    %1550 = vmatpush1.msra.mxu0 0.0
    %1551 = vmatprep.subr.mxu0 0.0
    %1552 = vmatpush1.msra.mxu0 0.0
    %1553 = vmatprep.subr.mxu0 0.0
    %1554 = vmatpush1.msra.mxu0 0.0
    %1555 = vmatprep.subr.mxu0 0.0
    %1556 = vmatpush1.msra.mxu0 0.0
    %1557 = vmatprep.subr.mxu0 0.0
    %1558 = vmatpush1.msra.mxu0 0.0
    %1559 = vmatprep.subr.mxu0 0.0
    %1560 = vmatpush1.msra.mxu0 0.0
    %1561 = vmatprep.subr.mxu0 0.0
    %1562 = vmatpush1.msra.mxu0 0.0
    %1563 = vmatprep.subr.mxu0 0.0
    %1564 = vmatpush1.msra.mxu0 0.0
    %1565 = vmatprep.mubr.f32.mxu0 0.0
    %1566 = vmatmul.mubr.f32.gmra.mrb[0].mxu0 %v1499
    %v1567 = vpop.f32.mrb[0].mxu0
    %v1568 = vadd.f32 0.0, %v1567
    %v1569 = vpop.f32.mrb[0].mxu0
    %1570 = vdwg.mxu0
    %v1571 = vadd.f32 %v1495, %v1568
    %v1572 = vtanh.pop %v1571
    %1573 = vmatprep.subr.mxu0 0.0
    %1574 = vmatpush1.msra.mxu0 %v131
    %1575 = vmatprep.subr.mxu0 0.0
    %1576 = vmatpush1.msra.mxu0 %v535
    %1577 = vmatprep.subr.mxu0 0.0
    %1578 = vmatpush1.msra.mxu0 0.0
    %1579 = vmatprep.subr.mxu0 0.0
    %1580 = vmatpush1.msra.mxu0 0.0
    %1581 = vmatprep.subr.mxu0 0.0
    %1582 = vmatpush1.msra.mxu0 0.0
    %1583 = vmatprep.subr.mxu0 0.0
    %1584 = vmatpush1.msra.mxu0 0.0
    %1585 = vmatprep.subr.mxu0 0.0
    %1586 = vmatpush1.msra.mxu0 0.0
    %1587 = vmatprep.subr.mxu0 0.0
    %1588 = vmatpush1.msra.mxu0 0.0
    %1589 = vmatprep.subr.mxu0 0.0
    %1590 = vmatpush1.msra.mxu0 0.0
    %1591 = vmatprep.subr.mxu0 0.0
    %1592 = vmatpush1.msra.mxu0 0.0
    %1593 = vmatprep.subr.mxu0 0.0
    %1594 = vmatpush1.msra.mxu0 0.0
    %1595 = vmatprep.subr.mxu0 0.0
    %1596 = vmatpush1.msra.mxu0 0.0
    %1597 = vmatprep.subr.mxu0 0.0
    %1598 = vmatpush1.msra.mxu0 0.0
    %1599 = vmatprep.subr.mxu0 0.0
    %1600 = vmatpush1.msra.mxu0 0.0
    %1601 = vmatprep.subr.mxu0 0.0
    %1602 = vmatpush1.msra.mxu0 0.0
    %1603 = vmatprep.subr.mxu0 0.0
    %1604 = vmatpush1.msra.mxu0 0.0
    %1605 = vmatprep.subr.mxu0 0.0
    %1606 = vmatpush1.msra.mxu0 0.0
    %1607 = vmatprep.subr.mxu0 0.0
    %1608 = vmatpush1.msra.mxu0 0.0
    %1609 = vmatprep.subr.mxu0 0.0
    %1610 = vmatpush1.msra.mxu0 0.0
    %1611 = vmatprep.subr.mxu0 0.0
    %1612 = vmatpush1.msra.mxu0 0.0
    %1613 = vmatprep.subr.mxu0 0.0
    %1614 = vmatpush1.msra.mxu0 0.0
    %1615 = vmatprep.subr.mxu0 0.0
    %1616 = vmatpush1.msra.mxu0 0.0
    %1617 = vmatprep.subr.mxu0 0.0
    %1618 = vmatpush1.msra.mxu0 0.0
    %1619 = vmatprep.subr.mxu0 0.0
    %1620 = vmatpush1.msra.mxu0 0.0
    %1621 = vmatprep.subr.mxu0 0.0
    %1622 = vmatpush1.msra.mxu0 0.0
    %1623 = vmatprep.subr.mxu0 0.0
    %1624 = vmatpush1.msra.mxu0 0.0
    %1625 = vmatprep.subr.mxu0 0.0
    %1626 = vmatpush1.msra.mxu0 0.0
    %1627 = vmatprep.subr.mxu0 0.0
    %1628 = vmatpush1.msra.mxu0 0.0
    %1629 = vmatprep.subr.mxu0 0.0
    %1630 = vmatpush1.msra.mxu0 0.0
    %1631 = vmatprep.subr.mxu0 0.0
    %1632 = vmatpush1.msra.mxu0 0.0
    %1633 = vmatprep.subr.mxu0 0.0
    %1634 = vmatpush1.msra.mxu0 0.0
    %1635 = vmatprep.subr.mxu0 0.0
    %1636 = vmatpush1.msra.mxu0 0.0
    %1637 = vmatprep.mubr.f32.mxu0 0.0
    %1638 = vmatmul.mubr.f32.gmra.mrb[0].mxu0 %v1499
    %v1639 = vpop.f32.mrb[0].mxu0
    %v1640 = vadd.f32 %v532, %v1639
    %v1641 = vpop.f32.mrb[0].mxu0
    %1642 = vdwg.mxu0
    %v1644 = vsel %vm138, %v1348, 0
    %1646 = vmatprep.subr.mxu0 0.0
    %1647 = vmatpush1.msra.mxu0 %v126
    %1648 = vmatprep.subr.mxu0 0.0
    %1649 = vmatpush1.msra.mxu0 %v908
    %1650 = vmatprep.subr.mxu0 0.0
    %1651 = vmatpush1.msra.mxu0 0.0
    %1652 = vmatprep.subr.mxu0 0.0
    %1653 = vmatpush1.msra.mxu0 0.0
    %1654 = vmatprep.subr.mxu0 0.0
    %1655 = vmatpush1.msra.mxu0 0.0
    %1656 = vmatprep.subr.mxu0 0.0
    %1657 = vmatpush1.msra.mxu0 0.0
    %1658 = vmatprep.subr.mxu0 0.0
    %1659 = vmatpush1.msra.mxu0 0.0
    %1660 = vmatprep.subr.mxu0 0.0
    %1661 = vmatpush1.msra.mxu0 0.0
    %1662 = vmatprep.subr.mxu0 0.0
    %1663 = vmatpush1.msra.mxu0 0.0
    %1664 = vmatprep.subr.mxu0 0.0
    %1665 = vmatpush1.msra.mxu0 0.0
    %1666 = vmatprep.subr.mxu0 0.0
    %1667 = vmatpush1.msra.mxu0 0.0
    %1668 = vmatprep.subr.mxu0 0.0
    %1669 = vmatpush1.msra.mxu0 0.0
    %1670 = vmatprep.subr.mxu0 0.0
    %1671 = vmatpush1.msra.mxu0 0.0
    %1672 = vmatprep.subr.mxu0 0.0
    %1673 = vmatpush1.msra.mxu0 0.0
    %1674 = vmatprep.subr.mxu0 0.0
    %1675 = vmatpush1.msra.mxu0 0.0
    %1676 = vmatprep.subr.mxu0 0.0
    %1677 = vmatpush1.msra.mxu0 0.0
    %1678 = vmatprep.subr.mxu0 0.0
    %1679 = vmatpush1.msra.mxu0 0.0
    %1680 = vmatprep.subr.mxu0 0.0
    %1681 = vmatpush1.msra.mxu0 0.0
    %1682 = vmatprep.subr.mxu0 0.0
    %1683 = vmatpush1.msra.mxu0 0.0
    %1684 = vmatprep.subr.mxu0 0.0
    %1685 = vmatpush1.msra.mxu0 0.0
    %1686 = vmatprep.subr.mxu0 0.0
    %1687 = vmatpush1.msra.mxu0 0.0
    %1688 = vmatprep.subr.mxu0 0.0
    %1689 = vmatpush1.msra.mxu0 0.0
    %1690 = vmatprep.subr.mxu0 0.0
    %1691 = vmatpush1.msra.mxu0 0.0
    %1692 = vmatprep.subr.mxu0 0.0
    %1693 = vmatpush1.msra.mxu0 0.0
    %1694 = vmatprep.subr.mxu0 0.0
    %1695 = vmatpush1.msra.mxu0 0.0
    %1696 = vmatprep.subr.mxu0 0.0
    %1697 = vmatpush1.msra.mxu0 0.0
    %1698 = vmatprep.subr.mxu0 0.0
    %1699 = vmatpush1.msra.mxu0 0.0
    %1700 = vmatprep.subr.mxu0 0.0
    %1701 = vmatpush1.msra.mxu0 0.0
    %1702 = vmatprep.subr.mxu0 0.0
    %1703 = vmatpush1.msra.mxu0 0.0
    %1704 = vmatprep.subr.mxu0 0.0
    %1705 = vmatpush1.msra.mxu0 0.0
    %1706 = vmatprep.subr.mxu0 0.0
    %1707 = vmatpush1.msra.mxu0 0.0
    %1708 = vmatprep.subr.mxu0 0.0
    %1709 = vmatpush1.msra.mxu0 0.0
    %1710 = vmatprep.mubr.f32.mxu0 0.0
    %1711 = vmatmul.mubr.f32.gmra.mrb[0].mxu0 %v1644
    %v1712 = vpop.f32.mrb[0].mxu0
    %v1713 = vadd.f32 0.0, %v1712
    %v1714 = vpop.f32.mrb[0].mxu0
    %1715 = vdwg.mxu0
    %v1716 = vadd.f32 %v1640, %v1713
    %v1717 = vtanh.pop %v1716
    %1718 = vst.msk [vmem:[#allocation2 + $0x6] sm:$0x3] %vm608, %v1717
    %v1720 = vrot.slane %v1427, 2
    %v1721 = vsel %vm138, %v1720, 0
    %1723 = vmatprep.subr.mxu0 0.0
    %1724 = vmatpush1.msra.mxu0 %v120
    %1725 = vmatprep.subr.mxu0 0.0
    %1726 = vmatpush1.msra.mxu0 %v144
    %1727 = vmatprep.subr.mxu0 0.0
    %1728 = vmatpush1.msra.mxu0 0.0
    %1729 = vmatprep.subr.mxu0 0.0
    %1730 = vmatpush1.msra.mxu0 0.0
    %1731 = vmatprep.subr.mxu0 0.0
    %1732 = vmatpush1.msra.mxu0 0.0
    %1733 = vmatprep.subr.mxu0 0.0
    %1734 = vmatpush1.msra.mxu0 0.0
    %1735 = vmatprep.subr.mxu0 0.0
    %1736 = vmatpush1.msra.mxu0 0.0
    %1737 = vmatprep.subr.mxu0 0.0
    %1738 = vmatpush1.msra.mxu0 0.0
    %1739 = vmatprep.subr.mxu0 0.0
    %1740 = vmatpush1.msra.mxu0 0.0
    %1741 = vmatprep.subr.mxu0 0.0
    %1742 = vmatpush1.msra.mxu0 0.0
    %1743 = vmatprep.subr.mxu0 0.0
    %1744 = vmatpush1.msra.mxu0 0.0
    %1745 = vmatprep.subr.mxu0 0.0
    %1746 = vmatpush1.msra.mxu0 0.0
    %1747 = vmatprep.subr.mxu0 0.0
    %1748 = vmatpush1.msra.mxu0 0.0
    %1749 = vmatprep.subr.mxu0 0.0
    %1750 = vmatpush1.msra.mxu0 0.0
    %1751 = vmatprep.subr.mxu0 0.0
    %1752 = vmatpush1.msra.mxu0 0.0
    %1753 = vmatprep.subr.mxu0 0.0
    %1754 = vmatpush1.msra.mxu0 0.0
    %1755 = vmatprep.subr.mxu0 0.0
    %1756 = vmatpush1.msra.mxu0 0.0
    %1757 = vmatprep.subr.mxu0 0.0
    %1758 = vmatpush1.msra.mxu0 0.0
    %1759 = vmatprep.subr.mxu0 0.0
    %1760 = vmatpush1.msra.mxu0 0.0
    %1761 = vmatprep.subr.mxu0 0.0
    %1762 = vmatpush1.msra.mxu0 0.0
    %1763 = vmatprep.subr.mxu0 0.0
    %1764 = vmatpush1.msra.mxu0 0.0
    %1765 = vmatprep.subr.mxu0 0.0
    %1766 = vmatpush1.msra.mxu0 0.0
    %1767 = vmatprep.subr.mxu0 0.0
    %1768 = vmatpush1.msra.mxu0 0.0
    %1769 = vmatprep.subr.mxu0 0.0
    %1770 = vmatpush1.msra.mxu0 0.0
    %1771 = vmatprep.subr.mxu0 0.0
    %1772 = vmatpush1.msra.mxu0 0.0
    %1773 = vmatprep.subr.mxu0 0.0
    %1774 = vmatpush1.msra.mxu0 0.0
    %1775 = vmatprep.subr.mxu0 0.0
    %1776 = vmatpush1.msra.mxu0 0.0
    %1777 = vmatprep.subr.mxu0 0.0
    %1778 = vmatpush1.msra.mxu0 0.0
    %1779 = vmatprep.subr.mxu0 0.0
    %1780 = vmatpush1.msra.mxu0 0.0
    %1781 = vmatprep.subr.mxu0 0.0
    %1782 = vmatpush1.msra.mxu0 0.0
    %1783 = vmatprep.subr.mxu0 0.0
    %1784 = vmatpush1.msra.mxu0 0.0
    %1785 = vmatprep.subr.mxu0 0.0
    %1786 = vmatpush1.msra.mxu0 0.0
    %1787 = vmatprep.mubr.f32.mxu0 0.0
    %1788 = vmatmul.mubr.f32.gmra.mrb[0].mxu0 %v1721
    %v1789 = vpop.f32.mrb[0].mxu0
    %v1790 = vadd.f32 0.0, %v1789
    %v1791 = vpop.f32.mrb[0].mxu0
    %1792 = vdwg.mxu0
    %v1794 = vrot.slane %v1790, 4
    %v1796 = vadd.f32 %v117, %v1794
    %v1797 = vtanh.pop %v1796
    %1798 = vmatprep.subr.mxu0 0.0
    %1799 = vmatpush1.msra.mxu0 %v128
    %1800 = vmatprep.subr.mxu0 0.0
    %1801 = vmatpush1.msra.mxu0 %v228
    %1802 = vmatprep.subr.mxu0 0.0
    %1803 = vmatpush1.msra.mxu0 0.0
    %1804 = vmatprep.subr.mxu0 0.0
    %1805 = vmatpush1.msra.mxu0 0.0
    %1806 = vmatprep.subr.mxu0 0.0
    %1807 = vmatpush1.msra.mxu0 0.0
    %1808 = vmatprep.subr.mxu0 0.0
    %1809 = vmatpush1.msra.mxu0 0.0
    %1810 = vmatprep.subr.mxu0 0.0
    %1811 = vmatpush1.msra.mxu0 0.0
    %1812 = vmatprep.subr.mxu0 0.0
    %1813 = vmatpush1.msra.mxu0 0.0
    %1814 = vmatprep.subr.mxu0 0.0
    %1815 = vmatpush1.msra.mxu0 0.0
    %1816 = vmatprep.subr.mxu0 0.0
    %1817 = vmatpush1.msra.mxu0 0.0
    %1818 = vmatprep.subr.mxu0 0.0
    %1819 = vmatpush1.msra.mxu0 0.0
    %1820 = vmatprep.subr.mxu0 0.0
    %1821 = vmatpush1.msra.mxu0 0.0
    %1822 = vmatprep.subr.mxu0 0.0
    %1823 = vmatpush1.msra.mxu0 0.0
    %1824 = vmatprep.subr.mxu0 0.0
    %1825 = vmatpush1.msra.mxu0 0.0
    %1826 = vmatprep.subr.mxu0 0.0
    %1827 = vmatpush1.msra.mxu0 0.0
    %1828 = vmatprep.subr.mxu0 0.0
    %1829 = vmatpush1.msra.mxu0 0.0
    %1830 = vmatprep.subr.mxu0 0.0
    %1831 = vmatpush1.msra.mxu0 0.0
    %1832 = vmatprep.subr.mxu0 0.0
    %1833 = vmatpush1.msra.mxu0 0.0
    %1834 = vmatprep.subr.mxu0 0.0
    %1835 = vmatpush1.msra.mxu0 0.0
    %1836 = vmatprep.subr.mxu0 0.0
    %1837 = vmatpush1.msra.mxu0 0.0
    %1838 = vmatprep.subr.mxu0 0.0
    %1839 = vmatpush1.msra.mxu0 0.0
    %1840 = vmatprep.subr.mxu0 0.0
    %1841 = vmatpush1.msra.mxu0 0.0
    %1842 = vmatprep.subr.mxu0 0.0
    %1843 = vmatpush1.msra.mxu0 0.0
    %1844 = vmatprep.subr.mxu0 0.0
    %1845 = vmatpush1.msra.mxu0 0.0
    %1846 = vmatprep.subr.mxu0 0.0
    %1847 = vmatpush1.msra.mxu0 0.0
    %1848 = vmatprep.subr.mxu0 0.0
    %1849 = vmatpush1.msra.mxu0 0.0
    %1850 = vmatprep.subr.mxu0 0.0
    %1851 = vmatpush1.msra.mxu0 0.0
    %1852 = vmatprep.subr.mxu0 0.0
    %1853 = vmatpush1.msra.mxu0 0.0
    %1854 = vmatprep.subr.mxu0 0.0
    %1855 = vmatpush1.msra.mxu0 0.0
    %1856 = vmatprep.subr.mxu0 0.0
    %1857 = vmatpush1.msra.mxu0 0.0
    %1858 = vmatprep.subr.mxu0 0.0
    %1859 = vmatpush1.msra.mxu0 0.0
    %1860 = vmatprep.subr.mxu0 0.0
    %1861 = vmatpush1.msra.mxu0 0.0
    %1862 = vmatprep.mubr.f32.mxu0 0.0
    %1863 = vmatmul.mubr.f32.gmra.mrb[0].mxu0 %v1721
    %v1864 = vpop.f32.mrb[0].mxu0
    %v1865 = vadd.f32 %v225, %v1864
    %v1866 = vpop.f32.mrb[0].mxu0
    %1867 = vdwg.mxu0
    %v1869 = vsel %vm138, %v1572, 0
    %1871 = vmatprep.subr.mxu0 0.0
    %1872 = vmatpush1.msra.mxu0 %v123
    %1873 = vmatprep.subr.mxu0 0.0
    %1874 = vmatpush1.msra.mxu0 %v454
    %1875 = vmatprep.subr.mxu0 0.0
    %1876 = vmatpush1.msra.mxu0 0.0
    %1877 = vmatprep.subr.mxu0 0.0
    %1878 = vmatpush1.msra.mxu0 0.0
    %1879 = vmatprep.subr.mxu0 0.0
    %1880 = vmatpush1.msra.mxu0 0.0
    %1881 = vmatprep.subr.mxu0 0.0
    %1882 = vmatpush1.msra.mxu0 0.0
    %1883 = vmatprep.subr.mxu0 0.0
    %1884 = vmatpush1.msra.mxu0 0.0
    %1885 = vmatprep.subr.mxu0 0.0
    %1886 = vmatpush1.msra.mxu0 0.0
    %1887 = vmatprep.subr.mxu0 0.0
    %1888 = vmatpush1.msra.mxu0 0.0
    %1889 = vmatprep.subr.mxu0 0.0
    %1890 = vmatpush1.msra.mxu0 0.0
    %1891 = vmatprep.subr.mxu0 0.0
    %1892 = vmatpush1.msra.mxu0 0.0
    %1893 = vmatprep.subr.mxu0 0.0
    %1894 = vmatpush1.msra.mxu0 0.0
    %1895 = vmatprep.subr.mxu0 0.0
    %1896 = vmatpush1.msra.mxu0 0.0
    %1897 = vmatprep.subr.mxu0 0.0
    %1898 = vmatpush1.msra.mxu0 0.0
    %1899 = vmatprep.subr.mxu0 0.0
    %1900 = vmatpush1.msra.mxu0 0.0
    %1901 = vmatprep.subr.mxu0 0.0
    %1902 = vmatpush1.msra.mxu0 0.0
    %1903 = vmatprep.subr.mxu0 0.0
    %1904 = vmatpush1.msra.mxu0 0.0
    %1905 = vmatprep.subr.mxu0 0.0
    %1906 = vmatpush1.msra.mxu0 0.0
    %1907 = vmatprep.subr.mxu0 0.0
    %1908 = vmatpush1.msra.mxu0 0.0
    %1909 = vmatprep.subr.mxu0 0.0
    %1910 = vmatpush1.msra.mxu0 0.0
    %1911 = vmatprep.subr.mxu0 0.0
    %1912 = vmatpush1.msra.mxu0 0.0
    %1913 = vmatprep.subr.mxu0 0.0
    %1914 = vmatpush1.msra.mxu0 0.0
    %1915 = vmatprep.subr.mxu0 0.0
    %1916 = vmatpush1.msra.mxu0 0.0
    %1917 = vmatprep.subr.mxu0 0.0
    %1918 = vmatpush1.msra.mxu0 0.0
    %1919 = vmatprep.subr.mxu0 0.0
    %1920 = vmatpush1.msra.mxu0 0.0
    %1921 = vmatprep.subr.mxu0 0.0
    %1922 = vmatpush1.msra.mxu0 0.0
    %1923 = vmatprep.subr.mxu0 0.0
    %1924 = vmatpush1.msra.mxu0 0.0
    %1925 = vmatprep.subr.mxu0 0.0
    %1926 = vmatpush1.msra.mxu0 0.0
    %1927 = vmatprep.subr.mxu0 0.0
    %1928 = vmatpush1.msra.mxu0 0.0
    %1929 = vmatprep.subr.mxu0 0.0
    %1930 = vmatpush1.msra.mxu0 0.0
    %1931 = vmatprep.subr.mxu0 0.0
    %1932 = vmatpush1.msra.mxu0 0.0
    %1933 = vmatprep.subr.mxu0 0.0
    %1934 = vmatpush1.msra.mxu0 0.0
    %1935 = vmatprep.mubr.f32.mxu0 0.0
    %1936 = vmatmul.mubr.f32.gmra.mrb[0].mxu0 %v1869
    %v1937 = vpop.f32.mrb[0].mxu0
    %v1938 = vadd.f32 0.0, %v1937
    %v1939 = vpop.f32.mrb[0].mxu0
    %1940 = vdwg.mxu0
    %v1941 = vadd.f32 %v1865, %v1938
    %v1942 = vtanh.pop %v1941
    %1943 = vmatprep.subr.mxu0 0.0
    %1944 = vmatpush1.msra.mxu0 %v131
    %1945 = vmatprep.subr.mxu0 0.0
    %1946 = vmatpush1.msra.mxu0 %v535
    %1947 = vmatprep.subr.mxu0 0.0
    %1948 = vmatpush1.msra.mxu0 0.0
    %1949 = vmatprep.subr.mxu0 0.0
    %1950 = vmatpush1.msra.mxu0 0.0
    %1951 = vmatprep.subr.mxu0 0.0
    %1952 = vmatpush1.msra.mxu0 0.0
    %1953 = vmatprep.subr.mxu0 0.0
    %1954 = vmatpush1.msra.mxu0 0.0
    %1955 = vmatprep.subr.mxu0 0.0
    %1956 = vmatpush1.msra.mxu0 0.0
    %1957 = vmatprep.subr.mxu0 0.0
    %1958 = vmatpush1.msra.mxu0 0.0
    %1959 = vmatprep.subr.mxu0 0.0
    %1960 = vmatpush1.msra.mxu0 0.0
    %1961 = vmatprep.subr.mxu0 0.0
    %1962 = vmatpush1.msra.mxu0 0.0
    %1963 = vmatprep.subr.mxu0 0.0
    %1964 = vmatpush1.msra.mxu0 0.0
    %1965 = vmatprep.subr.mxu0 0.0
    %1966 = vmatpush1.msra.mxu0 0.0
    %1967 = vmatprep.subr.mxu0 0.0
    %1968 = vmatpush1.msra.mxu0 0.0
    %1969 = vmatprep.subr.mxu0 0.0
    %1970 = vmatpush1.msra.mxu0 0.0
    %1971 = vmatprep.subr.mxu0 0.0
    %1972 = vmatpush1.msra.mxu0 0.0
    %1973 = vmatprep.subr.mxu0 0.0
    %1974 = vmatpush1.msra.mxu0 0.0
    %1975 = vmatprep.subr.mxu0 0.0
    %1976 = vmatpush1.msra.mxu0 0.0
    %1977 = vmatprep.subr.mxu0 0.0
    %1978 = vmatpush1.msra.mxu0 0.0
    %1979 = vmatprep.subr.mxu0 0.0
    %1980 = vmatpush1.msra.mxu0 0.0
    %1981 = vmatprep.subr.mxu0 0.0
    %1982 = vmatpush1.msra.mxu0 0.0
    %1983 = vmatprep.subr.mxu0 0.0
    %1984 = vmatpush1.msra.mxu0 0.0
    %1985 = vmatprep.subr.mxu0 0.0
    %1986 = vmatpush1.msra.mxu0 0.0
    %1987 = vmatprep.subr.mxu0 0.0
    %1988 = vmatpush1.msra.mxu0 0.0
    %1989 = vmatprep.subr.mxu0 0.0
    %1990 = vmatpush1.msra.mxu0 0.0
    %1991 = vmatprep.subr.mxu0 0.0
    %1992 = vmatpush1.msra.mxu0 0.0
    %1993 = vmatprep.subr.mxu0 0.0
    %1994 = vmatpush1.msra.mxu0 0.0
    %1995 = vmatprep.subr.mxu0 0.0
    %1996 = vmatpush1.msra.mxu0 0.0
    %1997 = vmatprep.subr.mxu0 0.0
    %1998 = vmatpush1.msra.mxu0 0.0
    %1999 = vmatprep.subr.mxu0 0.0
    %2000 = vmatpush1.msra.mxu0 0.0
    %2001 = vmatprep.subr.mxu0 0.0
    %2002 = vmatpush1.msra.mxu0 0.0
    %2003 = vmatprep.subr.mxu0 0.0
    %2004 = vmatpush1.msra.mxu0 0.0
    %2005 = vmatprep.subr.mxu0 0.0
    %2006 = vmatpush1.msra.mxu0 0.0
    %2007 = vmatprep.mubr.f32.mxu0 0.0
    %2008 = vmatmul.mubr.f32.gmra.mrb[0].mxu0 %v1869
    %v2009 = vpop.f32.mrb[0].mxu0
    %v2010 = vadd.f32 %v532, %v2009
    %v2011 = vpop.f32.mrb[0].mxu0
    %2012 = vdwg.mxu0
    %v2014 = vsel %vm138, %v1717, 0
    %2016 = vmatprep.subr.mxu0 0.0
    %2017 = vmatpush1.msra.mxu0 %v126
    %2018 = vmatprep.subr.mxu0 0.0
    %2019 = vmatpush1.msra.mxu0 %v908
    %2020 = vmatprep.subr.mxu0 0.0
    %2021 = vmatpush1.msra.mxu0 0.0
    %2022 = vmatprep.subr.mxu0 0.0
    %2023 = vmatpush1.msra.mxu0 0.0
    %2024 = vmatprep.subr.mxu0 0.0
    %2025 = vmatpush1.msra.mxu0 0.0
    %2026 = vmatprep.subr.mxu0 0.0
    %2027 = vmatpush1.msra.mxu0 0.0
    %2028 = vmatprep.subr.mxu0 0.0
    %2029 = vmatpush1.msra.mxu0 0.0
    %2030 = vmatprep.subr.mxu0 0.0
    %2031 = vmatpush1.msra.mxu0 0.0
    %2032 = vmatprep.subr.mxu0 0.0
    %2033 = vmatpush1.msra.mxu0 0.0
    %2034 = vmatprep.subr.mxu0 0.0
    %2035 = vmatpush1.msra.mxu0 0.0
    %2036 = vmatprep.subr.mxu0 0.0
    %2037 = vmatpush1.msra.mxu0 0.0
    %2038 = vmatprep.subr.mxu0 0.0
    %2039 = vmatpush1.msra.mxu0 0.0
    %2040 = vmatprep.subr.mxu0 0.0
    %2041 = vmatpush1.msra.mxu0 0.0
    %2042 = vmatprep.subr.mxu0 0.0
    %2043 = vmatpush1.msra.mxu0 0.0
    %2044 = vmatprep.subr.mxu0 0.0
    %2045 = vmatpush1.msra.mxu0 0.0
    %2046 = vmatprep.subr.mxu0 0.0
    %2047 = vmatpush1.msra.mxu0 0.0
    %2048 = vmatprep.subr.mxu0 0.0
    %2049 = vmatpush1.msra.mxu0 0.0
    %2050 = vmatprep.subr.mxu0 0.0
    %2051 = vmatpush1.msra.mxu0 0.0
    %2052 = vmatprep.subr.mxu0 0.0
    %2053 = vmatpush1.msra.mxu0 0.0
    %2054 = vmatprep.subr.mxu0 0.0
    %2055 = vmatpush1.msra.mxu0 0.0
    %2056 = vmatprep.subr.mxu0 0.0
    %2057 = vmatpush1.msra.mxu0 0.0
    %2058 = vmatprep.subr.mxu0 0.0
    %2059 = vmatpush1.msra.mxu0 0.0
    %2060 = vmatprep.subr.mxu0 0.0
    %2061 = vmatpush1.msra.mxu0 0.0
    %2062 = vmatprep.subr.mxu0 0.0
    %2063 = vmatpush1.msra.mxu0 0.0
    %2064 = vmatprep.subr.mxu0 0.0
    %2065 = vmatpush1.msra.mxu0 0.0
    %2066 = vmatprep.subr.mxu0 0.0
    %2067 = vmatpush1.msra.mxu0 0.0
    %2068 = vmatprep.subr.mxu0 0.0
    %2069 = vmatpush1.msra.mxu0 0.0
    %2070 = vmatprep.subr.mxu0 0.0
    %2071 = vmatpush1.msra.mxu0 0.0
    %2072 = vmatprep.subr.mxu0 0.0
    %2073 = vmatpush1.msra.mxu0 0.0
    %2074 = vmatprep.subr.mxu0 0.0
    %2075 = vmatpush1.msra.mxu0 0.0
    %2076 = vmatprep.subr.mxu0 0.0
    %2077 = vmatpush1.msra.mxu0 0.0
    %2078 = vmatprep.subr.mxu0 0.0
    %2079 = vmatpush1.msra.mxu0 0.0
    %2080 = vmatprep.mubr.f32.mxu0 0.0
    %2081 = vmatmul.mubr.f32.gmra.mrb[0].mxu0 %v2014
    %v2082 = vpop.f32.mrb[0].mxu0
    %v2083 = vadd.f32 0.0, %v2082
    %v2084 = vpop.f32.mrb[0].mxu0
    %2085 = vdwg.mxu0
    %v2086 = vadd.f32 %v2010, %v2083
    %v2087 = vtanh.pop %v2086
    %2088 = vst.msk [vmem:[#allocation2 + $0x8] sm:$0x3] %vm608, %v2087
    %v2090 = vrot.slane %v1797, 4
    %v2091 = vsel %vm138, %v2090, 0
    %2093 = vmatprep.subr.mxu0 0.0
    %2094 = vmatpush1.msra.mxu0 %v120
    %2095 = vmatprep.subr.mxu0 0.0
    %2096 = vmatpush1.msra.mxu0 %v144
    %2097 = vmatprep.subr.mxu0 0.0
    %2098 = vmatpush1.msra.mxu0 0.0
    %2099 = vmatprep.subr.mxu0 0.0
    %2100 = vmatpush1.msra.mxu0 0.0
    %2101 = vmatprep.subr.mxu0 0.0
    %2102 = vmatpush1.msra.mxu0 0.0
    %2103 = vmatprep.subr.mxu0 0.0
    %2104 = vmatpush1.msra.mxu0 0.0
    %2105 = vmatprep.subr.mxu0 0.0
    %2106 = vmatpush1.msra.mxu0 0.0
    %2107 = vmatprep.subr.mxu0 0.0
    %2108 = vmatpush1.msra.mxu0 0.0
    %2109 = vmatprep.subr.mxu0 0.0
    %2110 = vmatpush1.msra.mxu0 0.0
    %2111 = vmatprep.subr.mxu0 0.0
    %2112 = vmatpush1.msra.mxu0 0.0
    %2113 = vmatprep.subr.mxu0 0.0
    %2114 = vmatpush1.msra.mxu0 0.0
    %2115 = vmatprep.subr.mxu0 0.0
    %2116 = vmatpush1.msra.mxu0 0.0
    %2117 = vmatprep.subr.mxu0 0.0
    %2118 = vmatpush1.msra.mxu0 0.0
    %2119 = vmatprep.subr.mxu0 0.0
    %2120 = vmatpush1.msra.mxu0 0.0
    %2121 = vmatprep.subr.mxu0 0.0
    %2122 = vmatpush1.msra.mxu0 0.0
    %2123 = vmatprep.subr.mxu0 0.0
    %2124 = vmatpush1.msra.mxu0 0.0
    %2125 = vmatprep.subr.mxu0 0.0
    %2126 = vmatpush1.msra.mxu0 0.0
    %2127 = vmatprep.subr.mxu0 0.0
    %2128 = vmatpush1.msra.mxu0 0.0
    %2129 = vmatprep.subr.mxu0 0.0
    %2130 = vmatpush1.msra.mxu0 0.0
    %2131 = vmatprep.subr.mxu0 0.0
    %2132 = vmatpush1.msra.mxu0 0.0
    %2133 = vmatprep.subr.mxu0 0.0
    %2134 = vmatpush1.msra.mxu0 0.0
    %2135 = vmatprep.subr.mxu0 0.0
    %2136 = vmatpush1.msra.mxu0 0.0
    %2137 = vmatprep.subr.mxu0 0.0
    %2138 = vmatpush1.msra.mxu0 0.0
    %2139 = vmatprep.subr.mxu0 0.0
    %2140 = vmatpush1.msra.mxu0 0.0
    %2141 = vmatprep.subr.mxu0 0.0
    %2142 = vmatpush1.msra.mxu0 0.0
    %2143 = vmatprep.subr.mxu0 0.0
    %2144 = vmatpush1.msra.mxu0 0.0
    %2145 = vmatprep.subr.mxu0 0.0
    %2146 = vmatpush1.msra.mxu0 0.0
    %2147 = vmatprep.subr.mxu0 0.0
    %2148 = vmatpush1.msra.mxu0 0.0
    %2149 = vmatprep.subr.mxu0 0.0
    %2150 = vmatpush1.msra.mxu0 0.0
    %2151 = vmatprep.subr.mxu0 0.0
    %2152 = vmatpush1.msra.mxu0 0.0
    %2153 = vmatprep.subr.mxu0 0.0
    %2154 = vmatpush1.msra.mxu0 0.0
    %2155 = vmatprep.subr.mxu0 0.0
    %2156 = vmatpush1.msra.mxu0 0.0
    %2157 = vmatprep.mubr.f32.mxu0 0.0
    %2158 = vmatmul.mubr.f32.gmra.mrb[0].mxu0 %v2091
    %v2159 = vpop.f32.mrb[0].mxu0
    %v2160 = vadd.f32 0.0, %v2159
    %v2161 = vpop.f32.mrb[0].mxu0
    %2162 = vdwg.mxu0
    %v2164 = vrot.slane %v2160, 2
    %v2166 = vadd.f32 %v117, %v2164
    %v2167 = vtanh.pop %v2166
    %2168 = vmatprep.subr.mxu0 0.0
    %2169 = vmatpush1.msra.mxu0 %v128
    %2170 = vmatprep.subr.mxu0 0.0
    %2171 = vmatpush1.msra.mxu0 %v228
    %2172 = vmatprep.subr.mxu0 0.0
    %2173 = vmatpush1.msra.mxu0 0.0
    %2174 = vmatprep.subr.mxu0 0.0
    %2175 = vmatpush1.msra.mxu0 0.0
    %2176 = vmatprep.subr.mxu0 0.0
    %2177 = vmatpush1.msra.mxu0 0.0
    %2178 = vmatprep.subr.mxu0 0.0
    %2179 = vmatpush1.msra.mxu0 0.0
    %2180 = vmatprep.subr.mxu0 0.0
    %2181 = vmatpush1.msra.mxu0 0.0
    %2182 = vmatprep.subr.mxu0 0.0
    %2183 = vmatpush1.msra.mxu0 0.0
    %2184 = vmatprep.subr.mxu0 0.0
    %2185 = vmatpush1.msra.mxu0 0.0
    %2186 = vmatprep.subr.mxu0 0.0
    %2187 = vmatpush1.msra.mxu0 0.0
    %2188 = vmatprep.subr.mxu0 0.0
    %2189 = vmatpush1.msra.mxu0 0.0
    %2190 = vmatprep.subr.mxu0 0.0
    %2191 = vmatpush1.msra.mxu0 0.0
    %2192 = vmatprep.subr.mxu0 0.0
    %2193 = vmatpush1.msra.mxu0 0.0
    %2194 = vmatprep.subr.mxu0 0.0
    %2195 = vmatpush1.msra.mxu0 0.0
    %2196 = vmatprep.subr.mxu0 0.0
    %2197 = vmatpush1.msra.mxu0 0.0
    %2198 = vmatprep.subr.mxu0 0.0
    %2199 = vmatpush1.msra.mxu0 0.0
    %2200 = vmatprep.subr.mxu0 0.0
    %2201 = vmatpush1.msra.mxu0 0.0
    %2202 = vmatprep.subr.mxu0 0.0
    %2203 = vmatpush1.msra.mxu0 0.0
    %2204 = vmatprep.subr.mxu0 0.0
    %2205 = vmatpush1.msra.mxu0 0.0
    %2206 = vmatprep.subr.mxu0 0.0
    %2207 = vmatpush1.msra.mxu0 0.0
    %2208 = vmatprep.subr.mxu0 0.0
    %2209 = vmatpush1.msra.mxu0 0.0
    %2210 = vmatprep.subr.mxu0 0.0
    %2211 = vmatpush1.msra.mxu0 0.0
    %2212 = vmatprep.subr.mxu0 0.0
    %2213 = vmatpush1.msra.mxu0 0.0
    %2214 = vmatprep.subr.mxu0 0.0
    %2215 = vmatpush1.msra.mxu0 0.0
    %2216 = vmatprep.subr.mxu0 0.0
    %2217 = vmatpush1.msra.mxu0 0.0
    %2218 = vmatprep.subr.mxu0 0.0
    %2219 = vmatpush1.msra.mxu0 0.0
    %2220 = vmatprep.subr.mxu0 0.0
    %2221 = vmatpush1.msra.mxu0 0.0
    %2222 = vmatprep.subr.mxu0 0.0
    %2223 = vmatpush1.msra.mxu0 0.0
    %2224 = vmatprep.subr.mxu0 0.0
    %2225 = vmatpush1.msra.mxu0 0.0
    %2226 = vmatprep.subr.mxu0 0.0
    %2227 = vmatpush1.msra.mxu0 0.0
    %2228 = vmatprep.subr.mxu0 0.0
    %2229 = vmatpush1.msra.mxu0 0.0
    %2230 = vmatprep.subr.mxu0 0.0
    %2231 = vmatpush1.msra.mxu0 0.0
    %2232 = vmatprep.mubr.f32.mxu0 0.0
    %2233 = vmatmul.mubr.f32.gmra.mrb[0].mxu0 %v2091
    %v2234 = vpop.f32.mrb[0].mxu0
    %v2235 = vadd.f32 %v225, %v2234
    %v2236 = vpop.f32.mrb[0].mxu0
    %2237 = vdwg.mxu0
    %v2239 = vsel %vm138, %v1942, 0
    %2241 = vmatprep.subr.mxu0 0.0
    %2242 = vmatpush1.msra.mxu0 %v123
    %2243 = vmatprep.subr.mxu0 0.0
    %2244 = vmatpush1.msra.mxu0 %v454
    %2245 = vmatprep.subr.mxu0 0.0
    %2246 = vmatpush1.msra.mxu0 0.0
    %2247 = vmatprep.subr.mxu0 0.0
    %2248 = vmatpush1.msra.mxu0 0.0
    %2249 = vmatprep.subr.mxu0 0.0
    %2250 = vmatpush1.msra.mxu0 0.0
    %2251 = vmatprep.subr.mxu0 0.0
    %2252 = vmatpush1.msra.mxu0 0.0
    %2253 = vmatprep.subr.mxu0 0.0
    %2254 = vmatpush1.msra.mxu0 0.0
    %2255 = vmatprep.subr.mxu0 0.0
    %2256 = vmatpush1.msra.mxu0 0.0
    %2257 = vmatprep.subr.mxu0 0.0
    %2258 = vmatpush1.msra.mxu0 0.0
    %2259 = vmatprep.subr.mxu0 0.0
    %2260 = vmatpush1.msra.mxu0 0.0
    %2261 = vmatprep.subr.mxu0 0.0
    %2262 = vmatpush1.msra.mxu0 0.0
    %2263 = vmatprep.subr.mxu0 0.0
    %2264 = vmatpush1.msra.mxu0 0.0
    %2265 = vmatprep.subr.mxu0 0.0
    %2266 = vmatpush1.msra.mxu0 0.0
    %2267 = vmatprep.subr.mxu0 0.0
    %2268 = vmatpush1.msra.mxu0 0.0
    %2269 = vmatprep.subr.mxu0 0.0
    %2270 = vmatpush1.msra.mxu0 0.0
    %2271 = vmatprep.subr.mxu0 0.0
    %2272 = vmatpush1.msra.mxu0 0.0
    %2273 = vmatprep.subr.mxu0 0.0
    %2274 = vmatpush1.msra.mxu0 0.0
    %2275 = vmatprep.subr.mxu0 0.0
    %2276 = vmatpush1.msra.mxu0 0.0
    %2277 = vmatprep.subr.mxu0 0.0
    %2278 = vmatpush1.msra.mxu0 0.0
    %2279 = vmatprep.subr.mxu0 0.0
    %2280 = vmatpush1.msra.mxu0 0.0
    %2281 = vmatprep.subr.mxu0 0.0
    %2282 = vmatpush1.msra.mxu0 0.0
    %2283 = vmatprep.subr.mxu0 0.0
    %2284 = vmatpush1.msra.mxu0 0.0
    %2285 = vmatprep.subr.mxu0 0.0
    %2286 = vmatpush1.msra.mxu0 0.0
    %2287 = vmatprep.subr.mxu0 0.0
    %2288 = vmatpush1.msra.mxu0 0.0
    %2289 = vmatprep.subr.mxu0 0.0
    %2290 = vmatpush1.msra.mxu0 0.0
    %2291 = vmatprep.subr.mxu0 0.0
    %2292 = vmatpush1.msra.mxu0 0.0
    %2293 = vmatprep.subr.mxu0 0.0
    %2294 = vmatpush1.msra.mxu0 0.0
    %2295 = vmatprep.subr.mxu0 0.0
    %2296 = vmatpush1.msra.mxu0 0.0
    %2297 = vmatprep.subr.mxu0 0.0
    %2298 = vmatpush1.msra.mxu0 0.0
    %2299 = vmatprep.subr.mxu0 0.0
    %2300 = vmatpush1.msra.mxu0 0.0
    %2301 = vmatprep.subr.mxu0 0.0
    %2302 = vmatpush1.msra.mxu0 0.0
    %2303 = vmatprep.subr.mxu0 0.0
    %2304 = vmatpush1.msra.mxu0 0.0
    %2305 = vmatprep.mubr.f32.mxu0 0.0
    %2306 = vmatmul.mubr.f32.gmra.mrb[0].mxu0 %v2239
    %v2307 = vpop.f32.mrb[0].mxu0
    %v2308 = vadd.f32 0.0, %v2307
    %v2309 = vpop.f32.mrb[0].mxu0
    %2310 = vdwg.mxu0
    %v2311 = vadd.f32 %v2235, %v2308
    %v2312 = vtanh.pop %v2311
    %2313 = vmatprep.subr.mxu0 0.0
    %2314 = vmatpush1.msra.mxu0 %v131
    %2315 = vmatprep.subr.mxu0 0.0
    %2316 = vmatpush1.msra.mxu0 %v535
    %2317 = vmatprep.subr.mxu0 0.0
    %2318 = vmatpush1.msra.mxu0 0.0
    %2319 = vmatprep.subr.mxu0 0.0
    %2320 = vmatpush1.msra.mxu0 0.0
    %2321 = vmatprep.subr.mxu0 0.0
    %2322 = vmatpush1.msra.mxu0 0.0
    %2323 = vmatprep.subr.mxu0 0.0
    %2324 = vmatpush1.msra.mxu0 0.0
    %2325 = vmatprep.subr.mxu0 0.0
    %2326 = vmatpush1.msra.mxu0 0.0
    %2327 = vmatprep.subr.mxu0 0.0
    %2328 = vmatpush1.msra.mxu0 0.0
    %2329 = vmatprep.subr.mxu0 0.0
    %2330 = vmatpush1.msra.mxu0 0.0
    %2331 = vmatprep.subr.mxu0 0.0
    %2332 = vmatpush1.msra.mxu0 0.0
    %2333 = vmatprep.subr.mxu0 0.0
    %2334 = vmatpush1.msra.mxu0 0.0
    %2335 = vmatprep.subr.mxu0 0.0
    %2336 = vmatpush1.msra.mxu0 0.0
    %2337 = vmatprep.subr.mxu0 0.0
    %2338 = vmatpush1.msra.mxu0 0.0
    %2339 = vmatprep.subr.mxu0 0.0
    %2340 = vmatpush1.msra.mxu0 0.0
    %2341 = vmatprep.subr.mxu0 0.0
    %2342 = vmatpush1.msra.mxu0 0.0
    %2343 = vmatprep.subr.mxu0 0.0
    %2344 = vmatpush1.msra.mxu0 0.0
    %2345 = vmatprep.subr.mxu0 0.0
    %2346 = vmatpush1.msra.mxu0 0.0
    %2347 = vmatprep.subr.mxu0 0.0
    %2348 = vmatpush1.msra.mxu0 0.0
    %2349 = vmatprep.subr.mxu0 0.0
    %2350 = vmatpush1.msra.mxu0 0.0
    %2351 = vmatprep.subr.mxu0 0.0
    %2352 = vmatpush1.msra.mxu0 0.0
    %2353 = vmatprep.subr.mxu0 0.0
    %2354 = vmatpush1.msra.mxu0 0.0
    %2355 = vmatprep.subr.mxu0 0.0
    %2356 = vmatpush1.msra.mxu0 0.0
    %2357 = vmatprep.subr.mxu0 0.0
    %2358 = vmatpush1.msra.mxu0 0.0
    %2359 = vmatprep.subr.mxu0 0.0
    %2360 = vmatpush1.msra.mxu0 0.0
    %2361 = vmatprep.subr.mxu0 0.0
    %2362 = vmatpush1.msra.mxu0 0.0
    %2363 = vmatprep.subr.mxu0 0.0
    %2364 = vmatpush1.msra.mxu0 0.0
    %2365 = vmatprep.subr.mxu0 0.0
    %2366 = vmatpush1.msra.mxu0 0.0
    %2367 = vmatprep.subr.mxu0 0.0
    %2368 = vmatpush1.msra.mxu0 0.0
    %2369 = vmatprep.subr.mxu0 0.0
    %2370 = vmatpush1.msra.mxu0 0.0
    %2371 = vmatprep.subr.mxu0 0.0
    %2372 = vmatpush1.msra.mxu0 0.0
    %2373 = vmatprep.subr.mxu0 0.0
    %2374 = vmatpush1.msra.mxu0 0.0
    %2375 = vmatprep.subr.mxu0 0.0
    %2376 = vmatpush1.msra.mxu0 0.0
    %2377 = vmatprep.mubr.f32.mxu0 0.0
    %2378 = vmatmul.mubr.f32.gmra.mrb[0].mxu0 %v2239
    %v2379 = vpop.f32.mrb[0].mxu0
    %v2380 = vadd.f32 %v532, %v2379
    %v2381 = vpop.f32.mrb[0].mxu0
    %2382 = vdwg.mxu0
    %v2384 = vsel %vm138, %v2087, 0
    %2386 = vmatprep.subr.mxu0 0.0
    %2387 = vmatpush1.msra.mxu0 %v126
    %2388 = vmatprep.subr.mxu0 0.0
    %2389 = vmatpush1.msra.mxu0 %v908
    %2390 = vmatprep.subr.mxu0 0.0
    %2391 = vmatpush1.msra.mxu0 0.0
    %2392 = vmatprep.subr.mxu0 0.0
    %2393 = vmatpush1.msra.mxu0 0.0
    %2394 = vmatprep.subr.mxu0 0.0
    %2395 = vmatpush1.msra.mxu0 0.0
    %2396 = vmatprep.subr.mxu0 0.0
    %2397 = vmatpush1.msra.mxu0 0.0
    %2398 = vmatprep.subr.mxu0 0.0
    %2399 = vmatpush1.msra.mxu0 0.0
    %2400 = vmatprep.subr.mxu0 0.0
    %2401 = vmatpush1.msra.mxu0 0.0
    %2402 = vmatprep.subr.mxu0 0.0
    %2403 = vmatpush1.msra.mxu0 0.0
    %2404 = vmatprep.subr.mxu0 0.0
    %2405 = vmatpush1.msra.mxu0 0.0
    %2406 = vmatprep.subr.mxu0 0.0
    %2407 = vmatpush1.msra.mxu0 0.0
    %2408 = vmatprep.subr.mxu0 0.0
    %2409 = vmatpush1.msra.mxu0 0.0
    %2410 = vmatprep.subr.mxu0 0.0
    %2411 = vmatpush1.msra.mxu0 0.0
    %2412 = vmatprep.subr.mxu0 0.0
    %2413 = vmatpush1.msra.mxu0 0.0
    %2414 = vmatprep.subr.mxu0 0.0
    %2415 = vmatpush1.msra.mxu0 0.0
    %2416 = vmatprep.subr.mxu0 0.0
    %2417 = vmatpush1.msra.mxu0 0.0
    %2418 = vmatprep.subr.mxu0 0.0
    %2419 = vmatpush1.msra.mxu0 0.0
    %2420 = vmatprep.subr.mxu0 0.0
    %2421 = vmatpush1.msra.mxu0 0.0
    %2422 = vmatprep.subr.mxu0 0.0
    %2423 = vmatpush1.msra.mxu0 0.0
    %2424 = vmatprep.subr.mxu0 0.0
    %2425 = vmatpush1.msra.mxu0 0.0
    %2426 = vmatprep.subr.mxu0 0.0
    %2427 = vmatpush1.msra.mxu0 0.0
    %2428 = vmatprep.subr.mxu0 0.0
    %2429 = vmatpush1.msra.mxu0 0.0
    %2430 = vmatprep.subr.mxu0 0.0
    %2431 = vmatpush1.msra.mxu0 0.0
    %2432 = vmatprep.subr.mxu0 0.0
    %2433 = vmatpush1.msra.mxu0 0.0
    %2434 = vmatprep.subr.mxu0 0.0
    %2435 = vmatpush1.msra.mxu0 0.0
    %2436 = vmatprep.subr.mxu0 0.0
    %2437 = vmatpush1.msra.mxu0 0.0
    %2438 = vmatprep.subr.mxu0 0.0
    %2439 = vmatpush1.msra.mxu0 0.0
    %2440 = vmatprep.subr.mxu0 0.0
    %2441 = vmatpush1.msra.mxu0 0.0
    %2442 = vmatprep.subr.mxu0 0.0
    %2443 = vmatpush1.msra.mxu0 0.0
    %2444 = vmatprep.subr.mxu0 0.0
    %2445 = vmatpush1.msra.mxu0 0.0
    %2446 = vmatprep.subr.mxu0 0.0
    %2447 = vmatpush1.msra.mxu0 0.0
    %2448 = vmatprep.subr.mxu0 0.0
    %2449 = vmatpush1.msra.mxu0 0.0
    %2450 = vmatprep.mubr.f32.mxu0 0.0
    %2451 = vmatmul.mubr.f32.gmra.mrb[0].mxu0 %v2384
    %v2452 = vpop.f32.mrb[0].mxu0
    %v2453 = vadd.f32 0.0, %v2452
    %v2454 = vpop.f32.mrb[0].mxu0
    %2455 = vdwg.mxu0
    %v2456 = vadd.f32 %v2380, %v2453
    %v2457 = vtanh.pop %v2456
    %2458 = vst.msk [vmem:[#allocation2 + $0xa] sm:$0x3] %vm608, %v2457
    %v2460 = vrot.slane %v2167, 6
    %v2461 = vsel %vm138, %v2460, 0
    %2463 = vmatprep.subr.mxu0 0.0
    %2464 = vmatpush1.msra.mxu0 %v128
    %2465 = vmatprep.subr.mxu0 0.0
    %2466 = vmatpush1.msra.mxu0 %v228
    %2467 = vmatprep.subr.mxu0 0.0
    %2468 = vmatpush1.msra.mxu0 0.0
    %2469 = vmatprep.subr.mxu0 0.0
    %2470 = vmatpush1.msra.mxu0 0.0
    %2471 = vmatprep.subr.mxu0 0.0
    %2472 = vmatpush1.msra.mxu0 0.0
    %2473 = vmatprep.subr.mxu0 0.0
    %2474 = vmatpush1.msra.mxu0 0.0
    %2475 = vmatprep.subr.mxu0 0.0
    %2476 = vmatpush1.msra.mxu0 0.0
    %2477 = vmatprep.subr.mxu0 0.0
    %2478 = vmatpush1.msra.mxu0 0.0
    %2479 = vmatprep.subr.mxu0 0.0
    %2480 = vmatpush1.msra.mxu0 0.0
    %2481 = vmatprep.subr.mxu0 0.0
    %2482 = vmatpush1.msra.mxu0 0.0
    %2483 = vmatprep.subr.mxu0 0.0
    %2484 = vmatpush1.msra.mxu0 0.0
    %2485 = vmatprep.subr.mxu0 0.0
    %2486 = vmatpush1.msra.mxu0 0.0
    %2487 = vmatprep.subr.mxu0 0.0
    %2488 = vmatpush1.msra.mxu0 0.0
    %2489 = vmatprep.subr.mxu0 0.0
    %2490 = vmatpush1.msra.mxu0 0.0
    %2491 = vmatprep.subr.mxu0 0.0
    %2492 = vmatpush1.msra.mxu0 0.0
    %2493 = vmatprep.subr.mxu0 0.0
    %2494 = vmatpush1.msra.mxu0 0.0
    %2495 = vmatprep.subr.mxu0 0.0
    %2496 = vmatpush1.msra.mxu0 0.0
    %2497 = vmatprep.subr.mxu0 0.0
    %2498 = vmatpush1.msra.mxu0 0.0
    %2499 = vmatprep.subr.mxu0 0.0
    %2500 = vmatpush1.msra.mxu0 0.0
    %2501 = vmatprep.subr.mxu0 0.0
    %2502 = vmatpush1.msra.mxu0 0.0
    %2503 = vmatprep.subr.mxu0 0.0
    %2504 = vmatpush1.msra.mxu0 0.0
    %2505 = vmatprep.subr.mxu0 0.0
    %2506 = vmatpush1.msra.mxu0 0.0
    %2507 = vmatprep.subr.mxu0 0.0
    %2508 = vmatpush1.msra.mxu0 0.0
    %2509 = vmatprep.subr.mxu0 0.0
    %2510 = vmatpush1.msra.mxu0 0.0
    %2511 = vmatprep.subr.mxu0 0.0
    %2512 = vmatpush1.msra.mxu0 0.0
    %2513 = vmatprep.subr.mxu0 0.0
    %2514 = vmatpush1.msra.mxu0 0.0
    %2515 = vmatprep.subr.mxu0 0.0
    %2516 = vmatpush1.msra.mxu0 0.0
    %2517 = vmatprep.subr.mxu0 0.0
    %2518 = vmatpush1.msra.mxu0 0.0
    %2519 = vmatprep.subr.mxu0 0.0
    %2520 = vmatpush1.msra.mxu0 0.0
    %2521 = vmatprep.subr.mxu0 0.0
    %2522 = vmatpush1.msra.mxu0 0.0
    %2523 = vmatprep.subr.mxu0 0.0
    %2524 = vmatpush1.msra.mxu0 0.0
    %2525 = vmatprep.subr.mxu0 0.0
    %2526 = vmatpush1.msra.mxu0 0.0
    %2527 = vmatprep.mubr.f32.mxu0 0.0
    %2528 = vmatmul.mubr.f32.gmra.mrb[0].mxu0 %v2461
    %v2529 = vpop.f32.mrb[0].mxu0
    %v2530 = vadd.f32 %v225, %v2529
    %v2531 = vpop.f32.mrb[0].mxu0
    %2532 = vdwg.mxu0
    %v2534 = vsel %vm138, %v2312, 0
    %2536 = vmatprep.subr.mxu0 0.0
    %2537 = vmatpush1.msra.mxu0 %v123
    %2538 = vmatprep.subr.mxu0 0.0
    %2539 = vmatpush1.msra.mxu0 %v454
    %2540 = vmatprep.subr.mxu0 0.0
    %2541 = vmatpush1.msra.mxu0 0.0
    %2542 = vmatprep.subr.mxu0 0.0
    %2543 = vmatpush1.msra.mxu0 0.0
    %2544 = vmatprep.subr.mxu0 0.0
    %2545 = vmatpush1.msra.mxu0 0.0
    %2546 = vmatprep.subr.mxu0 0.0
    %2547 = vmatpush1.msra.mxu0 0.0
    %2548 = vmatprep.subr.mxu0 0.0
    %2549 = vmatpush1.msra.mxu0 0.0
    %2550 = vmatprep.subr.mxu0 0.0
    %2551 = vmatpush1.msra.mxu0 0.0
    %2552 = vmatprep.subr.mxu0 0.0
    %2553 = vmatpush1.msra.mxu0 0.0
    %2554 = vmatprep.subr.mxu0 0.0
    %2555 = vmatpush1.msra.mxu0 0.0
    %2556 = vmatprep.subr.mxu0 0.0
    %2557 = vmatpush1.msra.mxu0 0.0
    %2558 = vmatprep.subr.mxu0 0.0
    %2559 = vmatpush1.msra.mxu0 0.0
    %2560 = vmatprep.subr.mxu0 0.0
    %2561 = vmatpush1.msra.mxu0 0.0
    %2562 = vmatprep.subr.mxu0 0.0
    %2563 = vmatpush1.msra.mxu0 0.0
    %2564 = vmatprep.subr.mxu0 0.0
    %2565 = vmatpush1.msra.mxu0 0.0
    %2566 = vmatprep.subr.mxu0 0.0
    %2567 = vmatpush1.msra.mxu0 0.0
    %2568 = vmatprep.subr.mxu0 0.0
    %2569 = vmatpush1.msra.mxu0 0.0
    %2570 = vmatprep.subr.mxu0 0.0
    %2571 = vmatpush1.msra.mxu0 0.0
    %2572 = vmatprep.subr.mxu0 0.0
    %2573 = vmatpush1.msra.mxu0 0.0
    %2574 = vmatprep.subr.mxu0 0.0
    %2575 = vmatpush1.msra.mxu0 0.0
    %2576 = vmatprep.subr.mxu0 0.0
    %2577 = vmatpush1.msra.mxu0 0.0
    %2578 = vmatprep.subr.mxu0 0.0
    %2579 = vmatpush1.msra.mxu0 0.0
    %2580 = vmatprep.subr.mxu0 0.0
    %2581 = vmatpush1.msra.mxu0 0.0
    %2582 = vmatprep.subr.mxu0 0.0
    %2583 = vmatpush1.msra.mxu0 0.0
    %2584 = vmatprep.subr.mxu0 0.0
    %2585 = vmatpush1.msra.mxu0 0.0
    %2586 = vmatprep.subr.mxu0 0.0
    %2587 = vmatpush1.msra.mxu0 0.0
    %2588 = vmatprep.subr.mxu0 0.0
    %2589 = vmatpush1.msra.mxu0 0.0
    %2590 = vmatprep.subr.mxu0 0.0
    %2591 = vmatpush1.msra.mxu0 0.0
    %2592 = vmatprep.subr.mxu0 0.0
    %2593 = vmatpush1.msra.mxu0 0.0
    %2594 = vmatprep.subr.mxu0 0.0
    %2595 = vmatpush1.msra.mxu0 0.0
    %2596 = vmatprep.subr.mxu0 0.0
    %2597 = vmatpush1.msra.mxu0 0.0
    %2598 = vmatprep.subr.mxu0 0.0
    %2599 = vmatpush1.msra.mxu0 0.0
    %2600 = vmatprep.mubr.f32.mxu0 0.0
    %2601 = vmatmul.mubr.f32.gmra.mrb[0].mxu0 %v2534
    %v2602 = vpop.f32.mrb[0].mxu0
    %v2603 = vadd.f32 0.0, %v2602
    %v2604 = vpop.f32.mrb[0].mxu0
    %2605 = vdwg.mxu0
    %v2606 = vadd.f32 %v2530, %v2603
    %v2607 = vtanh.pop %v2606
    %2608 = vmatprep.subr.mxu0 0.0
    %2609 = vmatpush1.msra.mxu0 %v131
    %2610 = vmatprep.subr.mxu0 0.0
    %2611 = vmatpush1.msra.mxu0 %v535
    %2612 = vmatprep.subr.mxu0 0.0
    %2613 = vmatpush1.msra.mxu0 0.0
    %2614 = vmatprep.subr.mxu0 0.0
    %2615 = vmatpush1.msra.mxu0 0.0
    %2616 = vmatprep.subr.mxu0 0.0
    %2617 = vmatpush1.msra.mxu0 0.0
    %2618 = vmatprep.subr.mxu0 0.0
    %2619 = vmatpush1.msra.mxu0 0.0
    %2620 = vmatprep.subr.mxu0 0.0
    %2621 = vmatpush1.msra.mxu0 0.0
    %2622 = vmatprep.subr.mxu0 0.0
    %2623 = vmatpush1.msra.mxu0 0.0
    %2624 = vmatprep.subr.mxu0 0.0
    %2625 = vmatpush1.msra.mxu0 0.0
    %2626 = vmatprep.subr.mxu0 0.0
    %2627 = vmatpush1.msra.mxu0 0.0
    %2628 = vmatprep.subr.mxu0 0.0
    %2629 = vmatpush1.msra.mxu0 0.0
    %2630 = vmatprep.subr.mxu0 0.0
    %2631 = vmatpush1.msra.mxu0 0.0
    %2632 = vmatprep.subr.mxu0 0.0
    %2633 = vmatpush1.msra.mxu0 0.0
    %2634 = vmatprep.subr.mxu0 0.0
    %2635 = vmatpush1.msra.mxu0 0.0
    %2636 = vmatprep.subr.mxu0 0.0
    %2637 = vmatpush1.msra.mxu0 0.0
    %2638 = vmatprep.subr.mxu0 0.0
    %2639 = vmatpush1.msra.mxu0 0.0
    %2640 = vmatprep.subr.mxu0 0.0
    %2641 = vmatpush1.msra.mxu0 0.0
    %2642 = vmatprep.subr.mxu0 0.0
    %2643 = vmatpush1.msra.mxu0 0.0
    %2644 = vmatprep.subr.mxu0 0.0
    %2645 = vmatpush1.msra.mxu0 0.0
    %2646 = vmatprep.subr.mxu0 0.0
    %2647 = vmatpush1.msra.mxu0 0.0
    %2648 = vmatprep.subr.mxu0 0.0
    %2649 = vmatpush1.msra.mxu0 0.0
    %2650 = vmatprep.subr.mxu0 0.0
    %2651 = vmatpush1.msra.mxu0 0.0
    %2652 = vmatprep.subr.mxu0 0.0
    %2653 = vmatpush1.msra.mxu0 0.0
    %2654 = vmatprep.subr.mxu0 0.0
    %2655 = vmatpush1.msra.mxu0 0.0
    %2656 = vmatprep.subr.mxu0 0.0
    %2657 = vmatpush1.msra.mxu0 0.0
    %2658 = vmatprep.subr.mxu0 0.0
    %2659 = vmatpush1.msra.mxu0 0.0
    %2660 = vmatprep.subr.mxu0 0.0
    %2661 = vmatpush1.msra.mxu0 0.0
    %2662 = vmatprep.subr.mxu0 0.0
    %2663 = vmatpush1.msra.mxu0 0.0
    %2664 = vmatprep.subr.mxu0 0.0
    %2665 = vmatpush1.msra.mxu0 0.0
    %2666 = vmatprep.subr.mxu0 0.0
    %2667 = vmatpush1.msra.mxu0 0.0
    %2668 = vmatprep.subr.mxu0 0.0
    %2669 = vmatpush1.msra.mxu0 0.0
    %2670 = vmatprep.subr.mxu0 0.0
    %2671 = vmatpush1.msra.mxu0 0.0
    %2672 = vmatprep.mubr.f32.mxu0 0.0
    %2673 = vmatmul.mubr.f32.gmra.mrb[0].mxu0 %v2534
    %v2674 = vpop.f32.mrb[0].mxu0
    %v2675 = vadd.f32 %v532, %v2674
    %v2676 = vpop.f32.mrb[0].mxu0
    %2677 = vdwg.mxu0
    %v2679 = vsel %vm138, %v2457, 0
    %2681 = vmatprep.subr.mxu0 0.0
    %2682 = vmatpush1.msra.mxu0 %v126
    %2683 = vmatprep.subr.mxu0 0.0
    %2684 = vmatpush1.msra.mxu0 %v908
    %2685 = vmatprep.subr.mxu0 0.0
    %2686 = vmatpush1.msra.mxu0 0.0
    %2687 = vmatprep.subr.mxu0 0.0
    %2688 = vmatpush1.msra.mxu0 0.0
    %2689 = vmatprep.subr.mxu0 0.0
    %2690 = vmatpush1.msra.mxu0 0.0
    %2691 = vmatprep.subr.mxu0 0.0
    %2692 = vmatpush1.msra.mxu0 0.0
    %2693 = vmatprep.subr.mxu0 0.0
    %2694 = vmatpush1.msra.mxu0 0.0
    %2695 = vmatprep.subr.mxu0 0.0
    %2696 = vmatpush1.msra.mxu0 0.0
    %2697 = vmatprep.subr.mxu0 0.0
    %2698 = vmatpush1.msra.mxu0 0.0
    %2699 = vmatprep.subr.mxu0 0.0
    %2700 = vmatpush1.msra.mxu0 0.0
    %2701 = vmatprep.subr.mxu0 0.0
    %2702 = vmatpush1.msra.mxu0 0.0
    %2703 = vmatprep.subr.mxu0 0.0
    %2704 = vmatpush1.msra.mxu0 0.0
    %2705 = vmatprep.subr.mxu0 0.0
    %2706 = vmatpush1.msra.mxu0 0.0
    %2707 = vmatprep.subr.mxu0 0.0
    %2708 = vmatpush1.msra.mxu0 0.0
    %2709 = vmatprep.subr.mxu0 0.0
    %2710 = vmatpush1.msra.mxu0 0.0
    %2711 = vmatprep.subr.mxu0 0.0
    %2712 = vmatpush1.msra.mxu0 0.0
    %2713 = vmatprep.subr.mxu0 0.0
    %2714 = vmatpush1.msra.mxu0 0.0
    %2715 = vmatprep.subr.mxu0 0.0
    %2716 = vmatpush1.msra.mxu0 0.0
    %2717 = vmatprep.subr.mxu0 0.0
    %2718 = vmatpush1.msra.mxu0 0.0
    %2719 = vmatprep.subr.mxu0 0.0
    %2720 = vmatpush1.msra.mxu0 0.0
    %2721 = vmatprep.subr.mxu0 0.0
    %2722 = vmatpush1.msra.mxu0 0.0
    %2723 = vmatprep.subr.mxu0 0.0
    %2724 = vmatpush1.msra.mxu0 0.0
    %2725 = vmatprep.subr.mxu0 0.0
    %2726 = vmatpush1.msra.mxu0 0.0
    %2727 = vmatprep.subr.mxu0 0.0
    %2728 = vmatpush1.msra.mxu0 0.0
    %2729 = vmatprep.subr.mxu0 0.0
    %2730 = vmatpush1.msra.mxu0 0.0
    %2731 = vmatprep.subr.mxu0 0.0
    %2732 = vmatpush1.msra.mxu0 0.0
    %2733 = vmatprep.subr.mxu0 0.0
    %2734 = vmatpush1.msra.mxu0 0.0
    %2735 = vmatprep.subr.mxu0 0.0
    %2736 = vmatpush1.msra.mxu0 0.0
    %2737 = vmatprep.subr.mxu0 0.0
    %2738 = vmatpush1.msra.mxu0 0.0
    %2739 = vmatprep.subr.mxu0 0.0
    %2740 = vmatpush1.msra.mxu0 0.0
    %2741 = vmatprep.subr.mxu0 0.0
    %2742 = vmatpush1.msra.mxu0 0.0
    %2743 = vmatprep.subr.mxu0 0.0
    %2744 = vmatpush1.msra.mxu0 0.0
    %2745 = vmatprep.mubr.f32.mxu0 0.0
    %2746 = vmatmul.mubr.f32.gmra.mrb[0].mxu0 %v2679
    %v2747 = vpop.f32.mrb[0].mxu0
    %v2748 = vadd.f32 0.0, %v2747
    %v2749 = vpop.f32.mrb[0].mxu0
    %2750 = vdwg.mxu0
    %v2751 = vadd.f32 %v2675, %v2748
    %v2752 = vtanh.pop %v2751
    %2753 = vst.msk [vmem:[#allocation2 + $0xc] sm:$0x3] %vm608, %v2752
    %v2755 = vsel %vm138, %v2607, 0
    %2757 = vmatprep.subr.mxu0 0.0
    %2758 = vmatpush1.msra.mxu0 %v131
    %2759 = vmatprep.subr.mxu0 0.0
    %2760 = vmatpush1.msra.mxu0 %v535
    %2761 = vmatprep.subr.mxu0 0.0
    %2762 = vmatpush1.msra.mxu0 0.0
    %2763 = vmatprep.subr.mxu0 0.0
    %2764 = vmatpush1.msra.mxu0 0.0
    %2765 = vmatprep.subr.mxu0 0.0
    %2766 = vmatpush1.msra.mxu0 0.0
    %2767 = vmatprep.subr.mxu0 0.0
    %2768 = vmatpush1.msra.mxu0 0.0
    %2769 = vmatprep.subr.mxu0 0.0
    %2770 = vmatpush1.msra.mxu0 0.0
    %2771 = vmatprep.subr.mxu0 0.0
    %2772 = vmatpush1.msra.mxu0 0.0
    %2773 = vmatprep.subr.mxu0 0.0
    %2774 = vmatpush1.msra.mxu0 0.0
    %2775 = vmatprep.subr.mxu0 0.0
    %2776 = vmatpush1.msra.mxu0 0.0
    %2777 = vmatprep.subr.mxu0 0.0
    %2778 = vmatpush1.msra.mxu0 0.0
    %2779 = vmatprep.subr.mxu0 0.0
    %2780 = vmatpush1.msra.mxu0 0.0
    %2781 = vmatprep.subr.mxu0 0.0
    %2782 = vmatpush1.msra.mxu0 0.0
    %2783 = vmatprep.subr.mxu0 0.0
    %2784 = vmatpush1.msra.mxu0 0.0
    %2785 = vmatprep.subr.mxu0 0.0
    %2786 = vmatpush1.msra.mxu0 0.0
    %2787 = vmatprep.subr.mxu0 0.0
    %2788 = vmatpush1.msra.mxu0 0.0
    %2789 = vmatprep.subr.mxu0 0.0
    %2790 = vmatpush1.msra.mxu0 0.0
    %2791 = vmatprep.subr.mxu0 0.0
    %2792 = vmatpush1.msra.mxu0 0.0
    %2793 = vmatprep.subr.mxu0 0.0
    %2794 = vmatpush1.msra.mxu0 0.0
    %2795 = vmatprep.subr.mxu0 0.0
    %2796 = vmatpush1.msra.mxu0 0.0
    %2797 = vmatprep.subr.mxu0 0.0
    %2798 = vmatpush1.msra.mxu0 0.0
    %2799 = vmatprep.subr.mxu0 0.0
    %2800 = vmatpush1.msra.mxu0 0.0
    %2801 = vmatprep.subr.mxu0 0.0
    %2802 = vmatpush1.msra.mxu0 0.0
    %2803 = vmatprep.subr.mxu0 0.0
    %2804 = vmatpush1.msra.mxu0 0.0
    %2805 = vmatprep.subr.mxu0 0.0
    %2806 = vmatpush1.msra.mxu0 0.0
    %2807 = vmatprep.subr.mxu0 0.0
    %2808 = vmatpush1.msra.mxu0 0.0
    %2809 = vmatprep.subr.mxu0 0.0
    %2810 = vmatpush1.msra.mxu0 0.0
    %2811 = vmatprep.subr.mxu0 0.0
    %2812 = vmatpush1.msra.mxu0 0.0
    %2813 = vmatprep.subr.mxu0 0.0
    %2814 = vmatpush1.msra.mxu0 0.0
    %2815 = vmatprep.subr.mxu0 0.0
    %2816 = vmatpush1.msra.mxu0 0.0
    %2817 = vmatprep.subr.mxu0 0.0
    %2818 = vmatpush1.msra.mxu0 0.0
    %2819 = vmatprep.subr.mxu0 0.0
    %2820 = vmatpush1.msra.mxu0 0.0
    %2821 = vmatprep.mubr.f32.mxu0 0.0
    %2822 = vmatmul.mubr.f32.gmra.mrb[0].mxu0 %v2755
    %v2823 = vpop.f32.mrb[0].mxu0
    %v2824 = vadd.f32 %v532, %v2823
    %v2825 = vpop.f32.mrb[0].mxu0
    %2826 = vdwg.mxu0
    %v2828 = vsel %vm138, %v2752, 0
    %2830 = vmatprep.subr.mxu0 0.0
    %2831 = vmatpush1.msra.mxu0 %v126
    %2832 = vmatprep.subr.mxu0 0.0
    %2833 = vmatpush1.msra.mxu0 %v908
    %2834 = vmatprep.subr.mxu0 0.0
    %2835 = vmatpush1.msra.mxu0 0.0
    %2836 = vmatprep.subr.mxu0 0.0
    %2837 = vmatpush1.msra.mxu0 0.0
    %2838 = vmatprep.subr.mxu0 0.0
    %2839 = vmatpush1.msra.mxu0 0.0
    %2840 = vmatprep.subr.mxu0 0.0
    %2841 = vmatpush1.msra.mxu0 0.0
    %2842 = vmatprep.subr.mxu0 0.0
    %2843 = vmatpush1.msra.mxu0 0.0
    %2844 = vmatprep.subr.mxu0 0.0
    %2845 = vmatpush1.msra.mxu0 0.0
    %2846 = vmatprep.subr.mxu0 0.0
    %2847 = vmatpush1.msra.mxu0 0.0
    %2848 = vmatprep.subr.mxu0 0.0
    %2849 = vmatpush1.msra.mxu0 0.0
    %2850 = vmatprep.subr.mxu0 0.0
    %2851 = vmatpush1.msra.mxu0 0.0
    %2852 = vmatprep.subr.mxu0 0.0
    %2853 = vmatpush1.msra.mxu0 0.0
    %2854 = vmatprep.subr.mxu0 0.0
    %2855 = vmatpush1.msra.mxu0 0.0
    %2856 = vmatprep.subr.mxu0 0.0
    %2857 = vmatpush1.msra.mxu0 0.0
    %2858 = vmatprep.subr.mxu0 0.0
    %2859 = vmatpush1.msra.mxu0 0.0
    %2860 = vmatprep.subr.mxu0 0.0
    %2861 = vmatpush1.msra.mxu0 0.0
    %2862 = vmatprep.subr.mxu0 0.0
    %2863 = vmatpush1.msra.mxu0 0.0
    %2864 = vmatprep.subr.mxu0 0.0
    %2865 = vmatpush1.msra.mxu0 0.0
    %2866 = vmatprep.subr.mxu0 0.0
    %2867 = vmatpush1.msra.mxu0 0.0
    %2868 = vmatprep.subr.mxu0 0.0
    %2869 = vmatpush1.msra.mxu0 0.0
    %2870 = vmatprep.subr.mxu0 0.0
    %2871 = vmatpush1.msra.mxu0 0.0
    %2872 = vmatprep.subr.mxu0 0.0
    %2873 = vmatpush1.msra.mxu0 0.0
    %2874 = vmatprep.subr.mxu0 0.0
    %2875 = vmatpush1.msra.mxu0 0.0
    %2876 = vmatprep.subr.mxu0 0.0
    %2877 = vmatpush1.msra.mxu0 0.0
    %2878 = vmatprep.subr.mxu0 0.0
    %2879 = vmatpush1.msra.mxu0 0.0
    %2880 = vmatprep.subr.mxu0 0.0
    %2881 = vmatpush1.msra.mxu0 0.0
    %2882 = vmatprep.subr.mxu0 0.0
    %2883 = vmatpush1.msra.mxu0 0.0
    %2884 = vmatprep.subr.mxu0 0.0
    %2885 = vmatpush1.msra.mxu0 0.0
    %2886 = vmatprep.subr.mxu0 0.0
    %2887 = vmatpush1.msra.mxu0 0.0
    %2888 = vmatprep.subr.mxu0 0.0
    %2889 = vmatpush1.msra.mxu0 0.0
    %2890 = vmatprep.subr.mxu0 0.0
    %2891 = vmatpush1.msra.mxu0 0.0
    %2892 = vmatprep.subr.mxu0 0.0
    %2893 = vmatpush1.msra.mxu0 0.0
    %2894 = vmatprep.mubr.f32.mxu0 0.0
    %2895 = vmatmul.mubr.f32.gmra.mrb[0].mxu0 %v2828
    %v2896 = vpop.f32.mrb[0].mxu0
    %v2897 = vadd.f32 0.0, %v2896
    %v2898 = vpop.f32.mrb[0].mxu0
    %2899 = vdwg.mxu0
    %v2900 = vadd.f32 %v2824, %v2897
    %v2901 = vtanh.pop %v2900
    %2902 = vst.msk [vmem:[#allocation2 + $0xe] sm:$0x3] %vm608, %v2901
    %vm2903 = vcmask 80902
    %2904 = vst.msk [vmem:[#allocation4 - $0x6] sm:$0xc0] %vm2903, %v2167
    %s2905 = scalar_lea.vmem [#allocation4], 2
    %2906 = vst.msk [vmem:[%s2905] sm:$0x3] %vm608, %v2607
    %s2907 = scalar_lea.vmem [#allocation4], 4
    %2908 = vst.msk [vmem:[%s2907] sm:$0x3] %vm608, %v2901
    // Predicated region
    $region22: #{_rnn_forward_impl.1} parent=1 // pred_check
      _
    $region23: #{_rnn_forward_impl.1} parent=1 // pred_check_branch
      %2910 = sbr.rel (0) target = $region25
    $region24: #{_rnn_forward_impl.1} parent=1 // pred_region
      %s2912 = ssub.s32 256, 256
      %2913 = vsyncadd [#allocation3], %s2912
      %s2914 = sshll.u32 [#allocation2], 4
      %s2915 = int_to_ptr.vmem [resolvable:$true] %s2914
      %2920 = dma.vmem_to_hbm [thread:$0]  %s2915, 256, %s5, [#allocation3], 128, 128, 8
    $region25: #{_rnn_forward_impl.1} parent=1 // pred_fallthru
      _
    // Predicated region
    $region26: #{_rnn_forward_impl.1} parent=1 // pred_check
      _
    $region27: #{_rnn_forward_impl.1} parent=1 // pred_check_branch
      %2922 = sbr.rel (0) target = $region29
    $region28: #{_rnn_forward_impl.1} parent=1 // pred_region
      %s2924 = ssub.s32 96, 96
      %2925 = vsyncadd [#allocation5], %s2924
      %s2926 = sshll.u32 [#allocation4], 4
      %s2927 = int_to_ptr.vmem [resolvable:$true] %s2926
      %2932 = dma.vmem_to_hbm [thread:$0]  %s2927, 96, %s6, [#allocation5], 32, 32, 2
    $region29: #{_rnn_forward_impl.1} parent=1 // pred_fallthru
      _
    // Predicated region
    $region30: #{_rnn_forward_impl.1} parent=1 // pred_check
      _
    $region31: #{_rnn_forward_impl.1} parent=1 // pred_check_branch
      %2934 = sbr.rel (0) target = $region33
    $region32: #{_rnn_forward_impl.1} parent=1 // pred_region
      %2935 = dma.done [#allocation3], 256
    $region33: #{_rnn_forward_impl.1} parent=1 // pred_fallthru
      _
    // Predicated region
    $region34: #{_rnn_forward_impl.1} parent=1 // pred_check
      _
    $region35: #{_rnn_forward_impl.1} parent=1 // pred_check_branch
      %2937 = sbr.rel (0) target = $region37
    $region36: #{_rnn_forward_impl.1} parent=1 // pred_region
      %2938 = dma.done [#allocation5], 96
    $region37: #{_rnn_forward_impl.1} parent=1 // pred_fallthru
      _
    %2939 = vsyncpa [#allocation3], 1
    %2940 = vsyncpa [#allocation5], 1

</llo_original>
